<compile_context>
chip_gen: v7x
topology: tpu7x:2x2x1
jax: 0.10.0
libtpu: 0.0.40
codegen_flags: <defaults>
</compile_context>

<pallas_src>
import functools

import jax
import jax.numpy as jnp
from jax import lax
from jax.experimental import pallas as pl
from jax.experimental.pallas import tpu as pltpu

RNN_SIZE = 64          # rnn_size from the module
NUM_LAYERS = 2         # num_layers from the module


def _lstm_kernel(ml_ref,                          # scalar prefetch: [1] max(lengths)
                 x_ref, len_ref,                  # [1, TS*B, F], [B, 1]
                 wih0_ref, whh0_ref, b0_ref,      # [F,4H], [H,4H], [1,4H]
                 wih1_ref, whh1_ref, b1_ref,      # [H,4H], [H,4H], [1,4H]
                 out_ref,                         # [B, H]
                 h0_ref, c0_ref, h1_ref, c1_ref,  # scratch state, [B,H] each
                 gx0_ref,                         # scratch, [TS*B, 4H]
                 *, unroll):
    H = RNN_SIZE
    B = h0_ref.shape[0]
    TS = x_ref.shape[1] // B
    s = pl.program_id(0)

    @pl.when(s == 0)
    def _init():
        z = jnp.zeros((B, H), jnp.float32)
        h0_ref[...] = z
        c0_ref[...] = z
        h1_ref[...] = z
        c1_ref[...] = z
        out_ref[...] = z

    base = s * TS

    # Skip chunks entirely beyond the longest valid sequence.
    @pl.when(base < ml_ref[0])
    def _run_chunk():
        w_dt = whh0_ref.dtype   # f32 or bf16 (MXU operand dtype); gate math stays f32

        # One MXU matmul for the whole chunk's layer-0 input projection
        # (removes it from the per-step serial dependency chain).
        gx0_ref[...] = (jnp.dot(x_ref[0].astype(w_dt), wih0_ref[...],
                                preferred_element_type=jnp.float32)
                        + b0_ref[...])

        lm1 = len_ref[...] - 1                     # [B, 1] last valid step per row
        b1 = b1_ref[...]

        def gates_to_hc(gates, c_prev):
            # gate column order was pre-permuted in the wrapper to (i, f, o | g):
            # one wide sigmoid push over [B, 3H], one tanh push over [B, H].
            ifo = jax.nn.sigmoid(gates[:, :3 * H])
            g = jnp.tanh(gates[:, 3 * H:])
            i = ifo[:, 0 * H:1 * H]
            f = ifo[:, 1 * H:2 * H]
            o = ifo[:, 2 * H:3 * H]
            c_new = f * c_prev + i * g
            h_new = o * jnp.tanh(c_new)
            return h_new, c_new

        def step(t, carry):
            h0, c0, h1, c1, out = carry            # all register-resident (vregs)
            row = pl.multiple_of(t * B, B)

            # Layer-1 recurrent product depends only on t-1 state -> issue early;
            # it overlaps layer-0's MXU/EUP latency of the same step.
            g1_rec = jnp.dot(h1.astype(w_dt), whh1_ref[...],
                             preferred_element_type=jnp.float32)

            # Layer 0: only the recurrent matmul is on the critical path.
            g0 = gx0_ref[pl.ds(row, B), :] + jnp.dot(
                h0.astype(w_dt), whh0_ref[...], preferred_element_type=jnp.float32)
            h0, c0 = gates_to_hc(g0, c0)

            # Layer 1.
            g1 = g1_rec + jnp.dot(h0.astype(w_dt), wih1_ref[...],
                                  preferred_element_type=jnp.float32) + b1
            h1, c1 = gates_to_hc(g1, c1)

            # Capture layer-2 hidden at each row's last unpadded timestep (vreg select).
            out = jnp.where(lm1 == (base + t), h1, out)
            return (h0, c0, h1, c1, out)

        carry0 = (h0_ref[...], c0_ref[...], h1_ref[...], c1_ref[...], out_ref[...])
        h0, c0, h1, c1, out = lax.fori_loop(0, TS, step, carry0, unroll=unroll)

        # Persist state across grid steps: one write-back per chunk, not per timestep.
        h0_ref[...] = h0
        c0_ref[...] = c0
        h1_ref[...] = h1
        c1_ref[...] = c1
        out_ref[...] = out


def _reorder_gate_cols(w, H):
    """Permute the last dim from PyTorch gate order (i, f, g, o) to (i, f, o, g)."""
    return jnp.concatenate(
        [w[..., 0:2 * H], w[..., 3 * H:4 * H], w[..., 2 * H:3 * H]], axis=-1)


def lstm_backbone_pallas(x, lengths, params, *, ts=64, unroll=8,
                         mxu_dtype=jnp.float32):
    """x: [B, S, F] f32, lengths: [B] int (must be in [1, S]),
    params: dict of PyTorch-shaped LSTM weights.

    Returns [B, H] last-unpadded-timestep outputs (== LSTMBackbone.forward in eval mode).
    mxu_dtype=jnp.bfloat16 uses bf16 MXU operands (f32 accumulate / f32 gate math).
    """
    B, S, F = x.shape
    H = RNN_SIZE
    B_pad = ((B + 7) // 8) * 8                        # f32 sublane tile

    # Chunk length: a multiple of `unroll`, no larger than needed for this S.
    s_round = ((S + unroll - 1) // unroll) * unroll
    ts = max(unroll, min(ts, s_round))
    ts = ((ts + unroll - 1) // unroll) * unroll
    n_chunks = (S + ts - 1) // ts
    S_pad = n_chunks * ts

    x_p = jnp.pad(x.astype(jnp.float32),
                  ((0, B_pad - B), (0, S_pad - S), (0, 0)))
    # Time-major, pre-split into chunks with (t, b) merged: each chunk is a 2-D
    # [ts*B_pad, F] slab -> no in-kernel reshapes; rows for step t are [t*B : t*B+B].
    x_tm = jnp.transpose(x_p, (1, 0, 2))              # [S_pad, B_pad, F]
    x_ck = x_tm.reshape(n_chunks, ts * B_pad, F)

    len_p = jnp.zeros((B_pad,), jnp.int32).at[:B].set(lengths.astype(jnp.int32))
    len2d = len_p.reshape(B_pad, 1)
    max_len = jnp.max(lengths).astype(jnp.int32).reshape(1)

    # Pre-transpose PyTorch [4H, in] -> [in, 4H]; fold biases; permute gate columns.
    ro = lambda w: _reorder_gate_cols(w, H)
    wih0 = ro(params["w_ih0"].T.astype(jnp.float32)).astype(mxu_dtype)     # [F, 4H]
    whh0 = ro(params["w_hh0"].T.astype(jnp.float32)).astype(mxu_dtype)     # [H, 4H]
    wih1 = ro(params["w_ih1"].T.astype(jnp.float32)).astype(mxu_dtype)     # [H, 4H]
    whh1 = ro(params["w_hh1"].T.astype(jnp.float32)).astype(mxu_dtype)     # [H, 4H]
    b0 = ro((params["b_ih0"] + params["b_hh0"]).astype(jnp.float32).reshape(1, 4 * H))
    b1 = ro((params["b_ih1"] + params["b_hh1"]).astype(jnp.float32).reshape(1, 4 * H))

    kernel = functools.partial(_lstm_kernel, unroll=unroll)

    out = pl.pallas_call(
        kernel,
        out_shape=jax.ShapeDtypeStruct((B_pad, H), jnp.float32),
        grid_spec=pltpu.PrefetchScalarGridSpec(
            num_scalar_prefetch=1,
            grid=(n_chunks,),
            in_specs=[
                pl.BlockSpec((1, ts * B_pad, F), lambda s, ml: (s, 0, 0)),   # x chunk
                pl.BlockSpec((B_pad, 1), lambda s, ml: (0, 0)),              # lengths
                pl.BlockSpec((F, 4 * H), lambda s, ml: (0, 0)),              # Wih0
                pl.BlockSpec((H, 4 * H), lambda s, ml: (0, 0)),              # Whh0
                pl.BlockSpec((1, 4 * H), lambda s, ml: (0, 0)),              # b0
                pl.BlockSpec((H, 4 * H), lambda s, ml: (0, 0)),              # Wih1
                pl.BlockSpec((H, 4 * H), lambda s, ml: (0, 0)),              # Whh1
                pl.BlockSpec((1, 4 * H), lambda s, ml: (0, 0)),              # b1
            ],
            out_specs=pl.BlockSpec((B_pad, H), lambda s, ml: (0, 0)),
            scratch_shapes=[
                pltpu.VMEM((B_pad, H), jnp.float32),            # h0
                pltpu.VMEM((B_pad, H), jnp.float32),            # c0
                pltpu.VMEM((B_pad, H), jnp.float32),            # h1
                pltpu.VMEM((B_pad, H), jnp.float32),            # c1
                pltpu.VMEM((ts * B_pad, 4 * H), jnp.float32),   # chunk x-projection
            ],
        ),
        compiler_params=pltpu.CompilerParams(
            dimension_semantics=("arbitrary",),                  # state carried across chunks
            vmem_limit_bytes=32 << 20,
        ),
    )(max_len, x_ck, len2d, wih0, whh0, b0, wih1, whh1, b1)
    return out[:B]


def lstm_backbone_ref(x, lengths, params):
    """Pure-JAX reference (same math) for a correctness check."""
    B, S, F = x.shape
    H = RNN_SIZE
    wih0, whh0 = params["w_ih0"].T, params["w_hh0"].T
    b0 = params["b_ih0"] + params["b_hh0"]
    wih1, whh1 = params["w_ih1"].T, params["w_hh1"].T
    b1 = params["b_ih1"] + params["b_hh1"]

    def cell(inp, h, c, wih, whh, b):
        gates = inp @ wih + h @ whh + b
        i = jax.nn.sigmoid(gates[:, 0 * H:1 * H])
        f = jax.nn.sigmoid(gates[:, 1 * H:2 * H])
        g = jnp.tanh(gates[:, 2 * H:3 * H])
        o = jax.nn.sigmoid(gates[:, 3 * H:4 * H])
        c = f * c + i * g
        h = o * jnp.tanh(c)
        return h, c

    def step(carry, x_t):
        h0, c0, h1, c1 = carry
        h0, c0 = cell(x_t, h0, c0, wih0, whh0, b0)
        h1, c1 = cell(h0, h1, c1, wih1, whh1, b1)
        return (h0, c0, h1, c1), h1

    init = tuple(jnp.zeros((B, H), jnp.float32) for _ in range(4))
    _, h1_seq = lax.scan(step, init, jnp.transpose(x, (1, 0, 2)))   # [S, B, H]
    out = jnp.transpose(h1_seq, (1, 0, 2))                          # [B, S, H]
    idx = (lengths - 1).astype(jnp.int32)
    return out[jnp.arange(B), idx]                                  # [B, H]


def init_params(key, input_dim, hidden):
    """Deterministic LSTM parameter init (PyTorch shapes, uniform(-k, k), k=1/sqrt(H))."""
    k = 1.0 / jnp.sqrt(hidden)
    keys = jax.random.split(key, 8)
    u = lambda kk, shape: jax.random.uniform(kk, shape, jnp.float32, -k, k)
    return {
        "w_ih0": u(keys[0], (4 * hidden, input_dim)),
        "w_hh0": u(keys[1], (4 * hidden, hidden)),
        "b_ih0": u(keys[2], (4 * hidden,)),
        "b_hh0": u(keys[3], (4 * hidden,)),
        "w_ih1": u(keys[4], (4 * hidden, hidden)),
        "w_hh1": u(keys[5], (4 * hidden, hidden)),
        "b_ih1": u(keys[6], (4 * hidden,)),
        "b_hh1": u(keys[7], (4 * hidden,)),
    }


if __name__ == "__main__":
    B, S, F, H = 4, 8, 16, RNN_SIZE

    key = jax.random.PRNGKey(0)
    kx, kp = jax.random.split(key)
    x = jax.random.normal(kx, (B, S, F), jnp.float32)
    lengths = jnp.array([8, 5, 3, 6], jnp.int32)          # valid lengths in [1, S]
    params = init_params(kp, F, H)

    ref = lstm_backbone_ref(x, lengths, params)

    # f32 MXU path (default) — tight tolerance.
    out = lstm_backbone_pallas(x, lengths, params)
    out = jax.block_until_ready(out)
    assert out.shape == (B, H)
    assert jnp.allclose(out, ref, atol=1e-4, rtol=1e-4), "Pallas f32 mismatch vs reference"

    # bf16 MXU-operand path (v6e/v7x option) — looser tolerance.
    out_bf16 = lstm_backbone_pallas(x, lengths, params, mxu_dtype=jnp.bfloat16)
    out_bf16 = jax.block_until_ready(out_bf16)
    assert jnp.allclose(out_bf16, ref, atol=5e-2, rtol=5e-2), "Pallas bf16 mismatch vs reference"

    print("KERNEL_OK")
</pallas_src>

<mosaic_0001>
module attributes {stable_mosaic.version = 11 : i64} {
  func.func @_lstm_kernel(%arg0: i32, %arg1: memref<1xi32, #tpu.memory_space<smem>>, %arg2: memref<1x64x16xf32, #tpu.memory_space<vmem>>, %arg3: memref<8x1xi32, #tpu.memory_space<vmem>>, %arg4: memref<16x256xf32, #tpu.memory_space<vmem>>, %arg5: memref<64x256xf32, #tpu.memory_space<vmem>>, %arg6: memref<1x256xf32, #tpu.memory_space<vmem>>, %arg7: memref<64x256xf32, #tpu.memory_space<vmem>>, %arg8: memref<64x256xf32, #tpu.memory_space<vmem>>, %arg9: memref<1x256xf32, #tpu.memory_space<vmem>>, %arg10: memref<8x64xf32, #tpu.memory_space<vmem>>, %arg11: memref<8x64xf32, #tpu.memory_space<vmem>>, %arg12: memref<8x64xf32, #tpu.memory_space<vmem>>, %arg13: memref<8x64xf32, #tpu.memory_space<vmem>>, %arg14: memref<8x64xf32, #tpu.memory_space<vmem>>, %arg15: memref<64x256xf32, #tpu.memory_space<vmem>>) attributes {dimension_semantics = [#tpu.dimension_semantics<arbitrary>], iteration_bounds = array<i64: 1>, scalar_prefetch = 1 : i64, scratch_operands = 5 : i64, tpu.core_type = #tpu.core_type<tc>, window_params = [{transform_indices = @transform_0, window_bounds = array<i64: 1, 64, 16>}, {pipeline_mode = #tpu.pipeline_mode<synchronous>, transform_indices = @transform_1, window_bounds = array<i64: 8, 1>}, {pipeline_mode = #tpu.pipeline_mode<synchronous>, transform_indices = @transform_2, window_bounds = array<i64: 16, 256>}, {pipeline_mode = #tpu.pipeline_mode<synchronous>, transform_indices = @transform_3, window_bounds = array<i64: 64, 256>}, {pipeline_mode = #tpu.pipeline_mode<synchronous>, transform_indices = @transform_4, window_bounds = array<i64: 1, 256>}, {pipeline_mode = #tpu.pipeline_mode<synchronous>, transform_indices = @transform_5, window_bounds = array<i64: 64, 256>}, {pipeline_mode = #tpu.pipeline_mode<synchronous>, transform_indices = @transform_6, window_bounds = array<i64: 64, 256>}, {pipeline_mode = #tpu.pipeline_mode<synchronous>, transform_indices = @transform_7, window_bounds = array<i64: 1, 256>}, {pipeline_mode = #tpu.pipeline_mode<synchronous>, transform_indices = @transform_8, window_bounds = array<i64: 8, 64>}]} {
    %c0_i32 = arith.constant 0 : i32
    %0 = arith.cmpi eq, %arg0, %c0_i32 : i32
    %1 = arith.extui %0 : i1 to i32
    %c0_i32_0 = arith.constant 0 : i32
    %2 = arith.cmpi ne, %1, %c0_i32_0 : i32
    scf.if %2 {
      %cst = arith.constant 0.000000e+00 : f32
      %8 = vector.broadcast %cst : f32 to vector<8x64xf32>
      %c0_2 = arith.constant 0 : index
      %c0_3 = arith.constant 0 : index
      %9 = vector.load %arg11[%c0_2, %c0_3] : memref<8x64xf32, #tpu.memory_space<vmem>>, vector<8x64xf32>
      tpu.vector_store %arg11[%c0_2, %c0_3], %8 {strides = array<i32>} : memref<8x64xf32, #tpu.memory_space<vmem>>, vector<8x64xf32>,
      %c0_4 = arith.constant 0 : index
      %c0_5 = arith.constant 0 : index
      %10 = vector.load %arg12[%c0_4, %c0_5] : memref<8x64xf32, #tpu.memory_space<vmem>>, vector<8x64xf32>
      tpu.vector_store %arg12[%c0_4, %c0_5], %8 {strides = array<i32>} : memref<8x64xf32, #tpu.memory_space<vmem>>, vector<8x64xf32>,
      %c0_6 = arith.constant 0 : index
      %c0_7 = arith.constant 0 : index
      %11 = vector.load %arg13[%c0_6, %c0_7] : memref<8x64xf32, #tpu.memory_space<vmem>>, vector<8x64xf32>
      tpu.vector_store %arg13[%c0_6, %c0_7], %8 {strides = array<i32>} : memref<8x64xf32, #tpu.memory_space<vmem>>, vector<8x64xf32>,
      %c0_8 = arith.constant 0 : index
      %c0_9 = arith.constant 0 : index
      %12 = vector.load %arg14[%c0_8, %c0_9] : memref<8x64xf32, #tpu.memory_space<vmem>>, vector<8x64xf32>
      tpu.vector_store %arg14[%c0_8, %c0_9], %8 {strides = array<i32>} : memref<8x64xf32, #tpu.memory_space<vmem>>, vector<8x64xf32>,
      %c0_10 = arith.constant 0 : index
      %c0_11 = arith.constant 0 : index
      %13 = vector.load %arg10[%c0_10, %c0_11] : memref<8x64xf32, #tpu.memory_space<vmem>>, vector<8x64xf32>
      tpu.vector_store %arg10[%c0_10, %c0_11], %8 {strides = array<i32>} : memref<8x64xf32, #tpu.memory_space<vmem>>, vector<8x64xf32>,
    } else {
    }
    %c8_i32 = arith.constant 8 : i32
    %3 = arith.muli %arg0, %c8_i32 : i32
    %c0 = arith.constant 0 : index
    %4 = memref.load %arg1[%c0] : memref<1xi32, #tpu.memory_space<smem>>
    %5 = arith.cmpi slt, %3, %4 : i32
    %6 = arith.extui %5 : i1 to i32
    %c0_i32_1 = arith.constant 0 : i32
    %7 = arith.cmpi ne, %6, %c0_i32_1 : i32
    scf.if %7 {
      %c0_2 = arith.constant 0 : index
      %c0_3 = arith.constant 0 : index
      %c0_4 = arith.constant 0 : index
      %8 = vector.load %arg2[%c0_2, %c0_3, %c0_4] : memref<1x64x16xf32, #tpu.memory_space<vmem>>, vector<1x64x16xf32>
      %9 = vector.shape_cast %8 : vector<1x64x16xf32> to vector<64x16xf32>
      %c0_5 = arith.constant 0 : index
      %c0_6 = arith.constant 0 : index
      %10 = vector.load %arg4[%c0_5, %c0_6] : memref<16x256xf32, #tpu.memory_space<vmem>>, vector<16x256xf32>
      %cst = arith.constant dense<0.000000e+00> : vector<64x256xf32>
      %11 = tpu.matmul %9, %10, %cst {dimension_numbers = #tpu.dot_dimension_numbers<[1], [0], [0], [1], [0, 0, 1, 1], [], []>} : vector<64x16xf32>, vector<16x256xf32>, vector<64x256xf32> -> vector<64x256xf32>
      %c0_7 = arith.constant 0 : index
      %c0_8 = arith.constant 0 : index
      %12 = vector.load %arg6[%c0_7, %c0_8] : memref<1x256xf32, #tpu.memory_space<vmem>>, vector<1x256xf32>
      %13 = vector.broadcast %12 : vector<1x256xf32> to vector<64x256xf32>
      %14 = arith.addf %11, %13 : vector<64x256xf32>
      %c0_9 = arith.constant 0 : index
      %c0_10 = arith.constant 0 : index
      %15 = vector.load %arg15[%c0_9, %c0_10] : memref<64x256xf32, #tpu.memory_space<vmem>>, vector<64x256xf32>
      tpu.vector_store %arg15[%c0_9, %c0_10], %14 {strides = array<i32>} : memref<64x256xf32, #tpu.memory_space<vmem>>, vector<64x256xf32>,
      %c0_11 = arith.constant 0 : index
      %c0_12 = arith.constant 0 : index
      %16 = vector.load %arg3[%c0_11, %c0_12] : memref<8x1xi32, #tpu.memory_space<vmem>>, vector<8x1xi32>
      %c1_i32 = arith.constant 1 : i32
      %17 = vector.broadcast %c1_i32 : i32 to vector<8x1xi32>
      %18 = arith.subi %16, %17 : vector<8x1xi32>
      %c0_13 = arith.constant 0 : index
      %c0_14 = arith.constant 0 : index
      %19 = vector.load %arg9[%c0_13, %c0_14] : memref<1x256xf32, #tpu.memory_space<vmem>>, vector<1x256xf32>
      %c0_15 = arith.constant 0 : index
      %c0_16 = arith.constant 0 : index
      %20 = vector.load %arg11[%c0_15, %c0_16] : memref<8x64xf32, #tpu.memory_space<vmem>>, vector<8x64xf32>
      %c0_17 = arith.constant 0 : index
      %c0_18 = arith.constant 0 : index
      %21 = vector.load %arg12[%c0_17, %c0_18] : memref<8x64xf32, #tpu.memory_space<vmem>>, vector<8x64xf32>
      %c0_19 = arith.constant 0 : index
      %c0_20 = arith.constant 0 : index
      %22 = vector.load %arg13[%c0_19, %c0_20] : memref<8x64xf32, #tpu.memory_space<vmem>>, vector<8x64xf32>
      %c0_21 = arith.constant 0 : index
      %c0_22 = arith.constant 0 : index
      %23 = vector.load %arg14[%c0_21, %c0_22] : memref<8x64xf32, #tpu.memory_space<vmem>>, vector<8x64xf32>
      %c0_23 = arith.constant 0 : index
      %c0_24 = arith.constant 0 : index
      %24 = vector.load %arg10[%c0_23, %c0_24] : memref<8x64xf32, #tpu.memory_space<vmem>>, vector<8x64xf32>
      %c0_i32_25 = arith.constant 0 : i32
      %c8_i32_26 = arith.constant 8 : i32
      %25 = arith.muli %c0_i32_25, %c8_i32_26 : i32
      %26 = tpu.assume_multiple %25, 8 : i32
      %c0_27 = arith.constant 0 : index
      %c0_28 = arith.constant 0 : index
      %27 = vector.load %arg8[%c0_27, %c0_28] : memref<64x256xf32, #tpu.memory_space<vmem>>, vector<64x256xf32>
      %cst_29 = arith.constant dense<0.000000e+00> : vector<8x256xf32>
      %28 = tpu.matmul %22, %27, %cst_29 {dimension_numbers = #tpu.dot_dimension_numbers<[1], [0], [0], [1], [0, 0, 1, 1], [], []>} : vector<8x64xf32>, vector<64x256xf32>, vector<8x256xf32> -> vector<8x256xf32>
      %29 = arith.index_cast %26 : i32 to index
      %c0_30 = arith.constant 0 : index
      %30 = vector.load %arg15[%29, %c0_30] : memref<64x256xf32, #tpu.memory_space<vmem>>, vector<8x256xf32>
      %c0_31 = arith.constant 0 : index
      %c0_32 = arith.constant 0 : index
      %31 = vector.load %arg5[%c0_31, %c0_32] : memref<64x256xf32, #tpu.memory_space<vmem>>, vector<64x256xf32>
      %cst_33 = arith.constant dense<0.000000e+00> : vector<8x256xf32>
      %32 = tpu.matmul %20, %31, %cst_33 {dimension_numbers = #tpu.dot_dimension_numbers<[1], [0], [0], [1], [0, 0, 1, 1], [], []>} : vector<8x64xf32>, vector<64x256xf32>, vector<8x256xf32> -> vector<8x256xf32>
      %33 = arith.addf %30, %32 : vector<8x256xf32>
      %34 = vector.extract_strided_slice %33 {offsets = [0, 0], sizes = [8, 192], strides = [1, 1]} : vector<8x256xf32> to vector<8x192xf32>
      %35 = arith.negf %34 : vector<8x192xf32>
      %36 = math.exp %35 : vector<8x192xf32>
      %cst_34 = arith.constant 1.000000e+00 : f32
      %37 = vector.broadcast %cst_34 : f32 to vector<8x192xf32>
      %38 = arith.addf %37, %36 : vector<8x192xf32>
      %39 = arith.divf %37, %38 : vector<8x192xf32>
      %40 = vector.extract_strided_slice %33 {offsets = [0, 192], sizes = [8, 64], strides = [1, 1]} : vector<8x256xf32> to vector<8x64xf32>
      %41 = math.tanh %40 : vector<8x64xf32>
      %42 = vector.extract_strided_slice %39 {offsets = [0, 0], sizes = [8, 64], strides = [1, 1]} : vector<8x192xf32> to vector<8x64xf32>
      %43 = vector.extract_strided_slice %39 {offsets = [0, 64], sizes = [8, 64], strides = [1, 1]} : vector<8x192xf32> to vector<8x64xf32>
      %44 = vector.extract_strided_slice %39 {offsets = [0, 128], sizes = [8, 64], strides = [1, 1]} : vector<8x192xf32> to vector<8x64xf32>
      %45 = arith.mulf %43, %21 : vector<8x64xf32>
      %46 = arith.mulf %42, %41 : vector<8x64xf32>
      %47 = arith.addf %45, %46 : vector<8x64xf32>
      %48 = math.tanh %47 : vector<8x64xf32>
      %49 = arith.mulf %44, %48 : vector<8x64xf32>
      %c0_35 = arith.constant 0 : index
      %c0_36 = arith.constant 0 : index
      %50 = vector.load %arg7[%c0_35, %c0_36] : memref<64x256xf32, #tpu.memory_space<vmem>>, vector<64x256xf32>
      %cst_37 = arith.constant dense<0.000000e+00> : vector<8x256xf32>
      %51 = tpu.matmul %49, %50, %cst_37 {dimension_numbers = #tpu.dot_dimension_numbers<[1], [0], [0], [1], [0, 0, 1, 1], [], []>} : vector<8x64xf32>, vector<64x256xf32>, vector<8x256xf32> -> vector<8x256xf32>
      %52 = arith.addf %28, %51 : vector<8x256xf32>
      %53 = vector.broadcast %19 : vector<1x256xf32> to vector<8x256xf32>
      %54 = arith.addf %52, %53 : vector<8x256xf32>
      %55 = vector.extract_strided_slice %54 {offsets = [0, 0], sizes = [8, 192], strides = [1, 1]} : vector<8x256xf32> to vector<8x192xf32>
      %56 = arith.negf %55 : vector<8x192xf32>
      %57 = math.exp %56 : vector<8x192xf32>
      %cst_38 = arith.constant 1.000000e+00 : f32
      %58 = vector.broadcast %cst_38 : f32 to vector<8x192xf32>
      %59 = arith.addf %58, %57 : vector<8x192xf32>
      %60 = arith.divf %58, %59 : vector<8x192xf32>
      %61 = vector.extract_strided_slice %54 {offsets = [0, 192], sizes = [8, 64], strides = [1, 1]} : vector<8x256xf32> to vector<8x64xf32>
      %62 = math.tanh %61 : vector<8x64xf32>
      %63 = vector.extract_strided_slice %60 {offsets = [0, 0], sizes = [8, 64], strides = [1, 1]} : vector<8x192xf32> to vector<8x64xf32>
      %64 = vector.extract_strided_slice %60 {offsets = [0, 64], sizes = [8, 64], strides = [1, 1]} : vector<8x192xf32> to vector<8x64xf32>
      %65 = vector.extract_strided_slice %60 {offsets = [0, 128], sizes = [8, 64], strides = [1, 1]} : vector<8x192xf32> to vector<8x64xf32>
      %66 = arith.mulf %64, %23 : vector<8x64xf32>
      %67 = arith.mulf %63, %62 : vector<8x64xf32>
      %68 = arith.addf %66, %67 : vector<8x64xf32>
      %69 = math.tanh %68 : vector<8x64xf32>
      %70 = arith.mulf %65, %69 : vector<8x64xf32>
      %71 = arith.addi %3, %c0_i32_25 : i32
      %72 = vector.broadcast %71 : i32 to vector<8x1xi32>
      %73 = arith.cmpi eq, %18, %72 : vector<8x1xi32>
      %74 = vector.shape_cast %73 : vector<8x1xi1> to vector<8x1xi1>
      %75 = vector.broadcast %74 : vector<8x1xi1> to vector<8x64xi1>
      %76 = arith.select %75, %70, %24 : vector<8x64xi1>, vector<8x64xf32>
      %c1_i32_39 = arith.constant 1 : i32
      %c8_i32_40 = arith.constant 8 : i32
      %77 = arith.muli %c1_i32_39, %c8_i32_40 : i32
      %78 = tpu.assume_multiple %77, 8 : i32
      %c0_41 = arith.constant 0 : index
      %c0_42 = arith.constant 0 : index
      %79 = vector.load %arg8[%c0_41, %c0_42] : memref<64x256xf32, #tpu.memory_space<vmem>>, vector<64x256xf32>
      %cst_43 = arith.constant dense<0.000000e+00> : vector<8x256xf32>
      %80 = tpu.matmul %70, %79, %cst_43 {dimension_numbers = #tpu.dot_dimension_numbers<[1], [0], [0], [1], [0, 0, 1, 1], [], []>} : vector<8x64xf32>, vector<64x256xf32>, vector<8x256xf32> -> vector<8x256xf32>
      %81 = arith.index_cast %78 : i32 to index
      %c0_44 = arith.constant 0 : index
      %82 = vector.load %arg15[%81, %c0_44] : memref<64x256xf32, #tpu.memory_space<vmem>>, vector<8x256xf32>
      %c0_45 = arith.constant 0 : index
      %c0_46 = arith.constant 0 : index
      %83 = vector.load %arg5[%c0_45, %c0_46] : memref<64x256xf32, #tpu.memory_space<vmem>>, vector<64x256xf32>
      %cst_47 = arith.constant dense<0.000000e+00> : vector<8x256xf32>
      %84 = tpu.matmul %49, %83, %cst_47 {dimension_numbers = #tpu.dot_dimension_numbers<[1], [0], [0], [1], [0, 0, 1, 1], [], []>} : vector<8x64xf32>, vector<64x256xf32>, vector<8x256xf32> -> vector<8x256xf32>
      %85 = arith.addf %82, %84 : vector<8x256xf32>
      %86 = vector.extract_strided_slice %85 {offsets = [0, 0], sizes = [8, 192], strides = [1, 1]} : vector<8x256xf32> to vector<8x192xf32>
      %87 = arith.negf %86 : vector<8x192xf32>
      %88 = math.exp %87 : vector<8x192xf32>
      %cst_48 = arith.constant 1.000000e+00 : f32
      %89 = vector.broadcast %cst_48 : f32 to vector<8x192xf32>
      %90 = arith.addf %89, %88 : vector<8x192xf32>
      %91 = arith.divf %89, %90 : vector<8x192xf32>
      %92 = vector.extract_strided_slice %85 {offsets = [0, 192], sizes = [8, 64], strides = [1, 1]} : vector<8x256xf32> to vector<8x64xf32>
      %93 = math.tanh %92 : vector<8x64xf32>
      %94 = vector.extract_strided_slice %91 {offsets = [0, 0], sizes = [8, 64], strides = [1, 1]} : vector<8x192xf32> to vector<8x64xf32>
      %95 = vector.extract_strided_slice %91 {offsets = [0, 64], sizes = [8, 64], strides = [1, 1]} : vector<8x192xf32> to vector<8x64xf32>
      %96 = vector.extract_strided_slice %91 {offsets = [0, 128], sizes = [8, 64], strides = [1, 1]} : vector<8x192xf32> to vector<8x64xf32>
      %97 = arith.mulf %95, %47 : vector<8x64xf32>
      %98 = arith.mulf %94, %93 : vector<8x64xf32>
      %99 = arith.addf %97, %98 : vector<8x64xf32>
      %100 = math.tanh %99 : vector<8x64xf32>
      %101 = arith.mulf %96, %100 : vector<8x64xf32>
      %c0_49 = arith.constant 0 : index
      %c0_50 = arith.constant 0 : index
      %102 = vector.load %arg7[%c0_49, %c0_50] : memref<64x256xf32, #tpu.memory_space<vmem>>, vector<64x256xf32>
      %cst_51 = arith.constant dense<0.000000e+00> : vector<8x256xf32>
      %103 = tpu.matmul %101, %102, %cst_51 {dimension_numbers = #tpu.dot_dimension_numbers<[1], [0], [0], [1], [0, 0, 1, 1], [], []>} : vector<8x64xf32>, vector<64x256xf32>, vector<8x256xf32> -> vector<8x256xf32>
      %104 = arith.addf %80, %103 : vector<8x256xf32>
      %105 = vector.broadcast %19 : vector<1x256xf32> to vector<8x256xf32>
      %106 = arith.addf %104, %105 : vector<8x256xf32>
      %107 = vector.extract_strided_slice %106 {offsets = [0, 0], sizes = [8, 192], strides = [1, 1]} : vector<8x256xf32> to vector<8x192xf32>
      %108 = arith.negf %107 : vector<8x192xf32>
      %109 = math.exp %108 : vector<8x192xf32>
      %cst_52 = arith.constant 1.000000e+00 : f32
      %110 = vector.broadcast %cst_52 : f32 to vector<8x192xf32>
      %111 = arith.addf %110, %109 : vector<8x192xf32>
      %112 = arith.divf %110, %111 : vector<8x192xf32>
      %113 = vector.extract_strided_slice %106 {offsets = [0, 192], sizes = [8, 64], strides = [1, 1]} : vector<8x256xf32> to vector<8x64xf32>
      %114 = math.tanh %113 : vector<8x64xf32>
      %115 = vector.extract_strided_slice %112 {offsets = [0, 0], sizes = [8, 64], strides = [1, 1]} : vector<8x192xf32> to vector<8x64xf32>
      %116 = vector.extract_strided_slice %112 {offsets = [0, 64], sizes = [8, 64], strides = [1, 1]} : vector<8x192xf32> to vector<8x64xf32>
      %117 = vector.extract_strided_slice %112 {offsets = [0, 128], sizes = [8, 64], strides = [1, 1]} : vector<8x192xf32> to vector<8x64xf32>
      %118 = arith.mulf %116, %68 : vector<8x64xf32>
      %119 = arith.mulf %115, %114 : vector<8x64xf32>
      %120 = arith.addf %118, %119 : vector<8x64xf32>
      %121 = math.tanh %120 : vector<8x64xf32>
      %122 = arith.mulf %117, %121 : vector<8x64xf32>
      %123 = arith.addi %3, %c1_i32_39 : i32
      %124 = vector.broadcast %123 : i32 to vector<8x1xi32>
      %125 = arith.cmpi eq, %18, %124 : vector<8x1xi32>
      %126 = vector.shape_cast %125 : vector<8x1xi1> to vector<8x1xi1>
      %127 = vector.broadcast %126 : vector<8x1xi1> to vector<8x64xi1>
      %128 = arith.select %127, %122, %76 : vector<8x64xi1>, vector<8x64xf32>
      %c2_i32 = arith.constant 2 : i32
      %c8_i32_53 = arith.constant 8 : i32
      %129 = arith.muli %c2_i32, %c8_i32_53 : i32
      %130 = tpu.assume_multiple %129, 8 : i32
      %c0_54 = arith.constant 0 : index
      %c0_55 = arith.constant 0 : index
      %131 = vector.load %arg8[%c0_54, %c0_55] : memref<64x256xf32, #tpu.memory_space<vmem>>, vector<64x256xf32>
      %cst_56 = arith.constant dense<0.000000e+00> : vector<8x256xf32>
      %132 = tpu.matmul %122, %131, %cst_56 {dimension_numbers = #tpu.dot_dimension_numbers<[1], [0], [0], [1], [0, 0, 1, 1], [], []>} : vector<8x64xf32>, vector<64x256xf32>, vector<8x256xf32> -> vector<8x256xf32>
      %133 = arith.index_cast %130 : i32 to index
      %c0_57 = arith.constant 0 : index
      %134 = vector.load %arg15[%133, %c0_57] : memref<64x256xf32, #tpu.memory_space<vmem>>, vector<8x256xf32>
      %c0_58 = arith.constant 0 : index
      %c0_59 = arith.constant 0 : index
      %135 = vector.load %arg5[%c0_58, %c0_59] : memref<64x256xf32, #tpu.memory_space<vmem>>, vector<64x256xf32>
      %cst_60 = arith.constant dense<0.000000e+00> : vector<8x256xf32>
      %136 = tpu.matmul %101, %135, %cst_60 {dimension_numbers = #tpu.dot_dimension_numbers<[1], [0], [0], [1], [0, 0, 1, 1], [], []>} : vector<8x64xf32>, vector<64x256xf32>, vector<8x256xf32> -> vector<8x256xf32>
      %137 = arith.addf %134, %136 : vector<8x256xf32>
      %138 = vector.extract_strided_slice %137 {offsets = [0, 0], sizes = [8, 192], strides = [1, 1]} : vector<8x256xf32> to vector<8x192xf32>
      %139 = arith.negf %138 : vector<8x192xf32>
      %140 = math.exp %139 : vector<8x192xf32>
      %cst_61 = arith.constant 1.000000e+00 : f32
      %141 = vector.broadcast %cst_61 : f32 to vector<8x192xf32>
      %142 = arith.addf %141, %140 : vector<8x192xf32>
      %143 = arith.divf %141, %142 : vector<8x192xf32>
      %144 = vector.extract_strided_slice %137 {offsets = [0, 192], sizes = [8, 64], strides = [1, 1]} : vector<8x256xf32> to vector<8x64xf32>
      %145 = math.tanh %144 : vector<8x64xf32>
      %146 = vector.extract_strided_slice %143 {offsets = [0, 0], sizes = [8, 64], strides = [1, 1]} : vector<8x192xf32> to vector<8x64xf32>
      %147 = vector.extract_strided_slice %143 {offsets = [0, 64], sizes = [8, 64], strides = [1, 1]} : vector<8x192xf32> to vector<8x64xf32>
      %148 = vector.extract_strided_slice %143 {offsets = [0, 128], sizes = [8, 64], strides = [1, 1]} : vector<8x192xf32> to vector<8x64xf32>
      %149 = arith.mulf %147, %99 : vector<8x64xf32>
      %150 = arith.mulf %146, %145 : vector<8x64xf32>
      %151 = arith.addf %149, %150 : vector<8x64xf32>
      %152 = math.tanh %151 : vector<8x64xf32>
      %153 = arith.mulf %148, %152 : vector<8x64xf32>
      %c0_62 = arith.constant 0 : index
      %c0_63 = arith.constant 0 : index
      %154 = vector.load %arg7[%c0_62, %c0_63] : memref<64x256xf32, #tpu.memory_space<vmem>>, vector<64x256xf32>
      %cst_64 = arith.constant dense<0.000000e+00> : vector<8x256xf32>
      %155 = tpu.matmul %153, %154, %cst_64 {dimension_numbers = #tpu.dot_dimension_numbers<[1], [0], [0], [1], [0, 0, 1, 1], [], []>} : vector<8x64xf32>, vector<64x256xf32>, vector<8x256xf32> -> vector<8x256xf32>
      %156 = arith.addf %132, %155 : vector<8x256xf32>
      %157 = vector.broadcast %19 : vector<1x256xf32> to vector<8x256xf32>
      %158 = arith.addf %156, %157 : vector<8x256xf32>
      %159 = vector.extract_strided_slice %158 {offsets = [0, 0], sizes = [8, 192], strides = [1, 1]} : vector<8x256xf32> to vector<8x192xf32>
      %160 = arith.negf %159 : vector<8x192xf32>
      %161 = math.exp %160 : vector<8x192xf32>
      %cst_65 = arith.constant 1.000000e+00 : f32
      %162 = vector.broadcast %cst_65 : f32 to vector<8x192xf32>
      %163 = arith.addf %162, %161 : vector<8x192xf32>
      %164 = arith.divf %162, %163 : vector<8x192xf32>
      %165 = vector.extract_strided_slice %158 {offsets = [0, 192], sizes = [8, 64], strides = [1, 1]} : vector<8x256xf32> to vector<8x64xf32>
      %166 = math.tanh %165 : vector<8x64xf32>
      %167 = vector.extract_strided_slice %164 {offsets = [0, 0], sizes = [8, 64], strides = [1, 1]} : vector<8x192xf32> to vector<8x64xf32>
      %168 = vector.extract_strided_slice %164 {offsets = [0, 64], sizes = [8, 64], strides = [1, 1]} : vector<8x192xf32> to vector<8x64xf32>
      %169 = vector.extract_strided_slice %164 {offsets = [0, 128], sizes = [8, 64], strides = [1, 1]} : vector<8x192xf32> to vector<8x64xf32>
      %170 = arith.mulf %168, %120 : vector<8x64xf32>
      %171 = arith.mulf %167, %166 : vector<8x64xf32>
      %172 = arith.addf %170, %171 : vector<8x64xf32>
      %173 = math.tanh %172 : vector<8x64xf32>
      %174 = arith.mulf %169, %173 : vector<8x64xf32>
      %175 = arith.addi %3, %c2_i32 : i32
      %176 = vector.broadcast %175 : i32 to vector<8x1xi32>
      %177 = arith.cmpi eq, %18, %176 : vector<8x1xi32>
      %178 = vector.shape_cast %177 : vector<8x1xi1> to vector<8x1xi1>
      %179 = vector.broadcast %178 : vector<8x1xi1> to vector<8x64xi1>
      %180 = arith.select %179, %174, %128 : vector<8x64xi1>, vector<8x64xf32>
      %c3_i32 = arith.constant 3 : i32
      %c8_i32_66 = arith.constant 8 : i32
      %181 = arith.muli %c3_i32, %c8_i32_66 : i32
      %182 = tpu.assume_multiple %181, 8 : i32
      %c0_67 = arith.constant 0 : index
      %c0_68 = arith.constant 0 : index
      %183 = vector.load %arg8[%c0_67, %c0_68] : memref<64x256xf32, #tpu.memory_space<vmem>>, vector<64x256xf32>
      %cst_69 = arith.constant dense<0.000000e+00> : vector<8x256xf32>
      %184 = tpu.matmul %174, %183, %cst_69 {dimension_numbers = #tpu.dot_dimension_numbers<[1], [0], [0], [1], [0, 0, 1, 1], [], []>} : vector<8x64xf32>, vector<64x256xf32>, vector<8x256xf32> -> vector<8x256xf32>
      %185 = arith.index_cast %182 : i32 to index
      %c0_70 = arith.constant 0 : index
      %186 = vector.load %arg15[%185, %c0_70] : memref<64x256xf32, #tpu.memory_space<vmem>>, vector<8x256xf32>
      %c0_71 = arith.constant 0 : index
      %c0_72 = arith.constant 0 : index
      %187 = vector.load %arg5[%c0_71, %c0_72] : memref<64x256xf32, #tpu.memory_space<vmem>>, vector<64x256xf32>
      %cst_73 = arith.constant dense<0.000000e+00> : vector<8x256xf32>
      %188 = tpu.matmul %153, %187, %cst_73 {dimension_numbers = #tpu.dot_dimension_numbers<[1], [0], [0], [1], [0, 0, 1, 1], [], []>} : vector<8x64xf32>, vector<64x256xf32>, vector<8x256xf32> -> vector<8x256xf32>
      %189 = arith.addf %186, %188 : vector<8x256xf32>
      %190 = vector.extract_strided_slice %189 {offsets = [0, 0], sizes = [8, 192], strides = [1, 1]} : vector<8x256xf32> to vector<8x192xf32>
      %191 = arith.negf %190 : vector<8x192xf32>
      %192 = math.exp %191 : vector<8x192xf32>
      %cst_74 = arith.constant 1.000000e+00 : f32
      %193 = vector.broadcast %cst_74 : f32 to vector<8x192xf32>
      %194 = arith.addf %193, %192 : vector<8x192xf32>
      %195 = arith.divf %193, %194 : vector<8x192xf32>
      %196 = vector.extract_strided_slice %189 {offsets = [0, 192], sizes = [8, 64], strides = [1, 1]} : vector<8x256xf32> to vector<8x64xf32>
      %197 = math.tanh %196 : vector<8x64xf32>
      %198 = vector.extract_strided_slice %195 {offsets = [0, 0], sizes = [8, 64], strides = [1, 1]} : vector<8x192xf32> to vector<8x64xf32>
      %199 = vector.extract_strided_slice %195 {offsets = [0, 64], sizes = [8, 64], strides = [1, 1]} : vector<8x192xf32> to vector<8x64xf32>
      %200 = vector.extract_strided_slice %195 {offsets = [0, 128], sizes = [8, 64], strides = [1, 1]} : vector<8x192xf32> to vector<8x64xf32>
      %201 = arith.mulf %199, %151 : vector<8x64xf32>
      %202 = arith.mulf %198, %197 : vector<8x64xf32>
      %203 = arith.addf %201, %202 : vector<8x64xf32>
      %204 = math.tanh %203 : vector<8x64xf32>
      %205 = arith.mulf %200, %204 : vector<8x64xf32>
      %c0_75 = arith.constant 0 : index
      %c0_76 = arith.constant 0 : index
      %206 = vector.load %arg7[%c0_75, %c0_76] : memref<64x256xf32, #tpu.memory_space<vmem>>, vector<64x256xf32>
      %cst_77 = arith.constant dense<0.000000e+00> : vector<8x256xf32>
      %207 = tpu.matmul %205, %206, %cst_77 {dimension_numbers = #tpu.dot_dimension_numbers<[1], [0], [0], [1], [0, 0, 1, 1], [], []>} : vector<8x64xf32>, vector<64x256xf32>, vector<8x256xf32> -> vector<8x256xf32>
      %208 = arith.addf %184, %207 : vector<8x256xf32>
      %209 = vector.broadcast %19 : vector<1x256xf32> to vector<8x256xf32>
      %210 = arith.addf %208, %209 : vector<8x256xf32>
      %211 = vector.extract_strided_slice %210 {offsets = [0, 0], sizes = [8, 192], strides = [1, 1]} : vector<8x256xf32> to vector<8x192xf32>
      %212 = arith.negf %211 : vector<8x192xf32>
      %213 = math.exp %212 : vector<8x192xf32>
      %cst_78 = arith.constant 1.000000e+00 : f32
      %214 = vector.broadcast %cst_78 : f32 to vector<8x192xf32>
      %215 = arith.addf %214, %213 : vector<8x192xf32>
      %216 = arith.divf %214, %215 : vector<8x192xf32>
      %217 = vector.extract_strided_slice %210 {offsets = [0, 192], sizes = [8, 64], strides = [1, 1]} : vector<8x256xf32> to vector<8x64xf32>
      %218 = math.tanh %217 : vector<8x64xf32>
      %219 = vector.extract_strided_slice %216 {offsets = [0, 0], sizes = [8, 64], strides = [1, 1]} : vector<8x192xf32> to vector<8x64xf32>
      %220 = vector.extract_strided_slice %216 {offsets = [0, 64], sizes = [8, 64], strides = [1, 1]} : vector<8x192xf32> to vector<8x64xf32>
      %221 = vector.extract_strided_slice %216 {offsets = [0, 128], sizes = [8, 64], strides = [1, 1]} : vector<8x192xf32> to vector<8x64xf32>
      %222 = arith.mulf %220, %172 : vector<8x64xf32>
      %223 = arith.mulf %219, %218 : vector<8x64xf32>
      %224 = arith.addf %222, %223 : vector<8x64xf32>
      %225 = math.tanh %224 : vector<8x64xf32>
      %226 = arith.mulf %221, %225 : vector<8x64xf32>
      %227 = arith.addi %3, %c3_i32 : i32
      %228 = vector.broadcast %227 : i32 to vector<8x1xi32>
      %229 = arith.cmpi eq, %18, %228 : vector<8x1xi32>
      %230 = vector.shape_cast %229 : vector<8x1xi1> to vector<8x1xi1>
      %231 = vector.broadcast %230 : vector<8x1xi1> to vector<8x64xi1>
      %232 = arith.select %231, %226, %180 : vector<8x64xi1>, vector<8x64xf32>
      %c4_i32 = arith.constant 4 : i32
      %c8_i32_79 = arith.constant 8 : i32
      %233 = arith.muli %c4_i32, %c8_i32_79 : i32
      %234 = tpu.assume_multiple %233, 8 : i32
      %c0_80 = arith.constant 0 : index
      %c0_81 = arith.constant 0 : index
      %235 = vector.load %arg8[%c0_80, %c0_81] : memref<64x256xf32, #tpu.memory_space<vmem>>, vector<64x256xf32>
      %cst_82 = arith.constant dense<0.000000e+00> : vector<8x256xf32>
      %236 = tpu.matmul %226, %235, %cst_82 {dimension_numbers = #tpu.dot_dimension_numbers<[1], [0], [0], [1], [0, 0, 1, 1], [], []>} : vector<8x64xf32>, vector<64x256xf32>, vector<8x256xf32> -> vector<8x256xf32>
      %237 = arith.index_cast %234 : i32 to index
      %c0_83 = arith.constant 0 : index
      %238 = vector.load %arg15[%237, %c0_83] : memref<64x256xf32, #tpu.memory_space<vmem>>, vector<8x256xf32>
      %c0_84 = arith.constant 0 : index
      %c0_85 = arith.constant 0 : index
      %239 = vector.load %arg5[%c0_84, %c0_85] : memref<64x256xf32, #tpu.memory_space<vmem>>, vector<64x256xf32>
      %cst_86 = arith.constant dense<0.000000e+00> : vector<8x256xf32>
      %240 = tpu.matmul %205, %239, %cst_86 {dimension_numbers = #tpu.dot_dimension_numbers<[1], [0], [0], [1], [0, 0, 1, 1], [], []>} : vector<8x64xf32>, vector<64x256xf32>, vector<8x256xf32> -> vector<8x256xf32>
      %241 = arith.addf %238, %240 : vector<8x256xf32>
      %242 = vector.extract_strided_slice %241 {offsets = [0, 0], sizes = [8, 192], strides = [1, 1]} : vector<8x256xf32> to vector<8x192xf32>
      %243 = arith.negf %242 : vector<8x192xf32>
      %244 = math.exp %243 : vector<8x192xf32>
      %cst_87 = arith.constant 1.000000e+00 : f32
      %245 = vector.broadcast %cst_87 : f32 to vector<8x192xf32>
      %246 = arith.addf %245, %244 : vector<8x192xf32>
      %247 = arith.divf %245, %246 : vector<8x192xf32>
      %248 = vector.extract_strided_slice %241 {offsets = [0, 192], sizes = [8, 64], strides = [1, 1]} : vector<8x256xf32> to vector<8x64xf32>
      %249 = math.tanh %248 : vector<8x64xf32>
      %250 = vector.extract_strided_slice %247 {offsets = [0, 0], sizes = [8, 64], strides = [1, 1]} : vector<8x192xf32> to vector<8x64xf32>
      %251 = vector.extract_strided_slice %247 {offsets = [0, 64], sizes = [8, 64], strides = [1, 1]} : vector<8x192xf32> to vector<8x64xf32>
      %252 = vector.extract_strided_slice %247 {offsets = [0, 128], sizes = [8, 64], strides = [1, 1]} : vector<8x192xf32> to vector<8x64xf32>
      %253 = arith.mulf %251, %203 : vector<8x64xf32>
      %254 = arith.mulf %250, %249 : vector<8x64xf32>
      %255 = arith.addf %253, %254 : vector<8x64xf32>
      %256 = math.tanh %255 : vector<8x64xf32>
      %257 = arith.mulf %252, %256 : vector<8x64xf32>
      %c0_88 = arith.constant 0 : index
      %c0_89 = arith.constant 0 : index
      %258 = vector.load %arg7[%c0_88, %c0_89] : memref<64x256xf32, #tpu.memory_space<vmem>>, vector<64x256xf32>
      %cst_90 = arith.constant dense<0.000000e+00> : vector<8x256xf32>
      %259 = tpu.matmul %257, %258, %cst_90 {dimension_numbers = #tpu.dot_dimension_numbers<[1], [0], [0], [1], [0, 0, 1, 1], [], []>} : vector<8x64xf32>, vector<64x256xf32>, vector<8x256xf32> -> vector<8x256xf32>
      %260 = arith.addf %236, %259 : vector<8x256xf32>
      %261 = vector.broadcast %19 : vector<1x256xf32> to vector<8x256xf32>
      %262 = arith.addf %260, %261 : vector<8x256xf32>
      %263 = vector.extract_strided_slice %262 {offsets = [0, 0], sizes = [8, 192], strides = [1, 1]} : vector<8x256xf32> to vector<8x192xf32>
      %264 = arith.negf %263 : vector<8x192xf32>
      %265 = math.exp %264 : vector<8x192xf32>
      %cst_91 = arith.constant 1.000000e+00 : f32
      %266 = vector.broadcast %cst_91 : f32 to vector<8x192xf32>
      %267 = arith.addf %266, %265 : vector<8x192xf32>
      %268 = arith.divf %266, %267 : vector<8x192xf32>
      %269 = vector.extract_strided_slice %262 {offsets = [0, 192], sizes = [8, 64], strides = [1, 1]} : vector<8x256xf32> to vector<8x64xf32>
      %270 = math.tanh %269 : vector<8x64xf32>
      %271 = vector.extract_strided_slice %268 {offsets = [0, 0], sizes = [8, 64], strides = [1, 1]} : vector<8x192xf32> to vector<8x64xf32>
      %272 = vector.extract_strided_slice %268 {offsets = [0, 64], sizes = [8, 64], strides = [1, 1]} : vector<8x192xf32> to vector<8x64xf32>
      %273 = vector.extract_strided_slice %268 {offsets = [0, 128], sizes = [8, 64], strides = [1, 1]} : vector<8x192xf32> to vector<8x64xf32>
      %274 = arith.mulf %272, %224 : vector<8x64xf32>
      %275 = arith.mulf %271, %270 : vector<8x64xf32>
      %276 = arith.addf %274, %275 : vector<8x64xf32>
      %277 = math.tanh %276 : vector<8x64xf32>
      %278 = arith.mulf %273, %277 : vector<8x64xf32>
      %279 = arith.addi %3, %c4_i32 : i32
      %280 = vector.broadcast %279 : i32 to vector<8x1xi32>
      %281 = arith.cmpi eq, %18, %280 : vector<8x1xi32>
      %282 = vector.shape_cast %281 : vector<8x1xi1> to vector<8x1xi1>
      %283 = vector.broadcast %282 : vector<8x1xi1> to vector<8x64xi1>
      %284 = arith.select %283, %278, %232 : vector<8x64xi1>, vector<8x64xf32>
      %c5_i32 = arith.constant 5 : i32
      %c8_i32_92 = arith.constant 8 : i32
      %285 = arith.muli %c5_i32, %c8_i32_92 : i32
      %286 = tpu.assume_multiple %285, 8 : i32
      %c0_93 = arith.constant 0 : index
      %c0_94 = arith.constant 0 : index
      %287 = vector.load %arg8[%c0_93, %c0_94] : memref<64x256xf32, #tpu.memory_space<vmem>>, vector<64x256xf32>
      %cst_95 = arith.constant dense<0.000000e+00> : vector<8x256xf32>
      %288 = tpu.matmul %278, %287, %cst_95 {dimension_numbers = #tpu.dot_dimension_numbers<[1], [0], [0], [1], [0, 0, 1, 1], [], []>} : vector<8x64xf32>, vector<64x256xf32>, vector<8x256xf32> -> vector<8x256xf32>
      %289 = arith.index_cast %286 : i32 to index
      %c0_96 = arith.constant 0 : index
      %290 = vector.load %arg15[%289, %c0_96] : memref<64x256xf32, #tpu.memory_space<vmem>>, vector<8x256xf32>
      %c0_97 = arith.constant 0 : index
      %c0_98 = arith.constant 0 : index
      %291 = vector.load %arg5[%c0_97, %c0_98] : memref<64x256xf32, #tpu.memory_space<vmem>>, vector<64x256xf32>
      %cst_99 = arith.constant dense<0.000000e+00> : vector<8x256xf32>
      %292 = tpu.matmul %257, %291, %cst_99 {dimension_numbers = #tpu.dot_dimension_numbers<[1], [0], [0], [1], [0, 0, 1, 1], [], []>} : vector<8x64xf32>, vector<64x256xf32>, vector<8x256xf32> -> vector<8x256xf32>
      %293 = arith.addf %290, %292 : vector<8x256xf32>
      %294 = vector.extract_strided_slice %293 {offsets = [0, 0], sizes = [8, 192], strides = [1, 1]} : vector<8x256xf32> to vector<8x192xf32>
      %295 = arith.negf %294 : vector<8x192xf32>
      %296 = math.exp %295 : vector<8x192xf32>
      %cst_100 = arith.constant 1.000000e+00 : f32
      %297 = vector.broadcast %cst_100 : f32 to vector<8x192xf32>
      %298 = arith.addf %297, %296 : vector<8x192xf32>
      %299 = arith.divf %297, %298 : vector<8x192xf32>
      %300 = vector.extract_strided_slice %293 {offsets = [0, 192], sizes = [8, 64], strides = [1, 1]} : vector<8x256xf32> to vector<8x64xf32>
      %301 = math.tanh %300 : vector<8x64xf32>
      %302 = vector.extract_strided_slice %299 {offsets = [0, 0], sizes = [8, 64], strides = [1, 1]} : vector<8x192xf32> to vector<8x64xf32>
      %303 = vector.extract_strided_slice %299 {offsets = [0, 64], sizes = [8, 64], strides = [1, 1]} : vector<8x192xf32> to vector<8x64xf32>
      %304 = vector.extract_strided_slice %299 {offsets = [0, 128], sizes = [8, 64], strides = [1, 1]} : vector<8x192xf32> to vector<8x64xf32>
      %305 = arith.mulf %303, %255 : vector<8x64xf32>
      %306 = arith.mulf %302, %301 : vector<8x64xf32>
      %307 = arith.addf %305, %306 : vector<8x64xf32>
      %308 = math.tanh %307 : vector<8x64xf32>
      %309 = arith.mulf %304, %308 : vector<8x64xf32>
      %c0_101 = arith.constant 0 : index
      %c0_102 = arith.constant 0 : index
      %310 = vector.load %arg7[%c0_101, %c0_102] : memref<64x256xf32, #tpu.memory_space<vmem>>, vector<64x256xf32>
      %cst_103 = arith.constant dense<0.000000e+00> : vector<8x256xf32>
      %311 = tpu.matmul %309, %310, %cst_103 {dimension_numbers = #tpu.dot_dimension_numbers<[1], [0], [0], [1], [0, 0, 1, 1], [], []>} : vector<8x64xf32>, vector<64x256xf32>, vector<8x256xf32> -> vector<8x256xf32>
      %312 = arith.addf %288, %311 : vector<8x256xf32>
      %313 = vector.broadcast %19 : vector<1x256xf32> to vector<8x256xf32>
      %314 = arith.addf %312, %313 : vector<8x256xf32>
      %315 = vector.extract_strided_slice %314 {offsets = [0, 0], sizes = [8, 192], strides = [1, 1]} : vector<8x256xf32> to vector<8x192xf32>
      %316 = arith.negf %315 : vector<8x192xf32>
      %317 = math.exp %316 : vector<8x192xf32>
      %cst_104 = arith.constant 1.000000e+00 : f32
      %318 = vector.broadcast %cst_104 : f32 to vector<8x192xf32>
      %319 = arith.addf %318, %317 : vector<8x192xf32>
      %320 = arith.divf %318, %319 : vector<8x192xf32>
      %321 = vector.extract_strided_slice %314 {offsets = [0, 192], sizes = [8, 64], strides = [1, 1]} : vector<8x256xf32> to vector<8x64xf32>
      %322 = math.tanh %321 : vector<8x64xf32>
      %323 = vector.extract_strided_slice %320 {offsets = [0, 0], sizes = [8, 64], strides = [1, 1]} : vector<8x192xf32> to vector<8x64xf32>
      %324 = vector.extract_strided_slice %320 {offsets = [0, 64], sizes = [8, 64], strides = [1, 1]} : vector<8x192xf32> to vector<8x64xf32>
      %325 = vector.extract_strided_slice %320 {offsets = [0, 128], sizes = [8, 64], strides = [1, 1]} : vector<8x192xf32> to vector<8x64xf32>
      %326 = arith.mulf %324, %276 : vector<8x64xf32>
      %327 = arith.mulf %323, %322 : vector<8x64xf32>
      %328 = arith.addf %326, %327 : vector<8x64xf32>
      %329 = math.tanh %328 : vector<8x64xf32>
      %330 = arith.mulf %325, %329 : vector<8x64xf32>
      %331 = arith.addi %3, %c5_i32 : i32
      %332 = vector.broadcast %331 : i32 to vector<8x1xi32>
      %333 = arith.cmpi eq, %18, %332 : vector<8x1xi32>
      %334 = vector.shape_cast %333 : vector<8x1xi1> to vector<8x1xi1>
      %335 = vector.broadcast %334 : vector<8x1xi1> to vector<8x64xi1>
      %336 = arith.select %335, %330, %284 : vector<8x64xi1>, vector<8x64xf32>
      %c6_i32 = arith.constant 6 : i32
      %c8_i32_105 = arith.constant 8 : i32
      %337 = arith.muli %c6_i32, %c8_i32_105 : i32
      %338 = tpu.assume_multiple %337, 8 : i32
      %c0_106 = arith.constant 0 : index
      %c0_107 = arith.constant 0 : index
      %339 = vector.load %arg8[%c0_106, %c0_107] : memref<64x256xf32, #tpu.memory_space<vmem>>, vector<64x256xf32>
      %cst_108 = arith.constant dense<0.000000e+00> : vector<8x256xf32>
      %340 = tpu.matmul %330, %339, %cst_108 {dimension_numbers = #tpu.dot_dimension_numbers<[1], [0], [0], [1], [0, 0, 1, 1], [], []>} : vector<8x64xf32>, vector<64x256xf32>, vector<8x256xf32> -> vector<8x256xf32>
      %341 = arith.index_cast %338 : i32 to index
      %c0_109 = arith.constant 0 : index
      %342 = vector.load %arg15[%341, %c0_109] : memref<64x256xf32, #tpu.memory_space<vmem>>, vector<8x256xf32>
      %c0_110 = arith.constant 0 : index
      %c0_111 = arith.constant 0 : index
      %343 = vector.load %arg5[%c0_110, %c0_111] : memref<64x256xf32, #tpu.memory_space<vmem>>, vector<64x256xf32>
      %cst_112 = arith.constant dense<0.000000e+00> : vector<8x256xf32>
      %344 = tpu.matmul %309, %343, %cst_112 {dimension_numbers = #tpu.dot_dimension_numbers<[1], [0], [0], [1], [0, 0, 1, 1], [], []>} : vector<8x64xf32>, vector<64x256xf32>, vector<8x256xf32> -> vector<8x256xf32>
      %345 = arith.addf %342, %344 : vector<8x256xf32>
      %346 = vector.extract_strided_slice %345 {offsets = [0, 0], sizes = [8, 192], strides = [1, 1]} : vector<8x256xf32> to vector<8x192xf32>
      %347 = arith.negf %346 : vector<8x192xf32>
      %348 = math.exp %347 : vector<8x192xf32>
      %cst_113 = arith.constant 1.000000e+00 : f32
      %349 = vector.broadcast %cst_113 : f32 to vector<8x192xf32>
      %350 = arith.addf %349, %348 : vector<8x192xf32>
      %351 = arith.divf %349, %350 : vector<8x192xf32>
      %352 = vector.extract_strided_slice %345 {offsets = [0, 192], sizes = [8, 64], strides = [1, 1]} : vector<8x256xf32> to vector<8x64xf32>
      %353 = math.tanh %352 : vector<8x64xf32>
      %354 = vector.extract_strided_slice %351 {offsets = [0, 0], sizes = [8, 64], strides = [1, 1]} : vector<8x192xf32> to vector<8x64xf32>
      %355 = vector.extract_strided_slice %351 {offsets = [0, 64], sizes = [8, 64], strides = [1, 1]} : vector<8x192xf32> to vector<8x64xf32>
      %356 = vector.extract_strided_slice %351 {offsets = [0, 128], sizes = [8, 64], strides = [1, 1]} : vector<8x192xf32> to vector<8x64xf32>
      %357 = arith.mulf %355, %307 : vector<8x64xf32>
      %358 = arith.mulf %354, %353 : vector<8x64xf32>
      %359 = arith.addf %357, %358 : vector<8x64xf32>
      %360 = math.tanh %359 : vector<8x64xf32>
      %361 = arith.mulf %356, %360 : vector<8x64xf32>
      %c0_114 = arith.constant 0 : index
      %c0_115 = arith.constant 0 : index
      %362 = vector.load %arg7[%c0_114, %c0_115] : memref<64x256xf32, #tpu.memory_space<vmem>>, vector<64x256xf32>
      %cst_116 = arith.constant dense<0.000000e+00> : vector<8x256xf32>
      %363 = tpu.matmul %361, %362, %cst_116 {dimension_numbers = #tpu.dot_dimension_numbers<[1], [0], [0], [1], [0, 0, 1, 1], [], []>} : vector<8x64xf32>, vector<64x256xf32>, vector<8x256xf32> -> vector<8x256xf32>
      %364 = arith.addf %340, %363 : vector<8x256xf32>
      %365 = vector.broadcast %19 : vector<1x256xf32> to vector<8x256xf32>
      %366 = arith.addf %364, %365 : vector<8x256xf32>
      %367 = vector.extract_strided_slice %366 {offsets = [0, 0], sizes = [8, 192], strides = [1, 1]} : vector<8x256xf32> to vector<8x192xf32>
      %368 = arith.negf %367 : vector<8x192xf32>
      %369 = math.exp %368 : vector<8x192xf32>
      %cst_117 = arith.constant 1.000000e+00 : f32
      %370 = vector.broadcast %cst_117 : f32 to vector<8x192xf32>
      %371 = arith.addf %370, %369 : vector<8x192xf32>
      %372 = arith.divf %370, %371 : vector<8x192xf32>
      %373 = vector.extract_strided_slice %366 {offsets = [0, 192], sizes = [8, 64], strides = [1, 1]} : vector<8x256xf32> to vector<8x64xf32>
      %374 = math.tanh %373 : vector<8x64xf32>
      %375 = vector.extract_strided_slice %372 {offsets = [0, 0], sizes = [8, 64], strides = [1, 1]} : vector<8x192xf32> to vector<8x64xf32>
      %376 = vector.extract_strided_slice %372 {offsets = [0, 64], sizes = [8, 64], strides = [1, 1]} : vector<8x192xf32> to vector<8x64xf32>
      %377 = vector.extract_strided_slice %372 {offsets = [0, 128], sizes = [8, 64], strides = [1, 1]} : vector<8x192xf32> to vector<8x64xf32>
      %378 = arith.mulf %376, %328 : vector<8x64xf32>
      %379 = arith.mulf %375, %374 : vector<8x64xf32>
      %380 = arith.addf %378, %379 : vector<8x64xf32>
      %381 = math.tanh %380 : vector<8x64xf32>
      %382 = arith.mulf %377, %381 : vector<8x64xf32>
      %383 = arith.addi %3, %c6_i32 : i32
      %384 = vector.broadcast %383 : i32 to vector<8x1xi32>
      %385 = arith.cmpi eq, %18, %384 : vector<8x1xi32>
      %386 = vector.shape_cast %385 : vector<8x1xi1> to vector<8x1xi1>
      %387 = vector.broadcast %386 : vector<8x1xi1> to vector<8x64xi1>
      %388 = arith.select %387, %382, %336 : vector<8x64xi1>, vector<8x64xf32>
      %c7_i32 = arith.constant 7 : i32
      %c8_i32_118 = arith.constant 8 : i32
      %389 = arith.muli %c7_i32, %c8_i32_118 : i32
      %390 = tpu.assume_multiple %389, 8 : i32
      %c0_119 = arith.constant 0 : index
      %c0_120 = arith.constant 0 : index
      %391 = vector.load %arg8[%c0_119, %c0_120] : memref<64x256xf32, #tpu.memory_space<vmem>>, vector<64x256xf32>
      %cst_121 = arith.constant dense<0.000000e+00> : vector<8x256xf32>
      %392 = tpu.matmul %382, %391, %cst_121 {dimension_numbers = #tpu.dot_dimension_numbers<[1], [0], [0], [1], [0, 0, 1, 1], [], []>} : vector<8x64xf32>, vector<64x256xf32>, vector<8x256xf32> -> vector<8x256xf32>
      %393 = arith.index_cast %390 : i32 to index
      %c0_122 = arith.constant 0 : index
      %394 = vector.load %arg15[%393, %c0_122] : memref<64x256xf32, #tpu.memory_space<vmem>>, vector<8x256xf32>
      %c0_123 = arith.constant 0 : index
      %c0_124 = arith.constant 0 : index
      %395 = vector.load %arg5[%c0_123, %c0_124] : memref<64x256xf32, #tpu.memory_space<vmem>>, vector<64x256xf32>
      %cst_125 = arith.constant dense<0.000000e+00> : vector<8x256xf32>
      %396 = tpu.matmul %361, %395, %cst_125 {dimension_numbers = #tpu.dot_dimension_numbers<[1], [0], [0], [1], [0, 0, 1, 1], [], []>} : vector<8x64xf32>, vector<64x256xf32>, vector<8x256xf32> -> vector<8x256xf32>
      %397 = arith.addf %394, %396 : vector<8x256xf32>
      %398 = vector.extract_strided_slice %397 {offsets = [0, 0], sizes = [8, 192], strides = [1, 1]} : vector<8x256xf32> to vector<8x192xf32>
      %399 = arith.negf %398 : vector<8x192xf32>
      %400 = math.exp %399 : vector<8x192xf32>
      %cst_126 = arith.constant 1.000000e+00 : f32
      %401 = vector.broadcast %cst_126 : f32 to vector<8x192xf32>
      %402 = arith.addf %401, %400 : vector<8x192xf32>
      %403 = arith.divf %401, %402 : vector<8x192xf32>
      %404 = vector.extract_strided_slice %397 {offsets = [0, 192], sizes = [8, 64], strides = [1, 1]} : vector<8x256xf32> to vector<8x64xf32>
      %405 = math.tanh %404 : vector<8x64xf32>
      %406 = vector.extract_strided_slice %403 {offsets = [0, 0], sizes = [8, 64], strides = [1, 1]} : vector<8x192xf32> to vector<8x64xf32>
      %407 = vector.extract_strided_slice %403 {offsets = [0, 64], sizes = [8, 64], strides = [1, 1]} : vector<8x192xf32> to vector<8x64xf32>
      %408 = vector.extract_strided_slice %403 {offsets = [0, 128], sizes = [8, 64], strides = [1, 1]} : vector<8x192xf32> to vector<8x64xf32>
      %409 = arith.mulf %407, %359 : vector<8x64xf32>
      %410 = arith.mulf %406, %405 : vector<8x64xf32>
      %411 = arith.addf %409, %410 : vector<8x64xf32>
      %412 = math.tanh %411 : vector<8x64xf32>
      %413 = arith.mulf %408, %412 : vector<8x64xf32>
      %c0_127 = arith.constant 0 : index
      %c0_128 = arith.constant 0 : index
      %414 = vector.load %arg7[%c0_127, %c0_128] : memref<64x256xf32, #tpu.memory_space<vmem>>, vector<64x256xf32>
      %cst_129 = arith.constant dense<0.000000e+00> : vector<8x256xf32>
      %415 = tpu.matmul %413, %414, %cst_129 {dimension_numbers = #tpu.dot_dimension_numbers<[1], [0], [0], [1], [0, 0, 1, 1], [], []>} : vector<8x64xf32>, vector<64x256xf32>, vector<8x256xf32> -> vector<8x256xf32>
      %416 = arith.addf %392, %415 : vector<8x256xf32>
      %417 = vector.broadcast %19 : vector<1x256xf32> to vector<8x256xf32>
      %418 = arith.addf %416, %417 : vector<8x256xf32>
      %419 = vector.extract_strided_slice %418 {offsets = [0, 0], sizes = [8, 192], strides = [1, 1]} : vector<8x256xf32> to vector<8x192xf32>
      %420 = arith.negf %419 : vector<8x192xf32>
      %421 = math.exp %420 : vector<8x192xf32>
      %cst_130 = arith.constant 1.000000e+00 : f32
      %422 = vector.broadcast %cst_130 : f32 to vector<8x192xf32>
      %423 = arith.addf %422, %421 : vector<8x192xf32>
      %424 = arith.divf %422, %423 : vector<8x192xf32>
      %425 = vector.extract_strided_slice %418 {offsets = [0, 192], sizes = [8, 64], strides = [1, 1]} : vector<8x256xf32> to vector<8x64xf32>
      %426 = math.tanh %425 : vector<8x64xf32>
      %427 = vector.extract_strided_slice %424 {offsets = [0, 0], sizes = [8, 64], strides = [1, 1]} : vector<8x192xf32> to vector<8x64xf32>
      %428 = vector.extract_strided_slice %424 {offsets = [0, 64], sizes = [8, 64], strides = [1, 1]} : vector<8x192xf32> to vector<8x64xf32>
      %429 = vector.extract_strided_slice %424 {offsets = [0, 128], sizes = [8, 64], strides = [1, 1]} : vector<8x192xf32> to vector<8x64xf32>
      %430 = arith.mulf %428, %380 : vector<8x64xf32>
      %431 = arith.mulf %427, %426 : vector<8x64xf32>
      %432 = arith.addf %430, %431 : vector<8x64xf32>
      %433 = math.tanh %432 : vector<8x64xf32>
      %434 = arith.mulf %429, %433 : vector<8x64xf32>
      %435 = arith.addi %3, %c7_i32 : i32
      %436 = vector.broadcast %435 : i32 to vector<8x1xi32>
      %437 = arith.cmpi eq, %18, %436 : vector<8x1xi32>
      %438 = vector.shape_cast %437 : vector<8x1xi1> to vector<8x1xi1>
      %439 = vector.broadcast %438 : vector<8x1xi1> to vector<8x64xi1>
      %440 = arith.select %439, %434, %388 : vector<8x64xi1>, vector<8x64xf32>
      %c8_i32_131 = arith.constant 8 : i32
      %c0_132 = arith.constant 0 : index
      %c0_133 = arith.constant 0 : index
      %441 = vector.load %arg11[%c0_132, %c0_133] : memref<8x64xf32, #tpu.memory_space<vmem>>, vector<8x64xf32>
      tpu.vector_store %arg11[%c0_132, %c0_133], %413 {strides = array<i32>} : memref<8x64xf32, #tpu.memory_space<vmem>>, vector<8x64xf32>,
      %c0_134 = arith.constant 0 : index
      %c0_135 = arith.constant 0 : index
      %442 = vector.load %arg12[%c0_134, %c0_135] : memref<8x64xf32, #tpu.memory_space<vmem>>, vector<8x64xf32>
      tpu.vector_store %arg12[%c0_134, %c0_135], %411 {strides = array<i32>} : memref<8x64xf32, #tpu.memory_space<vmem>>, vector<8x64xf32>,
      %c0_136 = arith.constant 0 : index
      %c0_137 = arith.constant 0 : index
      %443 = vector.load %arg13[%c0_136, %c0_137] : memref<8x64xf32, #tpu.memory_space<vmem>>, vector<8x64xf32>
      tpu.vector_store %arg13[%c0_136, %c0_137], %434 {strides = array<i32>} : memref<8x64xf32, #tpu.memory_space<vmem>>, vector<8x64xf32>,
      %c0_138 = arith.constant 0 : index
      %c0_139 = arith.constant 0 : index
      %444 = vector.load %arg14[%c0_138, %c0_139] : memref<8x64xf32, #tpu.memory_space<vmem>>, vector<8x64xf32>
      tpu.vector_store %arg14[%c0_138, %c0_139], %432 {strides = array<i32>} : memref<8x64xf32, #tpu.memory_space<vmem>>, vector<8x64xf32>,
      %c0_140 = arith.constant 0 : index
      %c0_141 = arith.constant 0 : index
      %445 = vector.load %arg10[%c0_140, %c0_141] : memref<8x64xf32, #tpu.memory_space<vmem>>, vector<8x64xf32>
      tpu.vector_store %arg10[%c0_140, %c0_141], %440 {strides = array<i32>} : memref<8x64xf32, #tpu.memory_space<vmem>>, vector<8x64xf32>,
    } else {
    }
    return
  }
  func.func @transform_0(%arg0: i32, %arg1: memref<1xi32, #tpu.memory_space<smem>>) -> (i32, i32, i32) {
    %c0_i32 = arith.constant 0 : i32
    %c0_i32_0 = arith.constant 0 : i32
    %c0_i32_1 = arith.constant 0 : i32
    return %arg0, %c0_i32, %c0_i32_0 : i32, i32, i32
  }
  func.func @transform_1(%arg0: i32, %arg1: memref<1xi32, #tpu.memory_space<smem>>) -> (i32, i32) {
    %c0_i32 = arith.constant 0 : i32
    %c0_i32_0 = arith.constant 0 : i32
    %c0_i32_1 = arith.constant 0 : i32
    return %c0_i32, %c0_i32_0 : i32, i32
  }
  func.func @transform_2(%arg0: i32, %arg1: memref<1xi32, #tpu.memory_space<smem>>) -> (i32, i32) {
    %c0_i32 = arith.constant 0 : i32
    %c0_i32_0 = arith.constant 0 : i32
    %c0_i32_1 = arith.constant 0 : i32
    return %c0_i32, %c0_i32_0 : i32, i32
  }
  func.func @transform_3(%arg0: i32, %arg1: memref<1xi32, #tpu.memory_space<smem>>) -> (i32, i32) {
    %c0_i32 = arith.constant 0 : i32
    %c0_i32_0 = arith.constant 0 : i32
    %c0_i32_1 = arith.constant 0 : i32
    return %c0_i32, %c0_i32_0 : i32, i32
  }
  func.func @transform_4(%arg0: i32, %arg1: memref<1xi32, #tpu.memory_space<smem>>) -> (i32, i32) {
    %c0_i32 = arith.constant 0 : i32
    %c0_i32_0 = arith.constant 0 : i32
    %c0_i32_1 = arith.constant 0 : i32
    return %c0_i32, %c0_i32_0 : i32, i32
  }
  func.func @transform_5(%arg0: i32, %arg1: memref<1xi32, #tpu.memory_space<smem>>) -> (i32, i32) {
    %c0_i32 = arith.constant 0 : i32
    %c0_i32_0 = arith.constant 0 : i32
    %c0_i32_1 = arith.constant 0 : i32
    return %c0_i32, %c0_i32_0 : i32, i32
  }
  func.func @transform_6(%arg0: i32, %arg1: memref<1xi32, #tpu.memory_space<smem>>) -> (i32, i32) {
    %c0_i32 = arith.constant 0 : i32
    %c0_i32_0 = arith.constant 0 : i32
    %c0_i32_1 = arith.constant 0 : i32
    return %c0_i32, %c0_i32_0 : i32, i32
  }
  func.func @transform_7(%arg0: i32, %arg1: memref<1xi32, #tpu.memory_space<smem>>) -> (i32, i32) {
    %c0_i32 = arith.constant 0 : i32
    %c0_i32_0 = arith.constant 0 : i32
    %c0_i32_1 = arith.constant 0 : i32
    return %c0_i32, %c0_i32_0 : i32, i32
  }
  func.func @transform_8(%arg0: i32, %arg1: memref<1xi32, #tpu.memory_space<smem>>) -> (i32, i32) {
    %c0_i32 = arith.constant 0 : i32
    %c0_i32_0 = arith.constant 0 : i32
    %c0_i32_1 = arith.constant 0 : i32
    return %c0_i32, %c0_i32_0 : i32, i32
  }
}

</mosaic_0001>

<llo_original>
// kernel: tpu_custom_call.1
$region0: #{tpu_custom_call.1}
  #allocation0 [shape = 'u32[]', space=smem, size = 0x4, offset = 0x4, fixed_abs, tag = 'smem constant byte address 0x4 - core index']
  #allocation1 [shape = 'u32[144,128]{1,0:T(1,128)}', space=vmem, size = 0x12000, scoped, tag = 'internal scratch']
  #allocation2 [shape = 'f32[8,64]{1,0:T(8,128)}', space=vmem, size = 0x1000, scoped, tag = 'scratch operand']
  #allocation3 [shape = 'f32[8,64]{1,0:T(8,128)}', space=vmem, size = 0x1000, scoped, tag = 'scratch operand']
  #allocation4 [shape = 'f32[8,64]{1,0:T(8,128)}', space=vmem, size = 0x1000, scoped, tag = 'scratch operand']
  #allocation5 [shape = 'f32[8,64]{1,0:T(8,128)}', space=vmem, size = 0x1000, scoped, tag = 'scratch operand']
  #allocation6 [shape = 'f32[64,256]{1,0:T(8,128)}', space=vmem, size = 0x10000, scoped, tag = 'scratch operand']
  #allocation7 [shape = 's32[1]{0}', space=sflag, size = 0x4, scoped, tag = 'scoped memory for tpu_custom_call.1']
  #allocation8 [shape = 's32[1]{0:T(128)S(6)}', space=smem, size = 0x200, scoped, tag = 'prefetched SMEM operand 0']
  %s0 = inlined_call_operand.<no memory space> [shape: s32[1], index: 0, kind: input, shape index: {}]
  %s1 = inlined_call_operand.vmem [shape: f32[1,64,16], index: 1, kind: input, shape index: {}]
  %s2 = inlined_call_operand.vmem [shape: s32[8,1], index: 2, kind: input, shape index: {}]
  %s3 = inlined_call_operand.vmem [shape: f32[16,256], index: 3, kind: input, shape index: {}]
  %s4 = inlined_call_operand.hbm [shape: f32[64,256], index: 4, kind: input, shape index: {}]
  %s5 = inlined_call_operand.vmem [shape: f32[1,256], index: 5, kind: input, shape index: {}]
  %s6 = inlined_call_operand.hbm [shape: f32[64,256], index: 6, kind: input, shape index: {}]
  %s7 = inlined_call_operand.hbm [shape: f32[64,256], index: 7, kind: input, shape index: {}]
  %s8 = inlined_call_operand.vmem [shape: f32[1,256], index: 8, kind: input, shape index: {}]
  %s9 = inlined_call_operand.hbm [shape: f32[8,64], index: 9, kind: output, shape index: {}]
  %s10 = sld [smem:[#allocation0]]
  $region62: #{tpu_custom_call.1} parent=0
    _
  %s12 = ssub.s32 1, %s10
  %s13 = scalar_select 0, %s12, %s10
  %14 = sst [smem:[#allocation8]] %s0
  $region1: #{tpu_custom_call.1} parent=0
    #allocation9 [shape = 'u8[65536]{0}', space=vmem, size = 0x10000, scoped, tag = 'input window, operand 4, single buffered']
    #allocation10 [shape = 's32[1]{0}', space=sflag, size = 0x4, scoped, tag = 'scoped memory for tpu_custom_call.1']
    #allocation11 [shape = 's32[1]{0}', space=sflag, size = 0x4, scoped, tag = 'scoped memory for tpu_custom_call.1']
    #allocation12 [shape = 'u8[65536]{0}', space=vmem, size = 0x10000, scoped, tag = 'input window, operand 6, single buffered']
    #allocation13 [shape = 's32[1]{0}', space=sflag, size = 0x4, scoped, tag = 'scoped memory for tpu_custom_call.1']
    #allocation14 [shape = 'u8[65536]{0}', space=vmem, size = 0x10000, scoped, tag = 'input window, operand 7, single buffered']
    #allocation15 [shape = 'u8[4096]{0}', space=vmem, size = 0x1000, scoped, tag = 'output window, operand 0, single buffered']
    %15 = vsyncpa [#allocation10], 0
    %16 = vsyncpa [#allocation13], 0
    %17 = vsyncpa [#allocation11], 0
    // Predicated region
    $region2: #{tpu_custom_call.1} parent=1 // pred_check
      _
    $region3: #{tpu_custom_call.1} parent=1 // pred_check_branch
      %19 = sbr.rel (0) target = $region5
    $region4: #{tpu_custom_call.1} parent=1 // pred_region
      _
    $region5: #{tpu_custom_call.1} parent=1 // pred_fallthru
      _
    // Predicated region
    $region6: #{tpu_custom_call.1} parent=1 // pred_check
      _
    $region7: #{tpu_custom_call.1} parent=1 // pred_check_branch
      %21 = sbr.rel (0) target = $region9
    $region8: #{tpu_custom_call.1} parent=1 // pred_region
      _
    $region9: #{tpu_custom_call.1} parent=1 // pred_fallthru
      _
    // Predicated region
    $region10: #{tpu_custom_call.1} parent=1 // pred_check
      _
    $region11: #{tpu_custom_call.1} parent=1 // pred_check_branch
      %23 = sbr.rel (0) target = $region13
    $region12: #{tpu_custom_call.1} parent=1 // pred_region
      _
    $region13: #{tpu_custom_call.1} parent=1 // pred_fallthru
      _
    // Predicated region
    $region14: #{tpu_custom_call.1} parent=1 // pred_check
      _
    $region15: #{tpu_custom_call.1} parent=1 // pred_check_branch
      %25 = sbr.rel (0) target = $region17
    $region16: #{tpu_custom_call.1} parent=1 // pred_region
      %s27 = ssub.s32 2048, 2048
      %28 = vsyncadd [#allocation10], %s27
      %s29 = sshll.u32 [#allocation9], 4
      %s30 = int_to_ptr.vmem [resolvable:$true] %s29
      %35 = dma.hbm_to_vmem [thread:$0]  %s4, 2048, %s30, [#allocation10], 256, 256, 16
    $region17: #{tpu_custom_call.1} parent=1 // pred_fallthru
      _
    // Predicated region
    $region18: #{tpu_custom_call.1} parent=1 // pred_check
      _
    $region19: #{tpu_custom_call.1} parent=1 // pred_check_branch
      %37 = sbr.rel (0) target = $region21
    $region20: #{tpu_custom_call.1} parent=1 // pred_region
      _
    $region21: #{tpu_custom_call.1} parent=1 // pred_fallthru
      _
    // Predicated region
    $region22: #{tpu_custom_call.1} parent=1 // pred_check
      _
    $region23: #{tpu_custom_call.1} parent=1 // pred_check_branch
      %39 = sbr.rel (0) target = $region25
    $region24: #{tpu_custom_call.1} parent=1 // pred_region
      %s41 = ssub.s32 2048, 2048
      %42 = vsyncadd [#allocation13], %s41
      %s43 = sshll.u32 [#allocation12], 4
      %s44 = int_to_ptr.vmem [resolvable:$true] %s43
      %49 = dma.hbm_to_vmem [thread:$0]  %s6, 2048, %s44, [#allocation13], 256, 256, 16
    $region25: #{tpu_custom_call.1} parent=1 // pred_fallthru
      _
    // Predicated region
    $region26: #{tpu_custom_call.1} parent=1 // pred_check
      _
    $region27: #{tpu_custom_call.1} parent=1 // pred_check_branch
      %51 = sbr.rel (0) target = $region29
    $region28: #{tpu_custom_call.1} parent=1 // pred_region
      %s53 = ssub.s32 2048, 2048
      %54 = vsyncadd [#allocation13], %s53
      %s55 = sshll.u32 [#allocation14], 4
      %s56 = int_to_ptr.vmem [resolvable:$true] %s55
      %61 = dma.hbm_to_vmem [thread:$0]  %s7, 2048, %s56, [#allocation13], 256, 256, 16
    $region29: #{tpu_custom_call.1} parent=1 // pred_fallthru
      _
    // Predicated region
    $region30: #{tpu_custom_call.1} parent=1 // pred_check
      _
    $region31: #{tpu_custom_call.1} parent=1 // pred_check_branch
      %63 = sbr.rel (0) target = $region33
    $region32: #{tpu_custom_call.1} parent=1 // pred_region
      _
    $region33: #{tpu_custom_call.1} parent=1 // pred_fallthru
      _
    // Predicated region
    $region34: #{tpu_custom_call.1} parent=1 // pred_check
      _
    $region35: #{tpu_custom_call.1} parent=1 // pred_check_branch
      %65 = sbr.rel (0) target = $region37
    $region36: #{tpu_custom_call.1} parent=1 // pred_region
      %66 = dma.done [#allocation10], 2048
    $region37: #{tpu_custom_call.1} parent=1 // pred_fallthru
      _
    // Predicated region
    $region38: #{tpu_custom_call.1} parent=1 // pred_check
      _
    $region39: #{tpu_custom_call.1} parent=1 // pred_check_branch
      %68 = sbr.rel (0) target = $region41
    $region40: #{tpu_custom_call.1} parent=1 // pred_region
      %69 = dma.done [#allocation13], 2048
    $region41: #{tpu_custom_call.1} parent=1 // pred_fallthru
      _
    // Predicated region
    $region42: #{tpu_custom_call.1} parent=1 // pred_check
      _
    $region43: #{tpu_custom_call.1} parent=1 // pred_check_branch
      %71 = sbr.rel (0) target = $region45
    $region44: #{tpu_custom_call.1} parent=1 // pred_region
      %72 = dma.done [#allocation13], 2048
    $region45: #{tpu_custom_call.1} parent=1 // pred_fallthru
      _
    %p73 = scmp.eq.s32.totalorder 0, 0
    // Predicated region
    $region46: #{tpu_custom_call.1} parent=1 // pred_check
      %p74 = pneg %p73
    $region47: #{tpu_custom_call.1} parent=1 // pred_check_branch
      %76 = sbr.rel (%p74) target = $region49
    $region48: #{tpu_custom_call.1} parent=1 // pred_region
      %vm77 = vcmask 523264
      %78 = vst.msk [vmem:[#allocation2] sm:$0xff] %vm77, 0.0
      %79 = vst.msk [vmem:[#allocation3] sm:$0xff] %vm77, 0.0
      %80 = vst.msk [vmem:[#allocation4] sm:$0xff] %vm77, 0.0
      %81 = vst.msk [vmem:[#allocation5] sm:$0xff] %vm77, 0.0
      %82 = vst.msk [vmem:[#allocation15] sm:$0xff] %vm77, 0.0
    $region49: #{tpu_custom_call.1} parent=1 // pred_fallthru
      _
    %s83 = smul.u32 0, 8
    %s84 = sld [smem:[#allocation8]]
    %p85 = scmp.lt.s32.totalorder %s83, %s84
    // Predicated region
    $region50: #{tpu_custom_call.1} parent=1 // pred_check
      %p86 = pneg %p85
    $region51: #{tpu_custom_call.1} parent=1 // pred_check_branch
      %88 = sbr.rel (%p86) target = $region53
    $region52: #{tpu_custom_call.1} parent=1 // pred_region
      %v89 = vld [vmem:[%s1] sm:$0xff]
      %v90 = vld [vmem:[%s1 + $0x8] sm:$0xff]
      %v91 = vld [vmem:[%s1 + $0x10] sm:$0xff]
      %v92 = vld [vmem:[%s1 + $0x18] sm:$0xff]
      %v93 = vld [vmem:[%s1 + $0x20] sm:$0xff]
      %v94 = vld [vmem:[%s1 + $0x28] sm:$0xff]
      %v95 = vld [vmem:[%s1 + $0x30] sm:$0xff]
      %v96 = vld [vmem:[%s1 + $0x38] sm:$0xff]
      %v97 = vld [vmem:[%s3] sm:$0xff]
      %v98 = vld [vmem:[%s3 + $0x8] sm:$0xff]
      %v99 = vld [vmem:[%s3 + $0x10] sm:$0xff]
      %v100 = vld [vmem:[%s3 + $0x18] sm:$0xff]
      %v101 = vld [vmem:[%s5] sm:$0x3]
      %v103 = vlaneseq
      %v104 = vshrl.u32 %v103, 7
      %v105 = vsub.s32 0, %v104
      %v106 = vrot.slane %v101, %v105
      %v107 = vlaneseq
      %v108 = vshrl.u32 %v107, 7
      %v109 = vsub.s32 1, %v108
      %v110 = vrot.slane %v101, %v109
      %vm113 = vcmask 130048
      %v115 = vsel %vm113, %v89, 0
      %v118 = vsel %vm113, %v90, 0
      %v121 = vsel %vm113, %v91, 0
      %v124 = vsel %vm113, %v92, 0
      %v127 = vsel %vm113, %v93, 0
      %v130 = vsel %vm113, %v94, 0
      %v133 = vsel %vm113, %v95, 0
      %v136 = vsel %vm113, %v96, 0
      %138 = vmatprep.subr.mxu0 %v98
      %139 = vmatpush1.msra.mxu0 %v97
      %140 = vmatprep.subr.mxu0 %v100
      %141 = vmatpush1.msra.mxu0 %v99
      %142 = vmatprep.subr.mxu0 0.0
      %143 = vmatpush1.msra.mxu0 0.0
      %144 = vmatprep.subr.mxu0 0.0
      %145 = vmatpush1.msra.mxu0 0.0
      %146 = vmatprep.subr.mxu0 0.0
      %147 = vmatpush1.msra.mxu0 0.0
      %148 = vmatprep.subr.mxu0 0.0
      %149 = vmatpush1.msra.mxu0 0.0
      %150 = vmatprep.subr.mxu0 0.0
      %151 = vmatpush1.msra.mxu0 0.0
      %152 = vmatprep.subr.mxu0 0.0
      %153 = vmatpush1.msra.mxu0 0.0
      %154 = vmatprep.subr.mxu0 0.0
      %155 = vmatpush1.msra.mxu0 0.0
      %156 = vmatprep.subr.mxu0 0.0
      %157 = vmatpush1.msra.mxu0 0.0
      %158 = vmatprep.subr.mxu0 0.0
      %159 = vmatpush1.msra.mxu0 0.0
      %160 = vmatprep.subr.mxu0 0.0
      %161 = vmatpush1.msra.mxu0 0.0
      %162 = vmatprep.subr.mxu0 0.0
      %163 = vmatpush1.msra.mxu0 0.0
      %164 = vmatprep.subr.mxu0 0.0
      %165 = vmatpush1.msra.mxu0 0.0
      %166 = vmatprep.subr.mxu0 0.0
      %167 = vmatpush1.msra.mxu0 0.0
      %168 = vmatprep.subr.mxu0 0.0
      %169 = vmatpush1.msra.mxu0 0.0
      %170 = vmatprep.subr.mxu0 0.0
      %171 = vmatpush1.msra.mxu0 0.0
      %172 = vmatprep.subr.mxu0 0.0
      %173 = vmatpush1.msra.mxu0 0.0
      %174 = vmatprep.subr.mxu0 0.0
      %175 = vmatpush1.msra.mxu0 0.0
      %176 = vmatprep.subr.mxu0 0.0
      %177 = vmatpush1.msra.mxu0 0.0
      %178 = vmatprep.subr.mxu0 0.0
      %179 = vmatpush1.msra.mxu0 0.0
      %180 = vmatprep.subr.mxu0 0.0
      %181 = vmatpush1.msra.mxu0 0.0
      %182 = vmatprep.subr.mxu0 0.0
      %183 = vmatpush1.msra.mxu0 0.0
      %184 = vmatprep.subr.mxu0 0.0
      %185 = vmatpush1.msra.mxu0 0.0
      %186 = vmatprep.subr.mxu0 0.0
      %187 = vmatpush1.msra.mxu0 0.0
      %188 = vmatprep.subr.mxu0 0.0
      %189 = vmatpush1.msra.mxu0 0.0
      %190 = vmatprep.subr.mxu0 0.0
      %191 = vmatpush1.msra.mxu0 0.0
      %192 = vmatprep.subr.mxu0 0.0
      %193 = vmatpush1.msra.mxu0 0.0
      %194 = vmatprep.subr.mxu0 0.0
      %195 = vmatpush1.msra.mxu0 0.0
      %196 = vmatprep.subr.mxu0 0.0
      %197 = vmatpush1.msra.mxu0 0.0
      %198 = vmatprep.subr.mxu0 0.0
      %199 = vmatpush1.msra.mxu0 0.0
      %200 = vmatprep.subr.mxu0 0.0
      %201 = vmatpush1.msra.mxu0 0.0
      %202 = vmatprep.mubr.f32.mxu0 0.0
      %203 = vmatmul.mubr.f32.gmra.mrb[0].mxu0 %v115
      %v204 = vpop.f32.mrb[0].mxu0
      %v205 = vadd.f32 %v106, %v204
      %v206 = vpop.f32.mrb[0].mxu0
      %v207 = vadd.f32 %v110, %v206
      %208 = vmatprep.mubr.f32.mxu0 0.0
      %209 = vmatmul.mubr.f32.gmra.mrb[0].mxu0 %v118
      %v210 = vpop.f32.mrb[0].mxu0
      %v211 = vadd.f32 %v106, %v210
      %v212 = vpop.f32.mrb[0].mxu0
      %v213 = vadd.f32 %v110, %v212
      %214 = vmatprep.mubr.f32.mxu0 0.0
      %215 = vmatmul.mubr.f32.gmra.mrb[0].mxu0 %v121
      %v216 = vpop.f32.mrb[0].mxu0
      %v217 = vadd.f32 %v106, %v216
      %v218 = vpop.f32.mrb[0].mxu0
      %v219 = vadd.f32 %v110, %v218
      %220 = vmatprep.mubr.f32.mxu0 0.0
      %221 = vmatmul.mubr.f32.gmra.mrb[0].mxu0 %v124
      %v222 = vpop.f32.mrb[0].mxu0
      %v223 = vadd.f32 %v106, %v222
      %v224 = vpop.f32.mrb[0].mxu0
      %v225 = vadd.f32 %v110, %v224
      %226 = vmatprep.mubr.f32.mxu0 0.0
      %227 = vmatmul.mubr.f32.gmra.mrb[0].mxu0 %v127
      %v228 = vpop.f32.mrb[0].mxu0
      %v229 = vadd.f32 %v106, %v228
      %v230 = vpop.f32.mrb[0].mxu0
      %v231 = vadd.f32 %v110, %v230
      %232 = vmatprep.mubr.f32.mxu0 0.0
      %233 = vmatmul.mubr.f32.gmra.mrb[0].mxu0 %v130
      %v234 = vpop.f32.mrb[0].mxu0
      %v235 = vadd.f32 %v106, %v234
      %v236 = vpop.f32.mrb[0].mxu0
      %v237 = vadd.f32 %v110, %v236
      %238 = vmatprep.mubr.f32.mxu0 0.0
      %239 = vmatmul.mubr.f32.gmra.mrb[0].mxu0 %v133
      %v240 = vpop.f32.mrb[0].mxu0
      %v241 = vadd.f32 %v106, %v240
      %v242 = vpop.f32.mrb[0].mxu0
      %v243 = vadd.f32 %v110, %v242
      %244 = vmatprep.mubr.f32.mxu0 0.0
      %245 = vmatmul.mubr.f32.gmra.mrb[0].mxu0 %v136
      %v246 = vpop.f32.mrb[0].mxu0
      %v247 = vadd.f32 %v106, %v246
      %v248 = vpop.f32.mrb[0].mxu0
      %v249 = vadd.f32 %v110, %v248
      %250 = vdwg.mxu0
      %251 = vst [vmem:[#allocation6] sm:$0xff] %v205
      %252 = vst [vmem:[#allocation6 + $0x8] sm:$0xff] %v207
      %253 = vst [vmem:[#allocation6 + $0x10] sm:$0xff] %v211
      %254 = vst [vmem:[#allocation6 + $0x18] sm:$0xff] %v213
      %255 = vst [vmem:[#allocation6 + $0x20] sm:$0xff] %v217
      %256 = vst [vmem:[#allocation6 + $0x28] sm:$0xff] %v219
      %257 = vst [vmem:[#allocation6 + $0x30] sm:$0xff] %v223
      %258 = vst [vmem:[#allocation6 + $0x38] sm:$0xff] %v225
      %259 = vst [vmem:[#allocation6 + $0x40] sm:$0xff] %v229
      %260 = vst [vmem:[#allocation6 + $0x48] sm:$0xff] %v231
      %261 = vst [vmem:[#allocation6 + $0x50] sm:$0xff] %v235
      %262 = vst [vmem:[#allocation6 + $0x58] sm:$0xff] %v237
      %263 = vst [vmem:[#allocation6 + $0x60] sm:$0xff] %v241
      %264 = vst [vmem:[#allocation6 + $0x68] sm:$0xff] %v243
      %265 = vst [vmem:[#allocation6 + $0x70] sm:$0xff] %v247
      %266 = vst [vmem:[#allocation6 + $0x78] sm:$0xff] %v249
      %v267 = vld [vmem:[%s2] sm:$0xff]
      %v268 = vsub.s32 %v267, 1
      %v269 = vld [vmem:[%s8] sm:$0x3]
      %v270 = vld [vmem:[#allocation2] sm:$0xff]
      %v271 = vld [vmem:[#allocation3] sm:$0xff]
      %v272 = vld [vmem:[#allocation4] sm:$0xff]
      %v273 = vld [vmem:[#allocation5] sm:$0xff]
      %v274 = vld [vmem:[#allocation15] sm:$0xff]
      %v275 = vld [vmem:[#allocation14] sm:$0xff]
      %v276 = vld [vmem:[#allocation14 + $0x8] sm:$0xff]
      %v277 = vld [vmem:[#allocation14 + $0x10] sm:$0xff]
      %v278 = vld [vmem:[#allocation14 + $0x18] sm:$0xff]
      %v279 = vld [vmem:[#allocation14 + $0x20] sm:$0xff]
      %v280 = vld [vmem:[#allocation14 + $0x28] sm:$0xff]
      %v281 = vld [vmem:[#allocation14 + $0x30] sm:$0xff]
      %v282 = vld [vmem:[#allocation14 + $0x38] sm:$0xff]
      %v283 = vld [vmem:[#allocation14 + $0x40] sm:$0xff]
      %v284 = vld [vmem:[#allocation14 + $0x48] sm:$0xff]
      %v285 = vld [vmem:[#allocation14 + $0x50] sm:$0xff]
      %v286 = vld [vmem:[#allocation14 + $0x58] sm:$0xff]
      %v287 = vld [vmem:[#allocation14 + $0x60] sm:$0xff]
      %v288 = vld [vmem:[#allocation14 + $0x68] sm:$0xff]
      %v289 = vld [vmem:[#allocation14 + $0x70] sm:$0xff]
      %v290 = vld [vmem:[#allocation14 + $0x78] sm:$0xff]
      %s291 = smul.u32 0, 2
      %s292 = smul.addr %s291, 8
      %s293 = scalar_lea.vmem [#allocation6], %s292
      %v294 = vld [vmem:[%s293] sm:$0xff]
      %v295 = vld [vmem:[%s293 + $0x8] sm:$0xff]
      %v296 = vld [vmem:[#allocation9] sm:$0xff]
      %v297 = vld [vmem:[#allocation9 + $0x8] sm:$0xff]
      %v298 = vld [vmem:[#allocation9 + $0x10] sm:$0xff]
      %v299 = vld [vmem:[#allocation9 + $0x18] sm:$0xff]
      %v300 = vld [vmem:[#allocation9 + $0x20] sm:$0xff]
      %v301 = vld [vmem:[#allocation9 + $0x28] sm:$0xff]
      %v302 = vld [vmem:[#allocation9 + $0x30] sm:$0xff]
      %v303 = vld [vmem:[#allocation9 + $0x38] sm:$0xff]
      %v304 = vld [vmem:[#allocation9 + $0x40] sm:$0xff]
      %v305 = vld [vmem:[#allocation9 + $0x48] sm:$0xff]
      %v306 = vld [vmem:[#allocation9 + $0x50] sm:$0xff]
      %v307 = vld [vmem:[#allocation9 + $0x58] sm:$0xff]
      %v308 = vld [vmem:[#allocation9 + $0x60] sm:$0xff]
      %v309 = vld [vmem:[#allocation9 + $0x68] sm:$0xff]
      %v310 = vld [vmem:[#allocation9 + $0x70] sm:$0xff]
      %v311 = vld [vmem:[#allocation9 + $0x78] sm:$0xff]
      %vm312 = vcmask 523264
      %v314 = vsel %vm312, %v270, 0
      %316 = vmatprep.subr.mxu0 %v297
      %317 = vmatpush1.msra.mxu0 %v296
      %318 = vmatprep.subr.mxu0 %v299
      %319 = vmatpush1.msra.mxu0 %v298
      %320 = vmatprep.subr.mxu0 %v301
      %321 = vmatpush1.msra.mxu0 %v300
      %322 = vmatprep.subr.mxu0 %v303
      %323 = vmatpush1.msra.mxu0 %v302
      %324 = vmatprep.subr.mxu0 %v305
      %325 = vmatpush1.msra.mxu0 %v304
      %326 = vmatprep.subr.mxu0 %v307
      %327 = vmatpush1.msra.mxu0 %v306
      %328 = vmatprep.subr.mxu0 %v309
      %329 = vmatpush1.msra.mxu0 %v308
      %330 = vmatprep.subr.mxu0 %v311
      %331 = vmatpush1.msra.mxu0 %v310
      %332 = vmatprep.subr.mxu0 0.0
      %333 = vmatpush1.msra.mxu0 0.0
      %334 = vmatprep.subr.mxu0 0.0
      %335 = vmatpush1.msra.mxu0 0.0
      %336 = vmatprep.subr.mxu0 0.0
      %337 = vmatpush1.msra.mxu0 0.0
      %338 = vmatprep.subr.mxu0 0.0
      %339 = vmatpush1.msra.mxu0 0.0
      %340 = vmatprep.subr.mxu0 0.0
      %341 = vmatpush1.msra.mxu0 0.0
      %342 = vmatprep.subr.mxu0 0.0
      %343 = vmatpush1.msra.mxu0 0.0
      %344 = vmatprep.subr.mxu0 0.0
      %345 = vmatpush1.msra.mxu0 0.0
      %346 = vmatprep.subr.mxu0 0.0
      %347 = vmatpush1.msra.mxu0 0.0
      %348 = vmatprep.subr.mxu0 0.0
      %349 = vmatpush1.msra.mxu0 0.0
      %350 = vmatprep.subr.mxu0 0.0
      %351 = vmatpush1.msra.mxu0 0.0
      %352 = vmatprep.subr.mxu0 0.0
      %353 = vmatpush1.msra.mxu0 0.0
      %354 = vmatprep.subr.mxu0 0.0
      %355 = vmatpush1.msra.mxu0 0.0
      %356 = vmatprep.subr.mxu0 0.0
      %357 = vmatpush1.msra.mxu0 0.0
      %358 = vmatprep.subr.mxu0 0.0
      %359 = vmatpush1.msra.mxu0 0.0
      %360 = vmatprep.subr.mxu0 0.0
      %361 = vmatpush1.msra.mxu0 0.0
      %362 = vmatprep.subr.mxu0 0.0
      %363 = vmatpush1.msra.mxu0 0.0
      %364 = vmatprep.subr.mxu0 0.0
      %365 = vmatpush1.msra.mxu0 0.0
      %366 = vmatprep.subr.mxu0 0.0
      %367 = vmatpush1.msra.mxu0 0.0
      %368 = vmatprep.subr.mxu0 0.0
      %369 = vmatpush1.msra.mxu0 0.0
      %370 = vmatprep.subr.mxu0 0.0
      %371 = vmatpush1.msra.mxu0 0.0
      %372 = vmatprep.subr.mxu0 0.0
      %373 = vmatpush1.msra.mxu0 0.0
      %374 = vmatprep.subr.mxu0 0.0
      %375 = vmatpush1.msra.mxu0 0.0
      %376 = vmatprep.subr.mxu0 0.0
      %377 = vmatpush1.msra.mxu0 0.0
      %378 = vmatprep.subr.mxu0 0.0
      %379 = vmatpush1.msra.mxu0 0.0
      %380 = vmatprep.mubr.f32.mxu0 0.0
      %381 = vmatmul.mubr.f32.gmra.mrb[0].mxu0 %v314
      %v382 = vpop.f32.mrb[0].mxu0
      %v383 = vadd.f32 0.0, %v382
      %v384 = vpop.f32.mrb[0].mxu0
      %v385 = vadd.f32 0.0, %v384
      %386 = vdwg.mxu0
      %v387 = vadd.f32 %v294, %v383
      %v388 = vadd.f32 %v295, %v385
      %v389 = vxor.u32 %v387, 2147483648
      %v390 = vxor.u32 %v388, 2147483648
      %v391 = vmul.f32 %v389, 1.442695
      %v392 = vpow.pop %v391
      %v393 = vmul.f32 %v390, 1.442695
      %v394 = vpow.pop %v393
      %v395 = vadd.f32 %v392, 1.0
      %v396 = vadd.f32 %v394, 1.0
      %v397 = vrcp.pop %v395
      %v398 = vmul.f32 1.0, %v397
      %v399 = vrcp.pop %v396
      %v400 = vmul.f32 1.0, %v399
      %v401 = vtanh.pop %v388
      %403 = vrot.lane.b32.xlu0 %v271, 64
      %v404 = vpop.permute.xlu0 %403
      %v406 = vmul.f32 %v398, %v404
      %408 = vrot.lane.b32.xlu0 %v401, 64
      %v409 = vpop.permute.xlu0 %408
      %v411 = vmul.f32 %v398, %v409
      %413 = vrot.lane.b32.xlu0 %v411, 64
      %v414 = vpop.permute.xlu0 %413
      %v416 = vadd.f32 %v406, %v414
      %v417 = vtanh.pop %v416
      %419 = vrot.lane.b32.xlu0 %v417, 64
      %v420 = vpop.permute.xlu0 %419
      %v422 = vmul.f32 %v400, %v420
      %v423 = vld [vmem:[#allocation12] sm:$0xff]
      %v424 = vld [vmem:[#allocation12 + $0x8] sm:$0xff]
      %v425 = vld [vmem:[#allocation12 + $0x10] sm:$0xff]
      %v426 = vld [vmem:[#allocation12 + $0x18] sm:$0xff]
      %v427 = vld [vmem:[#allocation12 + $0x20] sm:$0xff]
      %v428 = vld [vmem:[#allocation12 + $0x28] sm:$0xff]
      %v429 = vld [vmem:[#allocation12 + $0x30] sm:$0xff]
      %v430 = vld [vmem:[#allocation12 + $0x38] sm:$0xff]
      %v431 = vld [vmem:[#allocation12 + $0x40] sm:$0xff]
      %v432 = vld [vmem:[#allocation12 + $0x48] sm:$0xff]
      %v433 = vld [vmem:[#allocation12 + $0x50] sm:$0xff]
      %v434 = vld [vmem:[#allocation12 + $0x58] sm:$0xff]
      %v435 = vld [vmem:[#allocation12 + $0x60] sm:$0xff]
      %v436 = vld [vmem:[#allocation12 + $0x68] sm:$0xff]
      %v437 = vld [vmem:[#allocation12 + $0x70] sm:$0xff]
      %v438 = vld [vmem:[#allocation12 + $0x78] sm:$0xff]
      %v440 = vsel %vm312, %v422, 0
      %442 = vmatprep.subr.mxu0 %v424
      %443 = vmatpush1.msra.mxu0 %v423
      %444 = vmatprep.subr.mxu0 %v426
      %445 = vmatpush1.msra.mxu0 %v425
      %446 = vmatprep.subr.mxu0 %v428
      %447 = vmatpush1.msra.mxu0 %v427
      %448 = vmatprep.subr.mxu0 %v430
      %449 = vmatpush1.msra.mxu0 %v429
      %450 = vmatprep.subr.mxu0 %v432
      %451 = vmatpush1.msra.mxu0 %v431
      %452 = vmatprep.subr.mxu0 %v434
      %453 = vmatpush1.msra.mxu0 %v433
      %454 = vmatprep.subr.mxu0 %v436
      %455 = vmatpush1.msra.mxu0 %v435
      %456 = vmatprep.subr.mxu0 %v438
      %457 = vmatpush1.msra.mxu0 %v437
      %458 = vmatprep.subr.mxu0 0.0
      %459 = vmatpush1.msra.mxu0 0.0
      %460 = vmatprep.subr.mxu0 0.0
      %461 = vmatpush1.msra.mxu0 0.0
      %462 = vmatprep.subr.mxu0 0.0
      %463 = vmatpush1.msra.mxu0 0.0
      %464 = vmatprep.subr.mxu0 0.0
      %465 = vmatpush1.msra.mxu0 0.0
      %466 = vmatprep.subr.mxu0 0.0
      %467 = vmatpush1.msra.mxu0 0.0
      %468 = vmatprep.subr.mxu0 0.0
      %469 = vmatpush1.msra.mxu0 0.0
      %470 = vmatprep.subr.mxu0 0.0
      %471 = vmatpush1.msra.mxu0 0.0
      %472 = vmatprep.subr.mxu0 0.0
      %473 = vmatpush1.msra.mxu0 0.0
      %474 = vmatprep.subr.mxu0 0.0
      %475 = vmatpush1.msra.mxu0 0.0
      %476 = vmatprep.subr.mxu0 0.0
      %477 = vmatpush1.msra.mxu0 0.0
      %478 = vmatprep.subr.mxu0 0.0
      %479 = vmatpush1.msra.mxu0 0.0
      %480 = vmatprep.subr.mxu0 0.0
      %481 = vmatpush1.msra.mxu0 0.0
      %482 = vmatprep.subr.mxu0 0.0
      %483 = vmatpush1.msra.mxu0 0.0
      %484 = vmatprep.subr.mxu0 0.0
      %485 = vmatpush1.msra.mxu0 0.0
      %486 = vmatprep.subr.mxu0 0.0
      %487 = vmatpush1.msra.mxu0 0.0
      %488 = vmatprep.subr.mxu0 0.0
      %489 = vmatpush1.msra.mxu0 0.0
      %490 = vmatprep.subr.mxu0 0.0
      %491 = vmatpush1.msra.mxu0 0.0
      %492 = vmatprep.subr.mxu0 0.0
      %493 = vmatpush1.msra.mxu0 0.0
      %494 = vmatprep.subr.mxu0 0.0
      %495 = vmatpush1.msra.mxu0 0.0
      %496 = vmatprep.subr.mxu0 0.0
      %497 = vmatpush1.msra.mxu0 0.0
      %498 = vmatprep.subr.mxu0 0.0
      %499 = vmatpush1.msra.mxu0 0.0
      %500 = vmatprep.subr.mxu0 0.0
      %501 = vmatpush1.msra.mxu0 0.0
      %502 = vmatprep.subr.mxu0 0.0
      %503 = vmatpush1.msra.mxu0 0.0
      %504 = vmatprep.subr.mxu0 0.0
      %505 = vmatpush1.msra.mxu0 0.0
      %506 = vmatprep.mubr.f32.mxu0 0.0
      %507 = vmatmul.mubr.f32.gmra.mrb[0].mxu0 %v440
      %v508 = vpop.f32.mrb[0].mxu0
      %v509 = vadd.f32 0.0, %v508
      %v510 = vpop.f32.mrb[0].mxu0
      %v511 = vadd.f32 0.0, %v510
      %512 = vdwg.mxu0
      %v514 = vsel %vm312, %v272, 0
      %516 = vmatprep.subr.mxu0 %v276
      %517 = vmatpush1.msra.mxu0 %v275
      %518 = vmatprep.subr.mxu0 %v278
      %519 = vmatpush1.msra.mxu0 %v277
      %520 = vmatprep.subr.mxu0 %v280
      %521 = vmatpush1.msra.mxu0 %v279
      %522 = vmatprep.subr.mxu0 %v282
      %523 = vmatpush1.msra.mxu0 %v281
      %524 = vmatprep.subr.mxu0 %v284
      %525 = vmatpush1.msra.mxu0 %v283
      %526 = vmatprep.subr.mxu0 %v286
      %527 = vmatpush1.msra.mxu0 %v285
      %528 = vmatprep.subr.mxu0 %v288
      %529 = vmatpush1.msra.mxu0 %v287
      %530 = vmatprep.subr.mxu0 %v290
      %531 = vmatpush1.msra.mxu0 %v289
      %532 = vmatprep.subr.mxu0 0.0
      %533 = vmatpush1.msra.mxu0 0.0
      %534 = vmatprep.subr.mxu0 0.0
      %535 = vmatpush1.msra.mxu0 0.0
      %536 = vmatprep.subr.mxu0 0.0
      %537 = vmatpush1.msra.mxu0 0.0
      %538 = vmatprep.subr.mxu0 0.0
      %539 = vmatpush1.msra.mxu0 0.0
      %540 = vmatprep.subr.mxu0 0.0
      %541 = vmatpush1.msra.mxu0 0.0
      %542 = vmatprep.subr.mxu0 0.0
      %543 = vmatpush1.msra.mxu0 0.0
      %544 = vmatprep.subr.mxu0 0.0
      %545 = vmatpush1.msra.mxu0 0.0
      %546 = vmatprep.subr.mxu0 0.0
      %547 = vmatpush1.msra.mxu0 0.0
      %548 = vmatprep.subr.mxu0 0.0
      %549 = vmatpush1.msra.mxu0 0.0
      %550 = vmatprep.subr.mxu0 0.0
      %551 = vmatpush1.msra.mxu0 0.0
      %552 = vmatprep.subr.mxu0 0.0
      %553 = vmatpush1.msra.mxu0 0.0
      %554 = vmatprep.subr.mxu0 0.0
      %555 = vmatpush1.msra.mxu0 0.0
      %556 = vmatprep.subr.mxu0 0.0
      %557 = vmatpush1.msra.mxu0 0.0
      %558 = vmatprep.subr.mxu0 0.0
      %559 = vmatpush1.msra.mxu0 0.0
      %560 = vmatprep.subr.mxu0 0.0
      %561 = vmatpush1.msra.mxu0 0.0
      %562 = vmatprep.subr.mxu0 0.0
      %563 = vmatpush1.msra.mxu0 0.0
      %564 = vmatprep.subr.mxu0 0.0
      %565 = vmatpush1.msra.mxu0 0.0
      %566 = vmatprep.subr.mxu0 0.0
      %567 = vmatpush1.msra.mxu0 0.0
      %568 = vmatprep.subr.mxu0 0.0
      %569 = vmatpush1.msra.mxu0 0.0
      %570 = vmatprep.subr.mxu0 0.0
      %571 = vmatpush1.msra.mxu0 0.0
      %572 = vmatprep.subr.mxu0 0.0
      %573 = vmatpush1.msra.mxu0 0.0
      %574 = vmatprep.subr.mxu0 0.0
      %575 = vmatpush1.msra.mxu0 0.0
      %576 = vmatprep.subr.mxu0 0.0
      %577 = vmatpush1.msra.mxu0 0.0
      %578 = vmatprep.subr.mxu0 0.0
      %579 = vmatpush1.msra.mxu0 0.0
      %580 = vmatprep.mubr.f32.mxu0 0.0
      %581 = vmatmul.mubr.f32.gmra.mrb[0].mxu0 %v514
      %v582 = vpop.f32.mrb[0].mxu0
      %v583 = vadd.f32 %v509, %v582
      %v584 = vpop.f32.mrb[0].mxu0
      %v585 = vadd.f32 %v511, %v584
      %586 = vdwg.mxu0
      %v588 = vlaneseq
      %v589 = vshrl.u32 %v588, 7
      %v590 = vsub.s32 0, %v589
      %v591 = vrot.slane %v269, %v590
      %v592 = vlaneseq
      %v593 = vshrl.u32 %v592, 7
      %v594 = vsub.s32 1, %v593
      %v595 = vrot.slane %v269, %v594
      %v598 = vadd.f32 %v583, %v591
      %v599 = vadd.f32 %v585, %v595
      %v600 = vxor.u32 %v598, 2147483648
      %v601 = vxor.u32 %v599, 2147483648
      %v602 = vmul.f32 %v600, 1.442695
      %v603 = vpow.pop %v602
      %v604 = vmul.f32 %v601, 1.442695
      %v605 = vpow.pop %v604
      %v606 = vadd.f32 %v603, 1.0
      %v607 = vadd.f32 %v605, 1.0
      %v608 = vrcp.pop %v606
      %v609 = vmul.f32 1.0, %v608
      %v610 = vrcp.pop %v607
      %v611 = vmul.f32 1.0, %v610
      %v612 = vtanh.pop %v599
      %614 = vrot.lane.b32.xlu0 %v273, 64
      %v615 = vpop.permute.xlu0 %614
      %v617 = vmul.f32 %v609, %v615
      %619 = vrot.lane.b32.xlu0 %v612, 64
      %v620 = vpop.permute.xlu0 %619
      %v622 = vmul.f32 %v609, %v620
      %624 = vrot.lane.b32.xlu0 %v622, 64
      %v625 = vpop.permute.xlu0 %624
      %v627 = vadd.f32 %v617, %v625
      %v628 = vtanh.pop %v627
      %630 = vrot.lane.b32.xlu0 %v628, 64
      %v631 = vpop.permute.xlu0 %630
      %v633 = vmul.f32 %v611, %v631
      %v634 = vstv %s83
      %vm635 = vcmp.eq.s32.totalorder %v268, %v634
      %v636 = vsel %vm635, 1, 0
      %637 = vset.pattern.permute.xlu0 0
      %638 = vperm.xlu0 %637, %v636
      %v639 = vpop.permute.xlu0 %638
      %vm640 = vcmp.eq.s32.totalorder %v639, 1
      %v641 = vsel %vm640, %v633, %v274
      %s642 = smul.u32 1, 2
      %s643 = smul.addr %s642, 8
      %s644 = scalar_lea.vmem [#allocation6], %s643
      %v645 = vld [vmem:[%s644] sm:$0xff]
      %v646 = vld [vmem:[%s644 + $0x8] sm:$0xff]
      %647 = vmatprep.subr.mxu0 %v297
      %648 = vmatpush1.msra.mxu0 %v296
      %649 = vmatprep.subr.mxu0 %v299
      %650 = vmatpush1.msra.mxu0 %v298
      %651 = vmatprep.subr.mxu0 %v301
      %652 = vmatpush1.msra.mxu0 %v300
      %653 = vmatprep.subr.mxu0 %v303
      %654 = vmatpush1.msra.mxu0 %v302
      %655 = vmatprep.subr.mxu0 %v305
      %656 = vmatpush1.msra.mxu0 %v304
      %657 = vmatprep.subr.mxu0 %v307
      %658 = vmatpush1.msra.mxu0 %v306
      %659 = vmatprep.subr.mxu0 %v309
      %660 = vmatpush1.msra.mxu0 %v308
      %661 = vmatprep.subr.mxu0 %v311
      %662 = vmatpush1.msra.mxu0 %v310
      %663 = vmatprep.subr.mxu0 0.0
      %664 = vmatpush1.msra.mxu0 0.0
      %665 = vmatprep.subr.mxu0 0.0
      %666 = vmatpush1.msra.mxu0 0.0
      %667 = vmatprep.subr.mxu0 0.0
      %668 = vmatpush1.msra.mxu0 0.0
      %669 = vmatprep.subr.mxu0 0.0
      %670 = vmatpush1.msra.mxu0 0.0
      %671 = vmatprep.subr.mxu0 0.0
      %672 = vmatpush1.msra.mxu0 0.0
      %673 = vmatprep.subr.mxu0 0.0
      %674 = vmatpush1.msra.mxu0 0.0
      %675 = vmatprep.subr.mxu0 0.0
      %676 = vmatpush1.msra.mxu0 0.0
      %677 = vmatprep.subr.mxu0 0.0
      %678 = vmatpush1.msra.mxu0 0.0
      %679 = vmatprep.subr.mxu0 0.0
      %680 = vmatpush1.msra.mxu0 0.0
      %681 = vmatprep.subr.mxu0 0.0
      %682 = vmatpush1.msra.mxu0 0.0
      %683 = vmatprep.subr.mxu0 0.0
      %684 = vmatpush1.msra.mxu0 0.0
      %685 = vmatprep.subr.mxu0 0.0
      %686 = vmatpush1.msra.mxu0 0.0
      %687 = vmatprep.subr.mxu0 0.0
      %688 = vmatpush1.msra.mxu0 0.0
      %689 = vmatprep.subr.mxu0 0.0
      %690 = vmatpush1.msra.mxu0 0.0
      %691 = vmatprep.subr.mxu0 0.0
      %692 = vmatpush1.msra.mxu0 0.0
      %693 = vmatprep.subr.mxu0 0.0
      %694 = vmatpush1.msra.mxu0 0.0
      %695 = vmatprep.subr.mxu0 0.0
      %696 = vmatpush1.msra.mxu0 0.0
      %697 = vmatprep.subr.mxu0 0.0
      %698 = vmatpush1.msra.mxu0 0.0
      %699 = vmatprep.subr.mxu0 0.0
      %700 = vmatpush1.msra.mxu0 0.0
      %701 = vmatprep.subr.mxu0 0.0
      %702 = vmatpush1.msra.mxu0 0.0
      %703 = vmatprep.subr.mxu0 0.0
      %704 = vmatpush1.msra.mxu0 0.0
      %705 = vmatprep.subr.mxu0 0.0
      %706 = vmatpush1.msra.mxu0 0.0
      %707 = vmatprep.subr.mxu0 0.0
      %708 = vmatpush1.msra.mxu0 0.0
      %709 = vmatprep.subr.mxu0 0.0
      %710 = vmatpush1.msra.mxu0 0.0
      %711 = vmatprep.mubr.f32.mxu0 0.0
      %712 = vmatmul.mubr.f32.gmra.mrb[0].mxu0 %v440
      %v713 = vpop.f32.mrb[0].mxu0
      %v714 = vadd.f32 0.0, %v713
      %v715 = vpop.f32.mrb[0].mxu0
      %v716 = vadd.f32 0.0, %v715
      %717 = vdwg.mxu0
      %v718 = vadd.f32 %v645, %v714
      %v719 = vadd.f32 %v646, %v716
      %v720 = vxor.u32 %v718, 2147483648
      %v721 = vxor.u32 %v719, 2147483648
      %v722 = vmul.f32 %v720, 1.442695
      %v723 = vpow.pop %v722
      %v724 = vmul.f32 %v721, 1.442695
      %v725 = vpow.pop %v724
      %v726 = vadd.f32 %v723, 1.0
      %v727 = vadd.f32 %v725, 1.0
      %v728 = vrcp.pop %v726
      %v729 = vmul.f32 1.0, %v728
      %v730 = vrcp.pop %v727
      %v731 = vmul.f32 1.0, %v730
      %v732 = vtanh.pop %v719
      %v733 = vmul.f32 %v729, %v416
      %735 = vrot.lane.b32.xlu0 %v732, 64
      %v736 = vpop.permute.xlu0 %735
      %v738 = vmul.f32 %v729, %v736
      %740 = vrot.lane.b32.xlu0 %v738, 64
      %v741 = vpop.permute.xlu0 %740
      %v743 = vadd.f32 %v733, %v741
      %v744 = vtanh.pop %v743
      %746 = vrot.lane.b32.xlu0 %v744, 64
      %v747 = vpop.permute.xlu0 %746
      %v749 = vmul.f32 %v731, %v747
      %v751 = vsel %vm312, %v749, 0
      %753 = vmatprep.subr.mxu0 %v424
      %754 = vmatpush1.msra.mxu0 %v423
      %755 = vmatprep.subr.mxu0 %v426
      %756 = vmatpush1.msra.mxu0 %v425
      %757 = vmatprep.subr.mxu0 %v428
      %758 = vmatpush1.msra.mxu0 %v427
      %759 = vmatprep.subr.mxu0 %v430
      %760 = vmatpush1.msra.mxu0 %v429
      %761 = vmatprep.subr.mxu0 %v432
      %762 = vmatpush1.msra.mxu0 %v431
      %763 = vmatprep.subr.mxu0 %v434
      %764 = vmatpush1.msra.mxu0 %v433
      %765 = vmatprep.subr.mxu0 %v436
      %766 = vmatpush1.msra.mxu0 %v435
      %767 = vmatprep.subr.mxu0 %v438
      %768 = vmatpush1.msra.mxu0 %v437
      %769 = vmatprep.subr.mxu0 0.0
      %770 = vmatpush1.msra.mxu0 0.0
      %771 = vmatprep.subr.mxu0 0.0
      %772 = vmatpush1.msra.mxu0 0.0
      %773 = vmatprep.subr.mxu0 0.0
      %774 = vmatpush1.msra.mxu0 0.0
      %775 = vmatprep.subr.mxu0 0.0
      %776 = vmatpush1.msra.mxu0 0.0
      %777 = vmatprep.subr.mxu0 0.0
      %778 = vmatpush1.msra.mxu0 0.0
      %779 = vmatprep.subr.mxu0 0.0
      %780 = vmatpush1.msra.mxu0 0.0
      %781 = vmatprep.subr.mxu0 0.0
      %782 = vmatpush1.msra.mxu0 0.0
      %783 = vmatprep.subr.mxu0 0.0
      %784 = vmatpush1.msra.mxu0 0.0
      %785 = vmatprep.subr.mxu0 0.0
      %786 = vmatpush1.msra.mxu0 0.0
      %787 = vmatprep.subr.mxu0 0.0
      %788 = vmatpush1.msra.mxu0 0.0
      %789 = vmatprep.subr.mxu0 0.0
      %790 = vmatpush1.msra.mxu0 0.0
      %791 = vmatprep.subr.mxu0 0.0
      %792 = vmatpush1.msra.mxu0 0.0
      %793 = vmatprep.subr.mxu0 0.0
      %794 = vmatpush1.msra.mxu0 0.0
      %795 = vmatprep.subr.mxu0 0.0
      %796 = vmatpush1.msra.mxu0 0.0
      %797 = vmatprep.subr.mxu0 0.0
      %798 = vmatpush1.msra.mxu0 0.0
      %799 = vmatprep.subr.mxu0 0.0
      %800 = vmatpush1.msra.mxu0 0.0
      %801 = vmatprep.subr.mxu0 0.0
      %802 = vmatpush1.msra.mxu0 0.0
      %803 = vmatprep.subr.mxu0 0.0
      %804 = vmatpush1.msra.mxu0 0.0
      %805 = vmatprep.subr.mxu0 0.0
      %806 = vmatpush1.msra.mxu0 0.0
      %807 = vmatprep.subr.mxu0 0.0
      %808 = vmatpush1.msra.mxu0 0.0
      %809 = vmatprep.subr.mxu0 0.0
      %810 = vmatpush1.msra.mxu0 0.0
      %811 = vmatprep.subr.mxu0 0.0
      %812 = vmatpush1.msra.mxu0 0.0
      %813 = vmatprep.subr.mxu0 0.0
      %814 = vmatpush1.msra.mxu0 0.0
      %815 = vmatprep.subr.mxu0 0.0
      %816 = vmatpush1.msra.mxu0 0.0
      %817 = vmatprep.mubr.f32.mxu0 0.0
      %818 = vmatmul.mubr.f32.gmra.mrb[0].mxu0 %v751
      %v819 = vpop.f32.mrb[0].mxu0
      %v820 = vadd.f32 0.0, %v819
      %v821 = vpop.f32.mrb[0].mxu0
      %v822 = vadd.f32 0.0, %v821
      %823 = vdwg.mxu0
      %v825 = vsel %vm312, %v633, 0
      %827 = vmatprep.subr.mxu0 %v276
      %828 = vmatpush1.msra.mxu0 %v275
      %829 = vmatprep.subr.mxu0 %v278
      %830 = vmatpush1.msra.mxu0 %v277
      %831 = vmatprep.subr.mxu0 %v280
      %832 = vmatpush1.msra.mxu0 %v279
      %833 = vmatprep.subr.mxu0 %v282
      %834 = vmatpush1.msra.mxu0 %v281
      %835 = vmatprep.subr.mxu0 %v284
      %836 = vmatpush1.msra.mxu0 %v283
      %837 = vmatprep.subr.mxu0 %v286
      %838 = vmatpush1.msra.mxu0 %v285
      %839 = vmatprep.subr.mxu0 %v288
      %840 = vmatpush1.msra.mxu0 %v287
      %841 = vmatprep.subr.mxu0 %v290
      %842 = vmatpush1.msra.mxu0 %v289
      %843 = vmatprep.subr.mxu0 0.0
      %844 = vmatpush1.msra.mxu0 0.0
      %845 = vmatprep.subr.mxu0 0.0
      %846 = vmatpush1.msra.mxu0 0.0
      %847 = vmatprep.subr.mxu0 0.0
      %848 = vmatpush1.msra.mxu0 0.0
      %849 = vmatprep.subr.mxu0 0.0
      %850 = vmatpush1.msra.mxu0 0.0
      %851 = vmatprep.subr.mxu0 0.0
      %852 = vmatpush1.msra.mxu0 0.0
      %853 = vmatprep.subr.mxu0 0.0
      %854 = vmatpush1.msra.mxu0 0.0
      %855 = vmatprep.subr.mxu0 0.0
      %856 = vmatpush1.msra.mxu0 0.0
      %857 = vmatprep.subr.mxu0 0.0
      %858 = vmatpush1.msra.mxu0 0.0
      %859 = vmatprep.subr.mxu0 0.0
      %860 = vmatpush1.msra.mxu0 0.0
      %861 = vmatprep.subr.mxu0 0.0
      %862 = vmatpush1.msra.mxu0 0.0
      %863 = vmatprep.subr.mxu0 0.0
      %864 = vmatpush1.msra.mxu0 0.0
      %865 = vmatprep.subr.mxu0 0.0
      %866 = vmatpush1.msra.mxu0 0.0
      %867 = vmatprep.subr.mxu0 0.0
      %868 = vmatpush1.msra.mxu0 0.0
      %869 = vmatprep.subr.mxu0 0.0
      %870 = vmatpush1.msra.mxu0 0.0
      %871 = vmatprep.subr.mxu0 0.0
      %872 = vmatpush1.msra.mxu0 0.0
      %873 = vmatprep.subr.mxu0 0.0
      %874 = vmatpush1.msra.mxu0 0.0
      %875 = vmatprep.subr.mxu0 0.0
      %876 = vmatpush1.msra.mxu0 0.0
      %877 = vmatprep.subr.mxu0 0.0
      %878 = vmatpush1.msra.mxu0 0.0
      %879 = vmatprep.subr.mxu0 0.0
      %880 = vmatpush1.msra.mxu0 0.0
      %881 = vmatprep.subr.mxu0 0.0
      %882 = vmatpush1.msra.mxu0 0.0
      %883 = vmatprep.subr.mxu0 0.0
      %884 = vmatpush1.msra.mxu0 0.0
      %885 = vmatprep.subr.mxu0 0.0
      %886 = vmatpush1.msra.mxu0 0.0
      %887 = vmatprep.subr.mxu0 0.0
      %888 = vmatpush1.msra.mxu0 0.0
      %889 = vmatprep.subr.mxu0 0.0
      %890 = vmatpush1.msra.mxu0 0.0
      %891 = vmatprep.mubr.f32.mxu0 0.0
      %892 = vmatmul.mubr.f32.gmra.mrb[0].mxu0 %v825
      %v893 = vpop.f32.mrb[0].mxu0
      %v894 = vadd.f32 %v820, %v893
      %v895 = vpop.f32.mrb[0].mxu0
      %v896 = vadd.f32 %v822, %v895
      %897 = vdwg.mxu0
      %v898 = vadd.f32 %v894, %v591
      %v899 = vadd.f32 %v896, %v595
      %v900 = vxor.u32 %v898, 2147483648
      %v901 = vxor.u32 %v899, 2147483648
      %v902 = vmul.f32 %v900, 1.442695
      %v903 = vpow.pop %v902
      %v904 = vmul.f32 %v901, 1.442695
      %v905 = vpow.pop %v904
      %v906 = vadd.f32 %v903, 1.0
      %v907 = vadd.f32 %v905, 1.0
      %v908 = vrcp.pop %v906
      %v909 = vmul.f32 1.0, %v908
      %v910 = vrcp.pop %v907
      %v911 = vmul.f32 1.0, %v910
      %v912 = vtanh.pop %v899
      %v913 = vmul.f32 %v909, %v627
      %915 = vrot.lane.b32.xlu0 %v912, 64
      %v916 = vpop.permute.xlu0 %915
      %v918 = vmul.f32 %v909, %v916
      %920 = vrot.lane.b32.xlu0 %v918, 64
      %v921 = vpop.permute.xlu0 %920
      %v923 = vadd.f32 %v913, %v921
      %v924 = vtanh.pop %v923
      %926 = vrot.lane.b32.xlu0 %v924, 64
      %v927 = vpop.permute.xlu0 %926
      %v929 = vmul.f32 %v911, %v927
      %s930 = sadd.s32 %s83, 1
      %v931 = vstv %s930
      %vm932 = vcmp.eq.s32.totalorder %v268, %v931
      %v933 = vsel %vm932, 1, 0
      %934 = vset.pattern.permute.xlu0 0
      %935 = vperm.xlu0 %934, %v933
      %v936 = vpop.permute.xlu0 %935
      %vm937 = vcmp.eq.s32.totalorder %v936, 1
      %v938 = vsel %vm937, %v929, %v641
      %s939 = smul.u32 2, 2
      %s940 = smul.addr %s939, 8
      %s941 = scalar_lea.vmem [#allocation6], %s940
      %v942 = vld [vmem:[%s941] sm:$0xff]
      %v943 = vld [vmem:[%s941 + $0x8] sm:$0xff]
      %944 = vmatprep.subr.mxu0 %v297
      %945 = vmatpush1.msra.mxu0 %v296
      %946 = vmatprep.subr.mxu0 %v299
      %947 = vmatpush1.msra.mxu0 %v298
      %948 = vmatprep.subr.mxu0 %v301
      %949 = vmatpush1.msra.mxu0 %v300
      %950 = vmatprep.subr.mxu0 %v303
      %951 = vmatpush1.msra.mxu0 %v302
      %952 = vmatprep.subr.mxu0 %v305
      %953 = vmatpush1.msra.mxu0 %v304
      %954 = vmatprep.subr.mxu0 %v307
      %955 = vmatpush1.msra.mxu0 %v306
      %956 = vmatprep.subr.mxu0 %v309
      %957 = vmatpush1.msra.mxu0 %v308
      %958 = vmatprep.subr.mxu0 %v311
      %959 = vmatpush1.msra.mxu0 %v310
      %960 = vmatprep.subr.mxu0 0.0
      %961 = vmatpush1.msra.mxu0 0.0
      %962 = vmatprep.subr.mxu0 0.0
      %963 = vmatpush1.msra.mxu0 0.0
      %964 = vmatprep.subr.mxu0 0.0
      %965 = vmatpush1.msra.mxu0 0.0
      %966 = vmatprep.subr.mxu0 0.0
      %967 = vmatpush1.msra.mxu0 0.0
      %968 = vmatprep.subr.mxu0 0.0
      %969 = vmatpush1.msra.mxu0 0.0
      %970 = vmatprep.subr.mxu0 0.0
      %971 = vmatpush1.msra.mxu0 0.0
      %972 = vmatprep.subr.mxu0 0.0
      %973 = vmatpush1.msra.mxu0 0.0
      %974 = vmatprep.subr.mxu0 0.0
      %975 = vmatpush1.msra.mxu0 0.0
      %976 = vmatprep.subr.mxu0 0.0
      %977 = vmatpush1.msra.mxu0 0.0
      %978 = vmatprep.subr.mxu0 0.0
      %979 = vmatpush1.msra.mxu0 0.0
      %980 = vmatprep.subr.mxu0 0.0
      %981 = vmatpush1.msra.mxu0 0.0
      %982 = vmatprep.subr.mxu0 0.0
      %983 = vmatpush1.msra.mxu0 0.0
      %984 = vmatprep.subr.mxu0 0.0
      %985 = vmatpush1.msra.mxu0 0.0
      %986 = vmatprep.subr.mxu0 0.0
      %987 = vmatpush1.msra.mxu0 0.0
      %988 = vmatprep.subr.mxu0 0.0
      %989 = vmatpush1.msra.mxu0 0.0
      %990 = vmatprep.subr.mxu0 0.0
      %991 = vmatpush1.msra.mxu0 0.0
      %992 = vmatprep.subr.mxu0 0.0
      %993 = vmatpush1.msra.mxu0 0.0
      %994 = vmatprep.subr.mxu0 0.0
      %995 = vmatpush1.msra.mxu0 0.0
      %996 = vmatprep.subr.mxu0 0.0
      %997 = vmatpush1.msra.mxu0 0.0
      %998 = vmatprep.subr.mxu0 0.0
      %999 = vmatpush1.msra.mxu0 0.0
      %1000 = vmatprep.subr.mxu0 0.0
      %1001 = vmatpush1.msra.mxu0 0.0
      %1002 = vmatprep.subr.mxu0 0.0
      %1003 = vmatpush1.msra.mxu0 0.0
      %1004 = vmatprep.subr.mxu0 0.0
      %1005 = vmatpush1.msra.mxu0 0.0
      %1006 = vmatprep.subr.mxu0 0.0
      %1007 = vmatpush1.msra.mxu0 0.0
      %1008 = vmatprep.mubr.f32.mxu0 0.0
      %1009 = vmatmul.mubr.f32.gmra.mrb[0].mxu0 %v751
      %v1010 = vpop.f32.mrb[0].mxu0
      %v1011 = vadd.f32 0.0, %v1010
      %v1012 = vpop.f32.mrb[0].mxu0
      %v1013 = vadd.f32 0.0, %v1012
      %1014 = vdwg.mxu0
      %v1015 = vadd.f32 %v942, %v1011
      %v1016 = vadd.f32 %v943, %v1013
      %v1017 = vxor.u32 %v1015, 2147483648
      %v1018 = vxor.u32 %v1016, 2147483648
      %v1019 = vmul.f32 %v1017, 1.442695
      %v1020 = vpow.pop %v1019
      %v1021 = vmul.f32 %v1018, 1.442695
      %v1022 = vpow.pop %v1021
      %v1023 = vadd.f32 %v1020, 1.0
      %v1024 = vadd.f32 %v1022, 1.0
      %v1025 = vrcp.pop %v1023
      %v1026 = vmul.f32 1.0, %v1025
      %v1027 = vrcp.pop %v1024
      %v1028 = vmul.f32 1.0, %v1027
      %v1029 = vtanh.pop %v1016
      %v1030 = vmul.f32 %v1026, %v743
      %1032 = vrot.lane.b32.xlu0 %v1029, 64
      %v1033 = vpop.permute.xlu0 %1032
      %v1035 = vmul.f32 %v1026, %v1033
      %1037 = vrot.lane.b32.xlu0 %v1035, 64
      %v1038 = vpop.permute.xlu0 %1037
      %v1040 = vadd.f32 %v1030, %v1038
      %v1041 = vtanh.pop %v1040
      %1043 = vrot.lane.b32.xlu0 %v1041, 64
      %v1044 = vpop.permute.xlu0 %1043
      %v1046 = vmul.f32 %v1028, %v1044
      %v1048 = vsel %vm312, %v1046, 0
      %1050 = vmatprep.subr.mxu0 %v424
      %1051 = vmatpush1.msra.mxu0 %v423
      %1052 = vmatprep.subr.mxu0 %v426
      %1053 = vmatpush1.msra.mxu0 %v425
      %1054 = vmatprep.subr.mxu0 %v428
      %1055 = vmatpush1.msra.mxu0 %v427
      %1056 = vmatprep.subr.mxu0 %v430
      %1057 = vmatpush1.msra.mxu0 %v429
      %1058 = vmatprep.subr.mxu0 %v432
      %1059 = vmatpush1.msra.mxu0 %v431
      %1060 = vmatprep.subr.mxu0 %v434
      %1061 = vmatpush1.msra.mxu0 %v433
      %1062 = vmatprep.subr.mxu0 %v436
      %1063 = vmatpush1.msra.mxu0 %v435
      %1064 = vmatprep.subr.mxu0 %v438
      %1065 = vmatpush1.msra.mxu0 %v437
      %1066 = vmatprep.subr.mxu0 0.0
      %1067 = vmatpush1.msra.mxu0 0.0
      %1068 = vmatprep.subr.mxu0 0.0
      %1069 = vmatpush1.msra.mxu0 0.0
      %1070 = vmatprep.subr.mxu0 0.0
      %1071 = vmatpush1.msra.mxu0 0.0
      %1072 = vmatprep.subr.mxu0 0.0
      %1073 = vmatpush1.msra.mxu0 0.0
      %1074 = vmatprep.subr.mxu0 0.0
      %1075 = vmatpush1.msra.mxu0 0.0
      %1076 = vmatprep.subr.mxu0 0.0
      %1077 = vmatpush1.msra.mxu0 0.0
      %1078 = vmatprep.subr.mxu0 0.0
      %1079 = vmatpush1.msra.mxu0 0.0
      %1080 = vmatprep.subr.mxu0 0.0
      %1081 = vmatpush1.msra.mxu0 0.0
      %1082 = vmatprep.subr.mxu0 0.0
      %1083 = vmatpush1.msra.mxu0 0.0
      %1084 = vmatprep.subr.mxu0 0.0
      %1085 = vmatpush1.msra.mxu0 0.0
      %1086 = vmatprep.subr.mxu0 0.0
      %1087 = vmatpush1.msra.mxu0 0.0
      %1088 = vmatprep.subr.mxu0 0.0
      %1089 = vmatpush1.msra.mxu0 0.0
      %1090 = vmatprep.subr.mxu0 0.0
      %1091 = vmatpush1.msra.mxu0 0.0
      %1092 = vmatprep.subr.mxu0 0.0
      %1093 = vmatpush1.msra.mxu0 0.0
      %1094 = vmatprep.subr.mxu0 0.0
      %1095 = vmatpush1.msra.mxu0 0.0
      %1096 = vmatprep.subr.mxu0 0.0
      %1097 = vmatpush1.msra.mxu0 0.0
      %1098 = vmatprep.subr.mxu0 0.0
      %1099 = vmatpush1.msra.mxu0 0.0
      %1100 = vmatprep.subr.mxu0 0.0
      %1101 = vmatpush1.msra.mxu0 0.0
      %1102 = vmatprep.subr.mxu0 0.0
      %1103 = vmatpush1.msra.mxu0 0.0
      %1104 = vmatprep.subr.mxu0 0.0
      %1105 = vmatpush1.msra.mxu0 0.0
      %1106 = vmatprep.subr.mxu0 0.0
      %1107 = vmatpush1.msra.mxu0 0.0
      %1108 = vmatprep.subr.mxu0 0.0
      %1109 = vmatpush1.msra.mxu0 0.0
      %1110 = vmatprep.subr.mxu0 0.0
      %1111 = vmatpush1.msra.mxu0 0.0
      %1112 = vmatprep.subr.mxu0 0.0
      %1113 = vmatpush1.msra.mxu0 0.0
      %1114 = vmatprep.mubr.f32.mxu0 0.0
      %1115 = vmatmul.mubr.f32.gmra.mrb[0].mxu0 %v1048
      %v1116 = vpop.f32.mrb[0].mxu0
      %v1117 = vadd.f32 0.0, %v1116
      %v1118 = vpop.f32.mrb[0].mxu0
      %v1119 = vadd.f32 0.0, %v1118
      %1120 = vdwg.mxu0
      %v1122 = vsel %vm312, %v929, 0
      %1124 = vmatprep.subr.mxu0 %v276
      %1125 = vmatpush1.msra.mxu0 %v275
      %1126 = vmatprep.subr.mxu0 %v278
      %1127 = vmatpush1.msra.mxu0 %v277
      %1128 = vmatprep.subr.mxu0 %v280
      %1129 = vmatpush1.msra.mxu0 %v279
      %1130 = vmatprep.subr.mxu0 %v282
      %1131 = vmatpush1.msra.mxu0 %v281
      %1132 = vmatprep.subr.mxu0 %v284
      %1133 = vmatpush1.msra.mxu0 %v283
      %1134 = vmatprep.subr.mxu0 %v286
      %1135 = vmatpush1.msra.mxu0 %v285
      %1136 = vmatprep.subr.mxu0 %v288
      %1137 = vmatpush1.msra.mxu0 %v287
      %1138 = vmatprep.subr.mxu0 %v290
      %1139 = vmatpush1.msra.mxu0 %v289
      %1140 = vmatprep.subr.mxu0 0.0
      %1141 = vmatpush1.msra.mxu0 0.0
      %1142 = vmatprep.subr.mxu0 0.0
      %1143 = vmatpush1.msra.mxu0 0.0
      %1144 = vmatprep.subr.mxu0 0.0
      %1145 = vmatpush1.msra.mxu0 0.0
      %1146 = vmatprep.subr.mxu0 0.0
      %1147 = vmatpush1.msra.mxu0 0.0
      %1148 = vmatprep.subr.mxu0 0.0
      %1149 = vmatpush1.msra.mxu0 0.0
      %1150 = vmatprep.subr.mxu0 0.0
      %1151 = vmatpush1.msra.mxu0 0.0
      %1152 = vmatprep.subr.mxu0 0.0
      %1153 = vmatpush1.msra.mxu0 0.0
      %1154 = vmatprep.subr.mxu0 0.0
      %1155 = vmatpush1.msra.mxu0 0.0
      %1156 = vmatprep.subr.mxu0 0.0
      %1157 = vmatpush1.msra.mxu0 0.0
      %1158 = vmatprep.subr.mxu0 0.0
      %1159 = vmatpush1.msra.mxu0 0.0
      %1160 = vmatprep.subr.mxu0 0.0
      %1161 = vmatpush1.msra.mxu0 0.0
      %1162 = vmatprep.subr.mxu0 0.0
      %1163 = vmatpush1.msra.mxu0 0.0
      %1164 = vmatprep.subr.mxu0 0.0
      %1165 = vmatpush1.msra.mxu0 0.0
      %1166 = vmatprep.subr.mxu0 0.0
      %1167 = vmatpush1.msra.mxu0 0.0
      %1168 = vmatprep.subr.mxu0 0.0
      %1169 = vmatpush1.msra.mxu0 0.0
      %1170 = vmatprep.subr.mxu0 0.0
      %1171 = vmatpush1.msra.mxu0 0.0
      %1172 = vmatprep.subr.mxu0 0.0
      %1173 = vmatpush1.msra.mxu0 0.0
      %1174 = vmatprep.subr.mxu0 0.0
      %1175 = vmatpush1.msra.mxu0 0.0
      %1176 = vmatprep.subr.mxu0 0.0
      %1177 = vmatpush1.msra.mxu0 0.0
      %1178 = vmatprep.subr.mxu0 0.0
      %1179 = vmatpush1.msra.mxu0 0.0
      %1180 = vmatprep.subr.mxu0 0.0
      %1181 = vmatpush1.msra.mxu0 0.0
      %1182 = vmatprep.subr.mxu0 0.0
      %1183 = vmatpush1.msra.mxu0 0.0
      %1184 = vmatprep.subr.mxu0 0.0
      %1185 = vmatpush1.msra.mxu0 0.0
      %1186 = vmatprep.subr.mxu0 0.0
      %1187 = vmatpush1.msra.mxu0 0.0
      %1188 = vmatprep.mubr.f32.mxu0 0.0
      %1189 = vmatmul.mubr.f32.gmra.mrb[0].mxu0 %v1122
      %v1190 = vpop.f32.mrb[0].mxu0
      %v1191 = vadd.f32 %v1117, %v1190
      %v1192 = vpop.f32.mrb[0].mxu0
      %v1193 = vadd.f32 %v1119, %v1192
      %1194 = vdwg.mxu0
      %v1195 = vadd.f32 %v1191, %v591
      %v1196 = vadd.f32 %v1193, %v595
      %v1197 = vxor.u32 %v1195, 2147483648
      %v1198 = vxor.u32 %v1196, 2147483648
      %v1199 = vmul.f32 %v1197, 1.442695
      %v1200 = vpow.pop %v1199
      %v1201 = vmul.f32 %v1198, 1.442695
      %v1202 = vpow.pop %v1201
      %v1203 = vadd.f32 %v1200, 1.0
      %v1204 = vadd.f32 %v1202, 1.0
      %v1205 = vrcp.pop %v1203
      %v1206 = vmul.f32 1.0, %v1205
      %v1207 = vrcp.pop %v1204
      %v1208 = vmul.f32 1.0, %v1207
      %v1209 = vtanh.pop %v1196
      %v1210 = vmul.f32 %v1206, %v923
      %1212 = vrot.lane.b32.xlu0 %v1209, 64
      %v1213 = vpop.permute.xlu0 %1212
      %v1215 = vmul.f32 %v1206, %v1213
      %1217 = vrot.lane.b32.xlu0 %v1215, 64
      %v1218 = vpop.permute.xlu0 %1217
      %v1220 = vadd.f32 %v1210, %v1218
      %v1221 = vtanh.pop %v1220
      %1223 = vrot.lane.b32.xlu0 %v1221, 64
      %v1224 = vpop.permute.xlu0 %1223
      %v1226 = vmul.f32 %v1208, %v1224
      %s1227 = sadd.s32 %s83, 2
      %v1228 = vstv %s1227
      %vm1229 = vcmp.eq.s32.totalorder %v268, %v1228
      %v1230 = vsel %vm1229, 1, 0
      %1231 = vset.pattern.permute.xlu0 0
      %1232 = vperm.xlu0 %1231, %v1230
      %v1233 = vpop.permute.xlu0 %1232
      %vm1234 = vcmp.eq.s32.totalorder %v1233, 1
      %v1235 = vsel %vm1234, %v1226, %v938
      %s1236 = smul.u32 3, 2
      %s1237 = smul.addr %s1236, 8
      %s1238 = scalar_lea.vmem [#allocation6], %s1237
      %v1239 = vld [vmem:[%s1238] sm:$0xff]
      %v1240 = vld [vmem:[%s1238 + $0x8] sm:$0xff]
      %1241 = vmatprep.subr.mxu0 %v297
      %1242 = vmatpush1.msra.mxu0 %v296
      %1243 = vmatprep.subr.mxu0 %v299
      %1244 = vmatpush1.msra.mxu0 %v298
      %1245 = vmatprep.subr.mxu0 %v301
      %1246 = vmatpush1.msra.mxu0 %v300
      %1247 = vmatprep.subr.mxu0 %v303
      %1248 = vmatpush1.msra.mxu0 %v302
      %1249 = vmatprep.subr.mxu0 %v305
      %1250 = vmatpush1.msra.mxu0 %v304
      %1251 = vmatprep.subr.mxu0 %v307
      %1252 = vmatpush1.msra.mxu0 %v306
      %1253 = vmatprep.subr.mxu0 %v309
      %1254 = vmatpush1.msra.mxu0 %v308
      %1255 = vmatprep.subr.mxu0 %v311
      %1256 = vmatpush1.msra.mxu0 %v310
      %1257 = vmatprep.subr.mxu0 0.0
      %1258 = vmatpush1.msra.mxu0 0.0
      %1259 = vmatprep.subr.mxu0 0.0
      %1260 = vmatpush1.msra.mxu0 0.0
      %1261 = vmatprep.subr.mxu0 0.0
      %1262 = vmatpush1.msra.mxu0 0.0
      %1263 = vmatprep.subr.mxu0 0.0
      %1264 = vmatpush1.msra.mxu0 0.0
      %1265 = vmatprep.subr.mxu0 0.0
      %1266 = vmatpush1.msra.mxu0 0.0
      %1267 = vmatprep.subr.mxu0 0.0
      %1268 = vmatpush1.msra.mxu0 0.0
      %1269 = vmatprep.subr.mxu0 0.0
      %1270 = vmatpush1.msra.mxu0 0.0
      %1271 = vmatprep.subr.mxu0 0.0
      %1272 = vmatpush1.msra.mxu0 0.0
      %1273 = vmatprep.subr.mxu0 0.0
      %1274 = vmatpush1.msra.mxu0 0.0
      %1275 = vmatprep.subr.mxu0 0.0
      %1276 = vmatpush1.msra.mxu0 0.0
      %1277 = vmatprep.subr.mxu0 0.0
      %1278 = vmatpush1.msra.mxu0 0.0
      %1279 = vmatprep.subr.mxu0 0.0
      %1280 = vmatpush1.msra.mxu0 0.0
      %1281 = vmatprep.subr.mxu0 0.0
      %1282 = vmatpush1.msra.mxu0 0.0
      %1283 = vmatprep.subr.mxu0 0.0
      %1284 = vmatpush1.msra.mxu0 0.0
      %1285 = vmatprep.subr.mxu0 0.0
      %1286 = vmatpush1.msra.mxu0 0.0
      %1287 = vmatprep.subr.mxu0 0.0
      %1288 = vmatpush1.msra.mxu0 0.0
      %1289 = vmatprep.subr.mxu0 0.0
      %1290 = vmatpush1.msra.mxu0 0.0
      %1291 = vmatprep.subr.mxu0 0.0
      %1292 = vmatpush1.msra.mxu0 0.0
      %1293 = vmatprep.subr.mxu0 0.0
      %1294 = vmatpush1.msra.mxu0 0.0
      %1295 = vmatprep.subr.mxu0 0.0
      %1296 = vmatpush1.msra.mxu0 0.0
      %1297 = vmatprep.subr.mxu0 0.0
      %1298 = vmatpush1.msra.mxu0 0.0
      %1299 = vmatprep.subr.mxu0 0.0
      %1300 = vmatpush1.msra.mxu0 0.0
      %1301 = vmatprep.subr.mxu0 0.0
      %1302 = vmatpush1.msra.mxu0 0.0
      %1303 = vmatprep.subr.mxu0 0.0
      %1304 = vmatpush1.msra.mxu0 0.0
      %1305 = vmatprep.mubr.f32.mxu0 0.0
      %1306 = vmatmul.mubr.f32.gmra.mrb[0].mxu0 %v1048
      %v1307 = vpop.f32.mrb[0].mxu0
      %v1308 = vadd.f32 0.0, %v1307
      %v1309 = vpop.f32.mrb[0].mxu0
      %v1310 = vadd.f32 0.0, %v1309
      %1311 = vdwg.mxu0
      %v1312 = vadd.f32 %v1239, %v1308
      %v1313 = vadd.f32 %v1240, %v1310
      %v1314 = vxor.u32 %v1312, 2147483648
      %v1315 = vxor.u32 %v1313, 2147483648
      %v1316 = vmul.f32 %v1314, 1.442695
      %v1317 = vpow.pop %v1316
      %v1318 = vmul.f32 %v1315, 1.442695
      %v1319 = vpow.pop %v1318
      %v1320 = vadd.f32 %v1317, 1.0
      %v1321 = vadd.f32 %v1319, 1.0
      %v1322 = vrcp.pop %v1320
      %v1323 = vmul.f32 1.0, %v1322
      %v1324 = vrcp.pop %v1321
      %v1325 = vmul.f32 1.0, %v1324
      %v1326 = vtanh.pop %v1313
      %v1327 = vmul.f32 %v1323, %v1040
      %1329 = vrot.lane.b32.xlu0 %v1326, 64
      %v1330 = vpop.permute.xlu0 %1329
      %v1332 = vmul.f32 %v1323, %v1330
      %1334 = vrot.lane.b32.xlu0 %v1332, 64
      %v1335 = vpop.permute.xlu0 %1334
      %v1337 = vadd.f32 %v1327, %v1335
      %v1338 = vtanh.pop %v1337
      %1340 = vrot.lane.b32.xlu0 %v1338, 64
      %v1341 = vpop.permute.xlu0 %1340
      %v1343 = vmul.f32 %v1325, %v1341
      %v1345 = vsel %vm312, %v1343, 0
      %1347 = vmatprep.subr.mxu0 %v424
      %1348 = vmatpush1.msra.mxu0 %v423
      %1349 = vmatprep.subr.mxu0 %v426
      %1350 = vmatpush1.msra.mxu0 %v425
      %1351 = vmatprep.subr.mxu0 %v428
      %1352 = vmatpush1.msra.mxu0 %v427
      %1353 = vmatprep.subr.mxu0 %v430
      %1354 = vmatpush1.msra.mxu0 %v429
      %1355 = vmatprep.subr.mxu0 %v432
      %1356 = vmatpush1.msra.mxu0 %v431
      %1357 = vmatprep.subr.mxu0 %v434
      %1358 = vmatpush1.msra.mxu0 %v433
      %1359 = vmatprep.subr.mxu0 %v436
      %1360 = vmatpush1.msra.mxu0 %v435
      %1361 = vmatprep.subr.mxu0 %v438
      %1362 = vmatpush1.msra.mxu0 %v437
      %1363 = vmatprep.subr.mxu0 0.0
      %1364 = vmatpush1.msra.mxu0 0.0
      %1365 = vmatprep.subr.mxu0 0.0
      %1366 = vmatpush1.msra.mxu0 0.0
      %1367 = vmatprep.subr.mxu0 0.0
      %1368 = vmatpush1.msra.mxu0 0.0
      %1369 = vmatprep.subr.mxu0 0.0
      %1370 = vmatpush1.msra.mxu0 0.0
      %1371 = vmatprep.subr.mxu0 0.0
      %1372 = vmatpush1.msra.mxu0 0.0
      %1373 = vmatprep.subr.mxu0 0.0
      %1374 = vmatpush1.msra.mxu0 0.0
      %1375 = vmatprep.subr.mxu0 0.0
      %1376 = vmatpush1.msra.mxu0 0.0
      %1377 = vmatprep.subr.mxu0 0.0
      %1378 = vmatpush1.msra.mxu0 0.0
      %1379 = vmatprep.subr.mxu0 0.0
      %1380 = vmatpush1.msra.mxu0 0.0
      %1381 = vmatprep.subr.mxu0 0.0
      %1382 = vmatpush1.msra.mxu0 0.0
      %1383 = vmatprep.subr.mxu0 0.0
      %1384 = vmatpush1.msra.mxu0 0.0
      %1385 = vmatprep.subr.mxu0 0.0
      %1386 = vmatpush1.msra.mxu0 0.0
      %1387 = vmatprep.subr.mxu0 0.0
      %1388 = vmatpush1.msra.mxu0 0.0
      %1389 = vmatprep.subr.mxu0 0.0
      %1390 = vmatpush1.msra.mxu0 0.0
      %1391 = vmatprep.subr.mxu0 0.0
      %1392 = vmatpush1.msra.mxu0 0.0
      %1393 = vmatprep.subr.mxu0 0.0
      %1394 = vmatpush1.msra.mxu0 0.0
      %1395 = vmatprep.subr.mxu0 0.0
      %1396 = vmatpush1.msra.mxu0 0.0
      %1397 = vmatprep.subr.mxu0 0.0
      %1398 = vmatpush1.msra.mxu0 0.0
      %1399 = vmatprep.subr.mxu0 0.0
      %1400 = vmatpush1.msra.mxu0 0.0
      %1401 = vmatprep.subr.mxu0 0.0
      %1402 = vmatpush1.msra.mxu0 0.0
      %1403 = vmatprep.subr.mxu0 0.0
      %1404 = vmatpush1.msra.mxu0 0.0
      %1405 = vmatprep.subr.mxu0 0.0
      %1406 = vmatpush1.msra.mxu0 0.0
      %1407 = vmatprep.subr.mxu0 0.0
      %1408 = vmatpush1.msra.mxu0 0.0
      %1409 = vmatprep.subr.mxu0 0.0
      %1410 = vmatpush1.msra.mxu0 0.0
      %1411 = vmatprep.mubr.f32.mxu0 0.0
      %1412 = vmatmul.mubr.f32.gmra.mrb[0].mxu0 %v1345
      %v1413 = vpop.f32.mrb[0].mxu0
      %v1414 = vadd.f32 0.0, %v1413
      %v1415 = vpop.f32.mrb[0].mxu0
      %v1416 = vadd.f32 0.0, %v1415
      %1417 = vdwg.mxu0
      %v1419 = vsel %vm312, %v1226, 0
      %1421 = vmatprep.subr.mxu0 %v276
      %1422 = vmatpush1.msra.mxu0 %v275
      %1423 = vmatprep.subr.mxu0 %v278
      %1424 = vmatpush1.msra.mxu0 %v277
      %1425 = vmatprep.subr.mxu0 %v280
      %1426 = vmatpush1.msra.mxu0 %v279
      %1427 = vmatprep.subr.mxu0 %v282
      %1428 = vmatpush1.msra.mxu0 %v281
      %1429 = vmatprep.subr.mxu0 %v284
      %1430 = vmatpush1.msra.mxu0 %v283
      %1431 = vmatprep.subr.mxu0 %v286
      %1432 = vmatpush1.msra.mxu0 %v285
      %1433 = vmatprep.subr.mxu0 %v288
      %1434 = vmatpush1.msra.mxu0 %v287
      %1435 = vmatprep.subr.mxu0 %v290
      %1436 = vmatpush1.msra.mxu0 %v289
      %1437 = vmatprep.subr.mxu0 0.0
      %1438 = vmatpush1.msra.mxu0 0.0
      %1439 = vmatprep.subr.mxu0 0.0
      %1440 = vmatpush1.msra.mxu0 0.0
      %1441 = vmatprep.subr.mxu0 0.0
      %1442 = vmatpush1.msra.mxu0 0.0
      %1443 = vmatprep.subr.mxu0 0.0
      %1444 = vmatpush1.msra.mxu0 0.0
      %1445 = vmatprep.subr.mxu0 0.0
      %1446 = vmatpush1.msra.mxu0 0.0
      %1447 = vmatprep.subr.mxu0 0.0
      %1448 = vmatpush1.msra.mxu0 0.0
      %1449 = vmatprep.subr.mxu0 0.0
      %1450 = vmatpush1.msra.mxu0 0.0
      %1451 = vmatprep.subr.mxu0 0.0
      %1452 = vmatpush1.msra.mxu0 0.0
      %1453 = vmatprep.subr.mxu0 0.0
      %1454 = vmatpush1.msra.mxu0 0.0
      %1455 = vmatprep.subr.mxu0 0.0
      %1456 = vmatpush1.msra.mxu0 0.0
      %1457 = vmatprep.subr.mxu0 0.0
      %1458 = vmatpush1.msra.mxu0 0.0
      %1459 = vmatprep.subr.mxu0 0.0
      %1460 = vmatpush1.msra.mxu0 0.0
      %1461 = vmatprep.subr.mxu0 0.0
      %1462 = vmatpush1.msra.mxu0 0.0
      %1463 = vmatprep.subr.mxu0 0.0
      %1464 = vmatpush1.msra.mxu0 0.0
      %1465 = vmatprep.subr.mxu0 0.0
      %1466 = vmatpush1.msra.mxu0 0.0
      %1467 = vmatprep.subr.mxu0 0.0
      %1468 = vmatpush1.msra.mxu0 0.0
      %1469 = vmatprep.subr.mxu0 0.0
      %1470 = vmatpush1.msra.mxu0 0.0
      %1471 = vmatprep.subr.mxu0 0.0
      %1472 = vmatpush1.msra.mxu0 0.0
      %1473 = vmatprep.subr.mxu0 0.0
      %1474 = vmatpush1.msra.mxu0 0.0
      %1475 = vmatprep.subr.mxu0 0.0
      %1476 = vmatpush1.msra.mxu0 0.0
      %1477 = vmatprep.subr.mxu0 0.0
      %1478 = vmatpush1.msra.mxu0 0.0
      %1479 = vmatprep.subr.mxu0 0.0
      %1480 = vmatpush1.msra.mxu0 0.0
      %1481 = vmatprep.subr.mxu0 0.0
      %1482 = vmatpush1.msra.mxu0 0.0
      %1483 = vmatprep.subr.mxu0 0.0
      %1484 = vmatpush1.msra.mxu0 0.0
      %1485 = vmatprep.mubr.f32.mxu0 0.0
      %1486 = vmatmul.mubr.f32.gmra.mrb[0].mxu0 %v1419
      %v1487 = vpop.f32.mrb[0].mxu0
      %v1488 = vadd.f32 %v1414, %v1487
      %v1489 = vpop.f32.mrb[0].mxu0
      %v1490 = vadd.f32 %v1416, %v1489
      %1491 = vdwg.mxu0
      %v1492 = vadd.f32 %v1488, %v591
      %v1493 = vadd.f32 %v1490, %v595
      %v1494 = vxor.u32 %v1492, 2147483648
      %v1495 = vxor.u32 %v1493, 2147483648
      %v1496 = vmul.f32 %v1494, 1.442695
      %v1497 = vpow.pop %v1496
      %v1498 = vmul.f32 %v1495, 1.442695
      %v1499 = vpow.pop %v1498
      %v1500 = vadd.f32 %v1497, 1.0
      %v1501 = vadd.f32 %v1499, 1.0
      %v1502 = vrcp.pop %v1500
      %v1503 = vmul.f32 1.0, %v1502
      %v1504 = vrcp.pop %v1501
      %v1505 = vmul.f32 1.0, %v1504
      %v1506 = vtanh.pop %v1493
      %v1507 = vmul.f32 %v1503, %v1220
      %1509 = vrot.lane.b32.xlu0 %v1506, 64
      %v1510 = vpop.permute.xlu0 %1509
      %v1512 = vmul.f32 %v1503, %v1510
      %1514 = vrot.lane.b32.xlu0 %v1512, 64
      %v1515 = vpop.permute.xlu0 %1514
      %v1517 = vadd.f32 %v1507, %v1515
      %v1518 = vtanh.pop %v1517
      %1520 = vrot.lane.b32.xlu0 %v1518, 64
      %v1521 = vpop.permute.xlu0 %1520
      %v1523 = vmul.f32 %v1505, %v1521
      %s1524 = sadd.s32 %s83, 3
      %v1525 = vstv %s1524
      %vm1526 = vcmp.eq.s32.totalorder %v268, %v1525
      %v1527 = vsel %vm1526, 1, 0
      %1528 = vset.pattern.permute.xlu0 0
      %1529 = vperm.xlu0 %1528, %v1527
      %v1530 = vpop.permute.xlu0 %1529
      %vm1531 = vcmp.eq.s32.totalorder %v1530, 1
      %v1532 = vsel %vm1531, %v1523, %v1235
      %s1533 = smul.u32 4, 2
      %s1534 = smul.addr %s1533, 8
      %s1535 = scalar_lea.vmem [#allocation6], %s1534
      %v1536 = vld [vmem:[%s1535] sm:$0xff]
      %v1537 = vld [vmem:[%s1535 + $0x8] sm:$0xff]
      %1538 = vmatprep.subr.mxu0 %v297
      %1539 = vmatpush1.msra.mxu0 %v296
      %1540 = vmatprep.subr.mxu0 %v299
      %1541 = vmatpush1.msra.mxu0 %v298
      %1542 = vmatprep.subr.mxu0 %v301
      %1543 = vmatpush1.msra.mxu0 %v300
      %1544 = vmatprep.subr.mxu0 %v303
      %1545 = vmatpush1.msra.mxu0 %v302
      %1546 = vmatprep.subr.mxu0 %v305
      %1547 = vmatpush1.msra.mxu0 %v304
      %1548 = vmatprep.subr.mxu0 %v307
      %1549 = vmatpush1.msra.mxu0 %v306
      %1550 = vmatprep.subr.mxu0 %v309
      %1551 = vmatpush1.msra.mxu0 %v308
      %1552 = vmatprep.subr.mxu0 %v311
      %1553 = vmatpush1.msra.mxu0 %v310
      %1554 = vmatprep.subr.mxu0 0.0
      %1555 = vmatpush1.msra.mxu0 0.0
      %1556 = vmatprep.subr.mxu0 0.0
      %1557 = vmatpush1.msra.mxu0 0.0
      %1558 = vmatprep.subr.mxu0 0.0
      %1559 = vmatpush1.msra.mxu0 0.0
      %1560 = vmatprep.subr.mxu0 0.0
      %1561 = vmatpush1.msra.mxu0 0.0
      %1562 = vmatprep.subr.mxu0 0.0
      %1563 = vmatpush1.msra.mxu0 0.0
      %1564 = vmatprep.subr.mxu0 0.0
      %1565 = vmatpush1.msra.mxu0 0.0
      %1566 = vmatprep.subr.mxu0 0.0
      %1567 = vmatpush1.msra.mxu0 0.0
      %1568 = vmatprep.subr.mxu0 0.0
      %1569 = vmatpush1.msra.mxu0 0.0
      %1570 = vmatprep.subr.mxu0 0.0
      %1571 = vmatpush1.msra.mxu0 0.0
      %1572 = vmatprep.subr.mxu0 0.0
      %1573 = vmatpush1.msra.mxu0 0.0
      %1574 = vmatprep.subr.mxu0 0.0
      %1575 = vmatpush1.msra.mxu0 0.0
      %1576 = vmatprep.subr.mxu0 0.0
      %1577 = vmatpush1.msra.mxu0 0.0
      %1578 = vmatprep.subr.mxu0 0.0
      %1579 = vmatpush1.msra.mxu0 0.0
      %1580 = vmatprep.subr.mxu0 0.0
      %1581 = vmatpush1.msra.mxu0 0.0
      %1582 = vmatprep.subr.mxu0 0.0
      %1583 = vmatpush1.msra.mxu0 0.0
      %1584 = vmatprep.subr.mxu0 0.0
      %1585 = vmatpush1.msra.mxu0 0.0
      %1586 = vmatprep.subr.mxu0 0.0
      %1587 = vmatpush1.msra.mxu0 0.0
      %1588 = vmatprep.subr.mxu0 0.0
      %1589 = vmatpush1.msra.mxu0 0.0
      %1590 = vmatprep.subr.mxu0 0.0
      %1591 = vmatpush1.msra.mxu0 0.0
      %1592 = vmatprep.subr.mxu0 0.0
      %1593 = vmatpush1.msra.mxu0 0.0
      %1594 = vmatprep.subr.mxu0 0.0
      %1595 = vmatpush1.msra.mxu0 0.0
      %1596 = vmatprep.subr.mxu0 0.0
      %1597 = vmatpush1.msra.mxu0 0.0
      %1598 = vmatprep.subr.mxu0 0.0
      %1599 = vmatpush1.msra.mxu0 0.0
      %1600 = vmatprep.subr.mxu0 0.0
      %1601 = vmatpush1.msra.mxu0 0.0
      %1602 = vmatprep.mubr.f32.mxu0 0.0
      %1603 = vmatmul.mubr.f32.gmra.mrb[0].mxu0 %v1345
      %v1604 = vpop.f32.mrb[0].mxu0
      %v1605 = vadd.f32 0.0, %v1604
      %v1606 = vpop.f32.mrb[0].mxu0
      %v1607 = vadd.f32 0.0, %v1606
      %1608 = vdwg.mxu0
      %v1609 = vadd.f32 %v1536, %v1605
      %v1610 = vadd.f32 %v1537, %v1607
      %v1611 = vxor.u32 %v1609, 2147483648
      %v1612 = vxor.u32 %v1610, 2147483648
      %v1613 = vmul.f32 %v1611, 1.442695
      %v1614 = vpow.pop %v1613
      %v1615 = vmul.f32 %v1612, 1.442695
      %v1616 = vpow.pop %v1615
      %v1617 = vadd.f32 %v1614, 1.0
      %v1618 = vadd.f32 %v1616, 1.0
      %v1619 = vrcp.pop %v1617
      %v1620 = vmul.f32 1.0, %v1619
      %v1621 = vrcp.pop %v1618
      %v1622 = vmul.f32 1.0, %v1621
      %v1623 = vtanh.pop %v1610
      %v1624 = vmul.f32 %v1620, %v1337
      %1626 = vrot.lane.b32.xlu0 %v1623, 64
      %v1627 = vpop.permute.xlu0 %1626
      %v1629 = vmul.f32 %v1620, %v1627
      %1631 = vrot.lane.b32.xlu0 %v1629, 64
      %v1632 = vpop.permute.xlu0 %1631
      %v1634 = vadd.f32 %v1624, %v1632
      %v1635 = vtanh.pop %v1634
      %1637 = vrot.lane.b32.xlu0 %v1635, 64
      %v1638 = vpop.permute.xlu0 %1637
      %v1640 = vmul.f32 %v1622, %v1638
      %v1642 = vsel %vm312, %v1640, 0
      %1644 = vmatprep.subr.mxu0 %v424
      %1645 = vmatpush1.msra.mxu0 %v423
      %1646 = vmatprep.subr.mxu0 %v426
      %1647 = vmatpush1.msra.mxu0 %v425
      %1648 = vmatprep.subr.mxu0 %v428
      %1649 = vmatpush1.msra.mxu0 %v427
      %1650 = vmatprep.subr.mxu0 %v430
      %1651 = vmatpush1.msra.mxu0 %v429
      %1652 = vmatprep.subr.mxu0 %v432
      %1653 = vmatpush1.msra.mxu0 %v431
      %1654 = vmatprep.subr.mxu0 %v434
      %1655 = vmatpush1.msra.mxu0 %v433
      %1656 = vmatprep.subr.mxu0 %v436
      %1657 = vmatpush1.msra.mxu0 %v435
      %1658 = vmatprep.subr.mxu0 %v438
      %1659 = vmatpush1.msra.mxu0 %v437
      %1660 = vmatprep.subr.mxu0 0.0
      %1661 = vmatpush1.msra.mxu0 0.0
      %1662 = vmatprep.subr.mxu0 0.0
      %1663 = vmatpush1.msra.mxu0 0.0
      %1664 = vmatprep.subr.mxu0 0.0
      %1665 = vmatpush1.msra.mxu0 0.0
      %1666 = vmatprep.subr.mxu0 0.0
      %1667 = vmatpush1.msra.mxu0 0.0
      %1668 = vmatprep.subr.mxu0 0.0
      %1669 = vmatpush1.msra.mxu0 0.0
      %1670 = vmatprep.subr.mxu0 0.0
      %1671 = vmatpush1.msra.mxu0 0.0
      %1672 = vmatprep.subr.mxu0 0.0
      %1673 = vmatpush1.msra.mxu0 0.0
      %1674 = vmatprep.subr.mxu0 0.0
      %1675 = vmatpush1.msra.mxu0 0.0
      %1676 = vmatprep.subr.mxu0 0.0
      %1677 = vmatpush1.msra.mxu0 0.0
      %1678 = vmatprep.subr.mxu0 0.0
      %1679 = vmatpush1.msra.mxu0 0.0
      %1680 = vmatprep.subr.mxu0 0.0
      %1681 = vmatpush1.msra.mxu0 0.0
      %1682 = vmatprep.subr.mxu0 0.0
      %1683 = vmatpush1.msra.mxu0 0.0
      %1684 = vmatprep.subr.mxu0 0.0
      %1685 = vmatpush1.msra.mxu0 0.0
      %1686 = vmatprep.subr.mxu0 0.0
      %1687 = vmatpush1.msra.mxu0 0.0
      %1688 = vmatprep.subr.mxu0 0.0
      %1689 = vmatpush1.msra.mxu0 0.0
      %1690 = vmatprep.subr.mxu0 0.0
      %1691 = vmatpush1.msra.mxu0 0.0
      %1692 = vmatprep.subr.mxu0 0.0
      %1693 = vmatpush1.msra.mxu0 0.0
      %1694 = vmatprep.subr.mxu0 0.0
      %1695 = vmatpush1.msra.mxu0 0.0
      %1696 = vmatprep.subr.mxu0 0.0
      %1697 = vmatpush1.msra.mxu0 0.0
      %1698 = vmatprep.subr.mxu0 0.0
      %1699 = vmatpush1.msra.mxu0 0.0
      %1700 = vmatprep.subr.mxu0 0.0
      %1701 = vmatpush1.msra.mxu0 0.0
      %1702 = vmatprep.subr.mxu0 0.0
      %1703 = vmatpush1.msra.mxu0 0.0
      %1704 = vmatprep.subr.mxu0 0.0
      %1705 = vmatpush1.msra.mxu0 0.0
      %1706 = vmatprep.subr.mxu0 0.0
      %1707 = vmatpush1.msra.mxu0 0.0
      %1708 = vmatprep.mubr.f32.mxu0 0.0
      %1709 = vmatmul.mubr.f32.gmra.mrb[0].mxu0 %v1642
      %v1710 = vpop.f32.mrb[0].mxu0
      %v1711 = vadd.f32 0.0, %v1710
      %v1712 = vpop.f32.mrb[0].mxu0
      %v1713 = vadd.f32 0.0, %v1712
      %1714 = vdwg.mxu0
      %v1716 = vsel %vm312, %v1523, 0
      %1718 = vmatprep.subr.mxu0 %v276
      %1719 = vmatpush1.msra.mxu0 %v275
      %1720 = vmatprep.subr.mxu0 %v278
      %1721 = vmatpush1.msra.mxu0 %v277
      %1722 = vmatprep.subr.mxu0 %v280
      %1723 = vmatpush1.msra.mxu0 %v279
      %1724 = vmatprep.subr.mxu0 %v282
      %1725 = vmatpush1.msra.mxu0 %v281
      %1726 = vmatprep.subr.mxu0 %v284
      %1727 = vmatpush1.msra.mxu0 %v283
      %1728 = vmatprep.subr.mxu0 %v286
      %1729 = vmatpush1.msra.mxu0 %v285
      %1730 = vmatprep.subr.mxu0 %v288
      %1731 = vmatpush1.msra.mxu0 %v287
      %1732 = vmatprep.subr.mxu0 %v290
      %1733 = vmatpush1.msra.mxu0 %v289
      %1734 = vmatprep.subr.mxu0 0.0
      %1735 = vmatpush1.msra.mxu0 0.0
      %1736 = vmatprep.subr.mxu0 0.0
      %1737 = vmatpush1.msra.mxu0 0.0
      %1738 = vmatprep.subr.mxu0 0.0
      %1739 = vmatpush1.msra.mxu0 0.0
      %1740 = vmatprep.subr.mxu0 0.0
      %1741 = vmatpush1.msra.mxu0 0.0
      %1742 = vmatprep.subr.mxu0 0.0
      %1743 = vmatpush1.msra.mxu0 0.0
      %1744 = vmatprep.subr.mxu0 0.0
      %1745 = vmatpush1.msra.mxu0 0.0
      %1746 = vmatprep.subr.mxu0 0.0
      %1747 = vmatpush1.msra.mxu0 0.0
      %1748 = vmatprep.subr.mxu0 0.0
      %1749 = vmatpush1.msra.mxu0 0.0
      %1750 = vmatprep.subr.mxu0 0.0
      %1751 = vmatpush1.msra.mxu0 0.0
      %1752 = vmatprep.subr.mxu0 0.0
      %1753 = vmatpush1.msra.mxu0 0.0
      %1754 = vmatprep.subr.mxu0 0.0
      %1755 = vmatpush1.msra.mxu0 0.0
      %1756 = vmatprep.subr.mxu0 0.0
      %1757 = vmatpush1.msra.mxu0 0.0
      %1758 = vmatprep.subr.mxu0 0.0
      %1759 = vmatpush1.msra.mxu0 0.0
      %1760 = vmatprep.subr.mxu0 0.0
      %1761 = vmatpush1.msra.mxu0 0.0
      %1762 = vmatprep.subr.mxu0 0.0
      %1763 = vmatpush1.msra.mxu0 0.0
      %1764 = vmatprep.subr.mxu0 0.0
      %1765 = vmatpush1.msra.mxu0 0.0
      %1766 = vmatprep.subr.mxu0 0.0
      %1767 = vmatpush1.msra.mxu0 0.0
      %1768 = vmatprep.subr.mxu0 0.0
      %1769 = vmatpush1.msra.mxu0 0.0
      %1770 = vmatprep.subr.mxu0 0.0
      %1771 = vmatpush1.msra.mxu0 0.0
      %1772 = vmatprep.subr.mxu0 0.0
      %1773 = vmatpush1.msra.mxu0 0.0
      %1774 = vmatprep.subr.mxu0 0.0
      %1775 = vmatpush1.msra.mxu0 0.0
      %1776 = vmatprep.subr.mxu0 0.0
      %1777 = vmatpush1.msra.mxu0 0.0
      %1778 = vmatprep.subr.mxu0 0.0
      %1779 = vmatpush1.msra.mxu0 0.0
      %1780 = vmatprep.subr.mxu0 0.0
      %1781 = vmatpush1.msra.mxu0 0.0
      %1782 = vmatprep.mubr.f32.mxu0 0.0
      %1783 = vmatmul.mubr.f32.gmra.mrb[0].mxu0 %v1716
      %v1784 = vpop.f32.mrb[0].mxu0
      %v1785 = vadd.f32 %v1711, %v1784
      %v1786 = vpop.f32.mrb[0].mxu0
      %v1787 = vadd.f32 %v1713, %v1786
      %1788 = vdwg.mxu0
      %v1789 = vadd.f32 %v1785, %v591
      %v1790 = vadd.f32 %v1787, %v595
      %v1791 = vxor.u32 %v1789, 2147483648
      %v1792 = vxor.u32 %v1790, 2147483648
      %v1793 = vmul.f32 %v1791, 1.442695
      %v1794 = vpow.pop %v1793
      %v1795 = vmul.f32 %v1792, 1.442695
      %v1796 = vpow.pop %v1795
      %v1797 = vadd.f32 %v1794, 1.0
      %v1798 = vadd.f32 %v1796, 1.0
      %v1799 = vrcp.pop %v1797
      %v1800 = vmul.f32 1.0, %v1799
      %v1801 = vrcp.pop %v1798
      %v1802 = vmul.f32 1.0, %v1801
      %v1803 = vtanh.pop %v1790
      %v1804 = vmul.f32 %v1800, %v1517
      %1806 = vrot.lane.b32.xlu0 %v1803, 64
      %v1807 = vpop.permute.xlu0 %1806
      %v1809 = vmul.f32 %v1800, %v1807
      %1811 = vrot.lane.b32.xlu0 %v1809, 64
      %v1812 = vpop.permute.xlu0 %1811
      %v1814 = vadd.f32 %v1804, %v1812
      %v1815 = vtanh.pop %v1814
      %1817 = vrot.lane.b32.xlu0 %v1815, 64
      %v1818 = vpop.permute.xlu0 %1817
      %v1820 = vmul.f32 %v1802, %v1818
      %s1821 = sadd.s32 %s83, 4
      %v1822 = vstv %s1821
      %vm1823 = vcmp.eq.s32.totalorder %v268, %v1822
      %v1824 = vsel %vm1823, 1, 0
      %1825 = vset.pattern.permute.xlu0 0
      %1826 = vperm.xlu0 %1825, %v1824
      %v1827 = vpop.permute.xlu0 %1826
      %vm1828 = vcmp.eq.s32.totalorder %v1827, 1
      %v1829 = vsel %vm1828, %v1820, %v1532
      %s1830 = smul.u32 5, 2
      %s1831 = smul.addr %s1830, 8
      %s1832 = scalar_lea.vmem [#allocation6], %s1831
      %v1833 = vld [vmem:[%s1832] sm:$0xff]
      %v1834 = vld [vmem:[%s1832 + $0x8] sm:$0xff]
      %1835 = vmatprep.subr.mxu0 %v297
      %1836 = vmatpush1.msra.mxu0 %v296
      %1837 = vmatprep.subr.mxu0 %v299
      %1838 = vmatpush1.msra.mxu0 %v298
      %1839 = vmatprep.subr.mxu0 %v301
      %1840 = vmatpush1.msra.mxu0 %v300
      %1841 = vmatprep.subr.mxu0 %v303
      %1842 = vmatpush1.msra.mxu0 %v302
      %1843 = vmatprep.subr.mxu0 %v305
      %1844 = vmatpush1.msra.mxu0 %v304
      %1845 = vmatprep.subr.mxu0 %v307
      %1846 = vmatpush1.msra.mxu0 %v306
      %1847 = vmatprep.subr.mxu0 %v309
      %1848 = vmatpush1.msra.mxu0 %v308
      %1849 = vmatprep.subr.mxu0 %v311
      %1850 = vmatpush1.msra.mxu0 %v310
      %1851 = vmatprep.subr.mxu0 0.0
      %1852 = vmatpush1.msra.mxu0 0.0
      %1853 = vmatprep.subr.mxu0 0.0
      %1854 = vmatpush1.msra.mxu0 0.0
      %1855 = vmatprep.subr.mxu0 0.0
      %1856 = vmatpush1.msra.mxu0 0.0
      %1857 = vmatprep.subr.mxu0 0.0
      %1858 = vmatpush1.msra.mxu0 0.0
      %1859 = vmatprep.subr.mxu0 0.0
      %1860 = vmatpush1.msra.mxu0 0.0
      %1861 = vmatprep.subr.mxu0 0.0
      %1862 = vmatpush1.msra.mxu0 0.0
      %1863 = vmatprep.subr.mxu0 0.0
      %1864 = vmatpush1.msra.mxu0 0.0
      %1865 = vmatprep.subr.mxu0 0.0
      %1866 = vmatpush1.msra.mxu0 0.0
      %1867 = vmatprep.subr.mxu0 0.0
      %1868 = vmatpush1.msra.mxu0 0.0
      %1869 = vmatprep.subr.mxu0 0.0
      %1870 = vmatpush1.msra.mxu0 0.0
      %1871 = vmatprep.subr.mxu0 0.0
      %1872 = vmatpush1.msra.mxu0 0.0
      %1873 = vmatprep.subr.mxu0 0.0
      %1874 = vmatpush1.msra.mxu0 0.0
      %1875 = vmatprep.subr.mxu0 0.0
      %1876 = vmatpush1.msra.mxu0 0.0
      %1877 = vmatprep.subr.mxu0 0.0
      %1878 = vmatpush1.msra.mxu0 0.0
      %1879 = vmatprep.subr.mxu0 0.0
      %1880 = vmatpush1.msra.mxu0 0.0
      %1881 = vmatprep.subr.mxu0 0.0
      %1882 = vmatpush1.msra.mxu0 0.0
      %1883 = vmatprep.subr.mxu0 0.0
      %1884 = vmatpush1.msra.mxu0 0.0
      %1885 = vmatprep.subr.mxu0 0.0
      %1886 = vmatpush1.msra.mxu0 0.0
      %1887 = vmatprep.subr.mxu0 0.0
      %1888 = vmatpush1.msra.mxu0 0.0
      %1889 = vmatprep.subr.mxu0 0.0
      %1890 = vmatpush1.msra.mxu0 0.0
      %1891 = vmatprep.subr.mxu0 0.0
      %1892 = vmatpush1.msra.mxu0 0.0
      %1893 = vmatprep.subr.mxu0 0.0
      %1894 = vmatpush1.msra.mxu0 0.0
      %1895 = vmatprep.subr.mxu0 0.0
      %1896 = vmatpush1.msra.mxu0 0.0
      %1897 = vmatprep.subr.mxu0 0.0
      %1898 = vmatpush1.msra.mxu0 0.0
      %1899 = vmatprep.mubr.f32.mxu0 0.0
      %1900 = vmatmul.mubr.f32.gmra.mrb[0].mxu0 %v1642
      %v1901 = vpop.f32.mrb[0].mxu0
      %v1902 = vadd.f32 0.0, %v1901
      %v1903 = vpop.f32.mrb[0].mxu0
      %v1904 = vadd.f32 0.0, %v1903
      %1905 = vdwg.mxu0
      %v1906 = vadd.f32 %v1833, %v1902
      %v1907 = vadd.f32 %v1834, %v1904
      %v1908 = vxor.u32 %v1906, 2147483648
      %v1909 = vxor.u32 %v1907, 2147483648
      %v1910 = vmul.f32 %v1908, 1.442695
      %v1911 = vpow.pop %v1910
      %v1912 = vmul.f32 %v1909, 1.442695
      %v1913 = vpow.pop %v1912
      %v1914 = vadd.f32 %v1911, 1.0
      %v1915 = vadd.f32 %v1913, 1.0
      %v1916 = vrcp.pop %v1914
      %v1917 = vmul.f32 1.0, %v1916
      %v1918 = vrcp.pop %v1915
      %v1919 = vmul.f32 1.0, %v1918
      %v1920 = vtanh.pop %v1907
      %v1921 = vmul.f32 %v1917, %v1634
      %1923 = vrot.lane.b32.xlu0 %v1920, 64
      %v1924 = vpop.permute.xlu0 %1923
      %v1926 = vmul.f32 %v1917, %v1924
      %1928 = vrot.lane.b32.xlu0 %v1926, 64
      %v1929 = vpop.permute.xlu0 %1928
      %v1931 = vadd.f32 %v1921, %v1929
      %v1932 = vtanh.pop %v1931
      %1934 = vrot.lane.b32.xlu0 %v1932, 64
      %v1935 = vpop.permute.xlu0 %1934
      %v1937 = vmul.f32 %v1919, %v1935
      %v1939 = vsel %vm312, %v1937, 0
      %1941 = vmatprep.subr.mxu0 %v424
      %1942 = vmatpush1.msra.mxu0 %v423
      %1943 = vmatprep.subr.mxu0 %v426
      %1944 = vmatpush1.msra.mxu0 %v425
      %1945 = vmatprep.subr.mxu0 %v428
      %1946 = vmatpush1.msra.mxu0 %v427
      %1947 = vmatprep.subr.mxu0 %v430
      %1948 = vmatpush1.msra.mxu0 %v429
      %1949 = vmatprep.subr.mxu0 %v432
      %1950 = vmatpush1.msra.mxu0 %v431
      %1951 = vmatprep.subr.mxu0 %v434
      %1952 = vmatpush1.msra.mxu0 %v433
      %1953 = vmatprep.subr.mxu0 %v436
      %1954 = vmatpush1.msra.mxu0 %v435
      %1955 = vmatprep.subr.mxu0 %v438
      %1956 = vmatpush1.msra.mxu0 %v437
      %1957 = vmatprep.subr.mxu0 0.0
      %1958 = vmatpush1.msra.mxu0 0.0
      %1959 = vmatprep.subr.mxu0 0.0
      %1960 = vmatpush1.msra.mxu0 0.0
      %1961 = vmatprep.subr.mxu0 0.0
      %1962 = vmatpush1.msra.mxu0 0.0
      %1963 = vmatprep.subr.mxu0 0.0
      %1964 = vmatpush1.msra.mxu0 0.0
      %1965 = vmatprep.subr.mxu0 0.0
      %1966 = vmatpush1.msra.mxu0 0.0
      %1967 = vmatprep.subr.mxu0 0.0
      %1968 = vmatpush1.msra.mxu0 0.0
      %1969 = vmatprep.subr.mxu0 0.0
      %1970 = vmatpush1.msra.mxu0 0.0
      %1971 = vmatprep.subr.mxu0 0.0
      %1972 = vmatpush1.msra.mxu0 0.0
      %1973 = vmatprep.subr.mxu0 0.0
      %1974 = vmatpush1.msra.mxu0 0.0
      %1975 = vmatprep.subr.mxu0 0.0
      %1976 = vmatpush1.msra.mxu0 0.0
      %1977 = vmatprep.subr.mxu0 0.0
      %1978 = vmatpush1.msra.mxu0 0.0
      %1979 = vmatprep.subr.mxu0 0.0
      %1980 = vmatpush1.msra.mxu0 0.0
      %1981 = vmatprep.subr.mxu0 0.0
      %1982 = vmatpush1.msra.mxu0 0.0
      %1983 = vmatprep.subr.mxu0 0.0
      %1984 = vmatpush1.msra.mxu0 0.0
      %1985 = vmatprep.subr.mxu0 0.0
      %1986 = vmatpush1.msra.mxu0 0.0
      %1987 = vmatprep.subr.mxu0 0.0
      %1988 = vmatpush1.msra.mxu0 0.0
      %1989 = vmatprep.subr.mxu0 0.0
      %1990 = vmatpush1.msra.mxu0 0.0
      %1991 = vmatprep.subr.mxu0 0.0
      %1992 = vmatpush1.msra.mxu0 0.0
      %1993 = vmatprep.subr.mxu0 0.0
      %1994 = vmatpush1.msra.mxu0 0.0
      %1995 = vmatprep.subr.mxu0 0.0
      %1996 = vmatpush1.msra.mxu0 0.0
      %1997 = vmatprep.subr.mxu0 0.0
      %1998 = vmatpush1.msra.mxu0 0.0
      %1999 = vmatprep.subr.mxu0 0.0
      %2000 = vmatpush1.msra.mxu0 0.0
      %2001 = vmatprep.subr.mxu0 0.0
      %2002 = vmatpush1.msra.mxu0 0.0
      %2003 = vmatprep.subr.mxu0 0.0
      %2004 = vmatpush1.msra.mxu0 0.0
      %2005 = vmatprep.mubr.f32.mxu0 0.0
      %2006 = vmatmul.mubr.f32.gmra.mrb[0].mxu0 %v1939
      %v2007 = vpop.f32.mrb[0].mxu0
      %v2008 = vadd.f32 0.0, %v2007
      %v2009 = vpop.f32.mrb[0].mxu0
      %v2010 = vadd.f32 0.0, %v2009
      %2011 = vdwg.mxu0
      %v2013 = vsel %vm312, %v1820, 0
      %2015 = vmatprep.subr.mxu0 %v276
      %2016 = vmatpush1.msra.mxu0 %v275
      %2017 = vmatprep.subr.mxu0 %v278
      %2018 = vmatpush1.msra.mxu0 %v277
      %2019 = vmatprep.subr.mxu0 %v280
      %2020 = vmatpush1.msra.mxu0 %v279
      %2021 = vmatprep.subr.mxu0 %v282
      %2022 = vmatpush1.msra.mxu0 %v281
      %2023 = vmatprep.subr.mxu0 %v284
      %2024 = vmatpush1.msra.mxu0 %v283
      %2025 = vmatprep.subr.mxu0 %v286
      %2026 = vmatpush1.msra.mxu0 %v285
      %2027 = vmatprep.subr.mxu0 %v288
      %2028 = vmatpush1.msra.mxu0 %v287
      %2029 = vmatprep.subr.mxu0 %v290
      %2030 = vmatpush1.msra.mxu0 %v289
      %2031 = vmatprep.subr.mxu0 0.0
      %2032 = vmatpush1.msra.mxu0 0.0
      %2033 = vmatprep.subr.mxu0 0.0
      %2034 = vmatpush1.msra.mxu0 0.0
      %2035 = vmatprep.subr.mxu0 0.0
      %2036 = vmatpush1.msra.mxu0 0.0
      %2037 = vmatprep.subr.mxu0 0.0
      %2038 = vmatpush1.msra.mxu0 0.0
      %2039 = vmatprep.subr.mxu0 0.0
      %2040 = vmatpush1.msra.mxu0 0.0
      %2041 = vmatprep.subr.mxu0 0.0
      %2042 = vmatpush1.msra.mxu0 0.0
      %2043 = vmatprep.subr.mxu0 0.0
      %2044 = vmatpush1.msra.mxu0 0.0
      %2045 = vmatprep.subr.mxu0 0.0
      %2046 = vmatpush1.msra.mxu0 0.0
      %2047 = vmatprep.subr.mxu0 0.0
      %2048 = vmatpush1.msra.mxu0 0.0
      %2049 = vmatprep.subr.mxu0 0.0
      %2050 = vmatpush1.msra.mxu0 0.0
      %2051 = vmatprep.subr.mxu0 0.0
      %2052 = vmatpush1.msra.mxu0 0.0
      %2053 = vmatprep.subr.mxu0 0.0
      %2054 = vmatpush1.msra.mxu0 0.0
      %2055 = vmatprep.subr.mxu0 0.0
      %2056 = vmatpush1.msra.mxu0 0.0
      %2057 = vmatprep.subr.mxu0 0.0
      %2058 = vmatpush1.msra.mxu0 0.0
      %2059 = vmatprep.subr.mxu0 0.0
      %2060 = vmatpush1.msra.mxu0 0.0
      %2061 = vmatprep.subr.mxu0 0.0
      %2062 = vmatpush1.msra.mxu0 0.0
      %2063 = vmatprep.subr.mxu0 0.0
      %2064 = vmatpush1.msra.mxu0 0.0
      %2065 = vmatprep.subr.mxu0 0.0
      %2066 = vmatpush1.msra.mxu0 0.0
      %2067 = vmatprep.subr.mxu0 0.0
      %2068 = vmatpush1.msra.mxu0 0.0
      %2069 = vmatprep.subr.mxu0 0.0
      %2070 = vmatpush1.msra.mxu0 0.0
      %2071 = vmatprep.subr.mxu0 0.0
      %2072 = vmatpush1.msra.mxu0 0.0
      %2073 = vmatprep.subr.mxu0 0.0
      %2074 = vmatpush1.msra.mxu0 0.0
      %2075 = vmatprep.subr.mxu0 0.0
      %2076 = vmatpush1.msra.mxu0 0.0
      %2077 = vmatprep.subr.mxu0 0.0
      %2078 = vmatpush1.msra.mxu0 0.0
      %2079 = vmatprep.mubr.f32.mxu0 0.0
      %2080 = vmatmul.mubr.f32.gmra.mrb[0].mxu0 %v2013
      %v2081 = vpop.f32.mrb[0].mxu0
      %v2082 = vadd.f32 %v2008, %v2081
      %v2083 = vpop.f32.mrb[0].mxu0
      %v2084 = vadd.f32 %v2010, %v2083
      %2085 = vdwg.mxu0
      %v2086 = vadd.f32 %v2082, %v591
      %v2087 = vadd.f32 %v2084, %v595
      %v2088 = vxor.u32 %v2086, 2147483648
      %v2089 = vxor.u32 %v2087, 2147483648
      %v2090 = vmul.f32 %v2088, 1.442695
      %v2091 = vpow.pop %v2090
      %v2092 = vmul.f32 %v2089, 1.442695
      %v2093 = vpow.pop %v2092
      %v2094 = vadd.f32 %v2091, 1.0
      %v2095 = vadd.f32 %v2093, 1.0
      %v2096 = vrcp.pop %v2094
      %v2097 = vmul.f32 1.0, %v2096
      %v2098 = vrcp.pop %v2095
      %v2099 = vmul.f32 1.0, %v2098
      %v2100 = vtanh.pop %v2087
      %v2101 = vmul.f32 %v2097, %v1814
      %2103 = vrot.lane.b32.xlu0 %v2100, 64
      %v2104 = vpop.permute.xlu0 %2103
      %v2106 = vmul.f32 %v2097, %v2104
      %2108 = vrot.lane.b32.xlu0 %v2106, 64
      %v2109 = vpop.permute.xlu0 %2108
      %v2111 = vadd.f32 %v2101, %v2109
      %v2112 = vtanh.pop %v2111
      %2114 = vrot.lane.b32.xlu0 %v2112, 64
      %v2115 = vpop.permute.xlu0 %2114
      %v2117 = vmul.f32 %v2099, %v2115
      %s2118 = sadd.s32 %s83, 5
      %v2119 = vstv %s2118
      %vm2120 = vcmp.eq.s32.totalorder %v268, %v2119
      %v2121 = vsel %vm2120, 1, 0
      %2122 = vset.pattern.permute.xlu0 0
      %2123 = vperm.xlu0 %2122, %v2121
      %v2124 = vpop.permute.xlu0 %2123
      %vm2125 = vcmp.eq.s32.totalorder %v2124, 1
      %v2126 = vsel %vm2125, %v2117, %v1829
      %s2127 = smul.u32 6, 2
      %s2128 = smul.addr %s2127, 8
      %s2129 = scalar_lea.vmem [#allocation6], %s2128
      %v2130 = vld [vmem:[%s2129] sm:$0xff]
      %v2131 = vld [vmem:[%s2129 + $0x8] sm:$0xff]
      %2132 = vmatprep.subr.mxu0 %v297
      %2133 = vmatpush1.msra.mxu0 %v296
      %2134 = vmatprep.subr.mxu0 %v299
      %2135 = vmatpush1.msra.mxu0 %v298
      %2136 = vmatprep.subr.mxu0 %v301
      %2137 = vmatpush1.msra.mxu0 %v300
      %2138 = vmatprep.subr.mxu0 %v303
      %2139 = vmatpush1.msra.mxu0 %v302
      %2140 = vmatprep.subr.mxu0 %v305
      %2141 = vmatpush1.msra.mxu0 %v304
      %2142 = vmatprep.subr.mxu0 %v307
      %2143 = vmatpush1.msra.mxu0 %v306
      %2144 = vmatprep.subr.mxu0 %v309
      %2145 = vmatpush1.msra.mxu0 %v308
      %2146 = vmatprep.subr.mxu0 %v311
      %2147 = vmatpush1.msra.mxu0 %v310
      %2148 = vmatprep.subr.mxu0 0.0
      %2149 = vmatpush1.msra.mxu0 0.0
      %2150 = vmatprep.subr.mxu0 0.0
      %2151 = vmatpush1.msra.mxu0 0.0
      %2152 = vmatprep.subr.mxu0 0.0
      %2153 = vmatpush1.msra.mxu0 0.0
      %2154 = vmatprep.subr.mxu0 0.0
      %2155 = vmatpush1.msra.mxu0 0.0
      %2156 = vmatprep.subr.mxu0 0.0
      %2157 = vmatpush1.msra.mxu0 0.0
      %2158 = vmatprep.subr.mxu0 0.0
      %2159 = vmatpush1.msra.mxu0 0.0
      %2160 = vmatprep.subr.mxu0 0.0
      %2161 = vmatpush1.msra.mxu0 0.0
      %2162 = vmatprep.subr.mxu0 0.0
      %2163 = vmatpush1.msra.mxu0 0.0
      %2164 = vmatprep.subr.mxu0 0.0
      %2165 = vmatpush1.msra.mxu0 0.0
      %2166 = vmatprep.subr.mxu0 0.0
      %2167 = vmatpush1.msra.mxu0 0.0
      %2168 = vmatprep.subr.mxu0 0.0
      %2169 = vmatpush1.msra.mxu0 0.0
      %2170 = vmatprep.subr.mxu0 0.0
      %2171 = vmatpush1.msra.mxu0 0.0
      %2172 = vmatprep.subr.mxu0 0.0
      %2173 = vmatpush1.msra.mxu0 0.0
      %2174 = vmatprep.subr.mxu0 0.0
      %2175 = vmatpush1.msra.mxu0 0.0
      %2176 = vmatprep.subr.mxu0 0.0
      %2177 = vmatpush1.msra.mxu0 0.0
      %2178 = vmatprep.subr.mxu0 0.0
      %2179 = vmatpush1.msra.mxu0 0.0
      %2180 = vmatprep.subr.mxu0 0.0
      %2181 = vmatpush1.msra.mxu0 0.0
      %2182 = vmatprep.subr.mxu0 0.0
      %2183 = vmatpush1.msra.mxu0 0.0
      %2184 = vmatprep.subr.mxu0 0.0
      %2185 = vmatpush1.msra.mxu0 0.0
      %2186 = vmatprep.subr.mxu0 0.0
      %2187 = vmatpush1.msra.mxu0 0.0
      %2188 = vmatprep.subr.mxu0 0.0
      %2189 = vmatpush1.msra.mxu0 0.0
      %2190 = vmatprep.subr.mxu0 0.0
      %2191 = vmatpush1.msra.mxu0 0.0
      %2192 = vmatprep.subr.mxu0 0.0
      %2193 = vmatpush1.msra.mxu0 0.0
      %2194 = vmatprep.subr.mxu0 0.0
      %2195 = vmatpush1.msra.mxu0 0.0
      %2196 = vmatprep.mubr.f32.mxu0 0.0
      %2197 = vmatmul.mubr.f32.gmra.mrb[0].mxu0 %v1939
      %v2198 = vpop.f32.mrb[0].mxu0
      %v2199 = vadd.f32 0.0, %v2198
      %v2200 = vpop.f32.mrb[0].mxu0
      %v2201 = vadd.f32 0.0, %v2200
      %2202 = vdwg.mxu0
      %v2203 = vadd.f32 %v2130, %v2199
      %v2204 = vadd.f32 %v2131, %v2201
      %v2205 = vxor.u32 %v2203, 2147483648
      %v2206 = vxor.u32 %v2204, 2147483648
      %v2207 = vmul.f32 %v2205, 1.442695
      %v2208 = vpow.pop %v2207
      %v2209 = vmul.f32 %v2206, 1.442695
      %v2210 = vpow.pop %v2209
      %v2211 = vadd.f32 %v2208, 1.0
      %v2212 = vadd.f32 %v2210, 1.0
      %v2213 = vrcp.pop %v2211
      %v2214 = vmul.f32 1.0, %v2213
      %v2215 = vrcp.pop %v2212
      %v2216 = vmul.f32 1.0, %v2215
      %v2217 = vtanh.pop %v2204
      %v2218 = vmul.f32 %v2214, %v1931
      %2220 = vrot.lane.b32.xlu0 %v2217, 64
      %v2221 = vpop.permute.xlu0 %2220
      %v2223 = vmul.f32 %v2214, %v2221
      %2225 = vrot.lane.b32.xlu0 %v2223, 64
      %v2226 = vpop.permute.xlu0 %2225
      %v2228 = vadd.f32 %v2218, %v2226
      %v2229 = vtanh.pop %v2228
      %2231 = vrot.lane.b32.xlu0 %v2229, 64
      %v2232 = vpop.permute.xlu0 %2231
      %v2234 = vmul.f32 %v2216, %v2232
      %v2236 = vsel %vm312, %v2234, 0
      %2238 = vmatprep.subr.mxu0 %v424
      %2239 = vmatpush1.msra.mxu0 %v423
      %2240 = vmatprep.subr.mxu0 %v426
      %2241 = vmatpush1.msra.mxu0 %v425
      %2242 = vmatprep.subr.mxu0 %v428
      %2243 = vmatpush1.msra.mxu0 %v427
      %2244 = vmatprep.subr.mxu0 %v430
      %2245 = vmatpush1.msra.mxu0 %v429
      %2246 = vmatprep.subr.mxu0 %v432
      %2247 = vmatpush1.msra.mxu0 %v431
      %2248 = vmatprep.subr.mxu0 %v434
      %2249 = vmatpush1.msra.mxu0 %v433
      %2250 = vmatprep.subr.mxu0 %v436
      %2251 = vmatpush1.msra.mxu0 %v435
      %2252 = vmatprep.subr.mxu0 %v438
      %2253 = vmatpush1.msra.mxu0 %v437
      %2254 = vmatprep.subr.mxu0 0.0
      %2255 = vmatpush1.msra.mxu0 0.0
      %2256 = vmatprep.subr.mxu0 0.0
      %2257 = vmatpush1.msra.mxu0 0.0
      %2258 = vmatprep.subr.mxu0 0.0
      %2259 = vmatpush1.msra.mxu0 0.0
      %2260 = vmatprep.subr.mxu0 0.0
      %2261 = vmatpush1.msra.mxu0 0.0
      %2262 = vmatprep.subr.mxu0 0.0
      %2263 = vmatpush1.msra.mxu0 0.0
      %2264 = vmatprep.subr.mxu0 0.0
      %2265 = vmatpush1.msra.mxu0 0.0
      %2266 = vmatprep.subr.mxu0 0.0
      %2267 = vmatpush1.msra.mxu0 0.0
      %2268 = vmatprep.subr.mxu0 0.0
      %2269 = vmatpush1.msra.mxu0 0.0
      %2270 = vmatprep.subr.mxu0 0.0
      %2271 = vmatpush1.msra.mxu0 0.0
      %2272 = vmatprep.subr.mxu0 0.0
      %2273 = vmatpush1.msra.mxu0 0.0
      %2274 = vmatprep.subr.mxu0 0.0
      %2275 = vmatpush1.msra.mxu0 0.0
      %2276 = vmatprep.subr.mxu0 0.0
      %2277 = vmatpush1.msra.mxu0 0.0
      %2278 = vmatprep.subr.mxu0 0.0
      %2279 = vmatpush1.msra.mxu0 0.0
      %2280 = vmatprep.subr.mxu0 0.0
      %2281 = vmatpush1.msra.mxu0 0.0
      %2282 = vmatprep.subr.mxu0 0.0
      %2283 = vmatpush1.msra.mxu0 0.0
      %2284 = vmatprep.subr.mxu0 0.0
      %2285 = vmatpush1.msra.mxu0 0.0
      %2286 = vmatprep.subr.mxu0 0.0
      %2287 = vmatpush1.msra.mxu0 0.0
      %2288 = vmatprep.subr.mxu0 0.0
      %2289 = vmatpush1.msra.mxu0 0.0
      %2290 = vmatprep.subr.mxu0 0.0
      %2291 = vmatpush1.msra.mxu0 0.0
      %2292 = vmatprep.subr.mxu0 0.0
      %2293 = vmatpush1.msra.mxu0 0.0
      %2294 = vmatprep.subr.mxu0 0.0
      %2295 = vmatpush1.msra.mxu0 0.0
      %2296 = vmatprep.subr.mxu0 0.0
      %2297 = vmatpush1.msra.mxu0 0.0
      %2298 = vmatprep.subr.mxu0 0.0
      %2299 = vmatpush1.msra.mxu0 0.0
      %2300 = vmatprep.subr.mxu0 0.0
      %2301 = vmatpush1.msra.mxu0 0.0
      %2302 = vmatprep.mubr.f32.mxu0 0.0
      %2303 = vmatmul.mubr.f32.gmra.mrb[0].mxu0 %v2236
      %v2304 = vpop.f32.mrb[0].mxu0
      %v2305 = vadd.f32 0.0, %v2304
      %v2306 = vpop.f32.mrb[0].mxu0
      %v2307 = vadd.f32 0.0, %v2306
      %2308 = vdwg.mxu0
      %v2310 = vsel %vm312, %v2117, 0
      %2312 = vmatprep.subr.mxu0 %v276
      %2313 = vmatpush1.msra.mxu0 %v275
      %2314 = vmatprep.subr.mxu0 %v278
      %2315 = vmatpush1.msra.mxu0 %v277
      %2316 = vmatprep.subr.mxu0 %v280
      %2317 = vmatpush1.msra.mxu0 %v279
      %2318 = vmatprep.subr.mxu0 %v282
      %2319 = vmatpush1.msra.mxu0 %v281
      %2320 = vmatprep.subr.mxu0 %v284
      %2321 = vmatpush1.msra.mxu0 %v283
      %2322 = vmatprep.subr.mxu0 %v286
      %2323 = vmatpush1.msra.mxu0 %v285
      %2324 = vmatprep.subr.mxu0 %v288
      %2325 = vmatpush1.msra.mxu0 %v287
      %2326 = vmatprep.subr.mxu0 %v290
      %2327 = vmatpush1.msra.mxu0 %v289
      %2328 = vmatprep.subr.mxu0 0.0
      %2329 = vmatpush1.msra.mxu0 0.0
      %2330 = vmatprep.subr.mxu0 0.0
      %2331 = vmatpush1.msra.mxu0 0.0
      %2332 = vmatprep.subr.mxu0 0.0
      %2333 = vmatpush1.msra.mxu0 0.0
      %2334 = vmatprep.subr.mxu0 0.0
      %2335 = vmatpush1.msra.mxu0 0.0
      %2336 = vmatprep.subr.mxu0 0.0
      %2337 = vmatpush1.msra.mxu0 0.0
      %2338 = vmatprep.subr.mxu0 0.0
      %2339 = vmatpush1.msra.mxu0 0.0
      %2340 = vmatprep.subr.mxu0 0.0
      %2341 = vmatpush1.msra.mxu0 0.0
      %2342 = vmatprep.subr.mxu0 0.0
      %2343 = vmatpush1.msra.mxu0 0.0
      %2344 = vmatprep.subr.mxu0 0.0
      %2345 = vmatpush1.msra.mxu0 0.0
      %2346 = vmatprep.subr.mxu0 0.0
      %2347 = vmatpush1.msra.mxu0 0.0
      %2348 = vmatprep.subr.mxu0 0.0
      %2349 = vmatpush1.msra.mxu0 0.0
      %2350 = vmatprep.subr.mxu0 0.0
      %2351 = vmatpush1.msra.mxu0 0.0
      %2352 = vmatprep.subr.mxu0 0.0
      %2353 = vmatpush1.msra.mxu0 0.0
      %2354 = vmatprep.subr.mxu0 0.0
      %2355 = vmatpush1.msra.mxu0 0.0
      %2356 = vmatprep.subr.mxu0 0.0
      %2357 = vmatpush1.msra.mxu0 0.0
      %2358 = vmatprep.subr.mxu0 0.0
      %2359 = vmatpush1.msra.mxu0 0.0
      %2360 = vmatprep.subr.mxu0 0.0
      %2361 = vmatpush1.msra.mxu0 0.0
      %2362 = vmatprep.subr.mxu0 0.0
      %2363 = vmatpush1.msra.mxu0 0.0
      %2364 = vmatprep.subr.mxu0 0.0
      %2365 = vmatpush1.msra.mxu0 0.0
      %2366 = vmatprep.subr.mxu0 0.0
      %2367 = vmatpush1.msra.mxu0 0.0
      %2368 = vmatprep.subr.mxu0 0.0
      %2369 = vmatpush1.msra.mxu0 0.0
      %2370 = vmatprep.subr.mxu0 0.0
      %2371 = vmatpush1.msra.mxu0 0.0
      %2372 = vmatprep.subr.mxu0 0.0
      %2373 = vmatpush1.msra.mxu0 0.0
      %2374 = vmatprep.subr.mxu0 0.0
      %2375 = vmatpush1.msra.mxu0 0.0
      %2376 = vmatprep.mubr.f32.mxu0 0.0
      %2377 = vmatmul.mubr.f32.gmra.mrb[0].mxu0 %v2310
      %v2378 = vpop.f32.mrb[0].mxu0
      %v2379 = vadd.f32 %v2305, %v2378
      %v2380 = vpop.f32.mrb[0].mxu0
      %v2381 = vadd.f32 %v2307, %v2380
      %2382 = vdwg.mxu0
      %v2383 = vadd.f32 %v2379, %v591
      %v2384 = vadd.f32 %v2381, %v595
      %v2385 = vxor.u32 %v2383, 2147483648
      %v2386 = vxor.u32 %v2384, 2147483648
      %v2387 = vmul.f32 %v2385, 1.442695
      %v2388 = vpow.pop %v2387
      %v2389 = vmul.f32 %v2386, 1.442695
      %v2390 = vpow.pop %v2389
      %v2391 = vadd.f32 %v2388, 1.0
      %v2392 = vadd.f32 %v2390, 1.0
      %v2393 = vrcp.pop %v2391
      %v2394 = vmul.f32 1.0, %v2393
      %v2395 = vrcp.pop %v2392
      %v2396 = vmul.f32 1.0, %v2395
      %v2397 = vtanh.pop %v2384
      %v2398 = vmul.f32 %v2394, %v2111
      %2400 = vrot.lane.b32.xlu0 %v2397, 64
      %v2401 = vpop.permute.xlu0 %2400
      %v2403 = vmul.f32 %v2394, %v2401
      %2405 = vrot.lane.b32.xlu0 %v2403, 64
      %v2406 = vpop.permute.xlu0 %2405
      %v2408 = vadd.f32 %v2398, %v2406
      %v2409 = vtanh.pop %v2408
      %2411 = vrot.lane.b32.xlu0 %v2409, 64
      %v2412 = vpop.permute.xlu0 %2411
      %v2414 = vmul.f32 %v2396, %v2412
      %s2415 = sadd.s32 %s83, 6
      %v2416 = vstv %s2415
      %vm2417 = vcmp.eq.s32.totalorder %v268, %v2416
      %v2418 = vsel %vm2417, 1, 0
      %2419 = vset.pattern.permute.xlu0 0
      %2420 = vperm.xlu0 %2419, %v2418
      %v2421 = vpop.permute.xlu0 %2420
      %vm2422 = vcmp.eq.s32.totalorder %v2421, 1
      %v2423 = vsel %vm2422, %v2414, %v2126
      %s2424 = smul.u32 7, 2
      %s2425 = smul.addr %s2424, 8
      %s2426 = scalar_lea.vmem [#allocation6], %s2425
      %v2427 = vld [vmem:[%s2426] sm:$0xff]
      %v2428 = vld [vmem:[%s2426 + $0x8] sm:$0xff]
      %2429 = vmatprep.subr.mxu0 %v297
      %2430 = vmatpush1.msra.mxu0 %v296
      %2431 = vmatprep.subr.mxu0 %v299
      %2432 = vmatpush1.msra.mxu0 %v298
      %2433 = vmatprep.subr.mxu0 %v301
      %2434 = vmatpush1.msra.mxu0 %v300
      %2435 = vmatprep.subr.mxu0 %v303
      %2436 = vmatpush1.msra.mxu0 %v302
      %2437 = vmatprep.subr.mxu0 %v305
      %2438 = vmatpush1.msra.mxu0 %v304
      %2439 = vmatprep.subr.mxu0 %v307
      %2440 = vmatpush1.msra.mxu0 %v306
      %2441 = vmatprep.subr.mxu0 %v309
      %2442 = vmatpush1.msra.mxu0 %v308
      %2443 = vmatprep.subr.mxu0 %v311
      %2444 = vmatpush1.msra.mxu0 %v310
      %2445 = vmatprep.subr.mxu0 0.0
      %2446 = vmatpush1.msra.mxu0 0.0
      %2447 = vmatprep.subr.mxu0 0.0
      %2448 = vmatpush1.msra.mxu0 0.0
      %2449 = vmatprep.subr.mxu0 0.0
      %2450 = vmatpush1.msra.mxu0 0.0
      %2451 = vmatprep.subr.mxu0 0.0
      %2452 = vmatpush1.msra.mxu0 0.0
      %2453 = vmatprep.subr.mxu0 0.0
      %2454 = vmatpush1.msra.mxu0 0.0
      %2455 = vmatprep.subr.mxu0 0.0
      %2456 = vmatpush1.msra.mxu0 0.0
      %2457 = vmatprep.subr.mxu0 0.0
      %2458 = vmatpush1.msra.mxu0 0.0
      %2459 = vmatprep.subr.mxu0 0.0
      %2460 = vmatpush1.msra.mxu0 0.0
      %2461 = vmatprep.subr.mxu0 0.0
      %2462 = vmatpush1.msra.mxu0 0.0
      %2463 = vmatprep.subr.mxu0 0.0
      %2464 = vmatpush1.msra.mxu0 0.0
      %2465 = vmatprep.subr.mxu0 0.0
      %2466 = vmatpush1.msra.mxu0 0.0
      %2467 = vmatprep.subr.mxu0 0.0
      %2468 = vmatpush1.msra.mxu0 0.0
      %2469 = vmatprep.subr.mxu0 0.0
      %2470 = vmatpush1.msra.mxu0 0.0
      %2471 = vmatprep.subr.mxu0 0.0
      %2472 = vmatpush1.msra.mxu0 0.0
      %2473 = vmatprep.subr.mxu0 0.0
      %2474 = vmatpush1.msra.mxu0 0.0
      %2475 = vmatprep.subr.mxu0 0.0
      %2476 = vmatpush1.msra.mxu0 0.0
      %2477 = vmatprep.subr.mxu0 0.0
      %2478 = vmatpush1.msra.mxu0 0.0
      %2479 = vmatprep.subr.mxu0 0.0
      %2480 = vmatpush1.msra.mxu0 0.0
      %2481 = vmatprep.subr.mxu0 0.0
      %2482 = vmatpush1.msra.mxu0 0.0
      %2483 = vmatprep.subr.mxu0 0.0
      %2484 = vmatpush1.msra.mxu0 0.0
      %2485 = vmatprep.subr.mxu0 0.0
      %2486 = vmatpush1.msra.mxu0 0.0
      %2487 = vmatprep.subr.mxu0 0.0
      %2488 = vmatpush1.msra.mxu0 0.0
      %2489 = vmatprep.subr.mxu0 0.0
      %2490 = vmatpush1.msra.mxu0 0.0
      %2491 = vmatprep.subr.mxu0 0.0
      %2492 = vmatpush1.msra.mxu0 0.0
      %2493 = vmatprep.mubr.f32.mxu0 0.0
      %2494 = vmatmul.mubr.f32.gmra.mrb[0].mxu0 %v2236
      %v2495 = vpop.f32.mrb[0].mxu0
      %v2496 = vadd.f32 0.0, %v2495
      %v2497 = vpop.f32.mrb[0].mxu0
      %v2498 = vadd.f32 0.0, %v2497
      %2499 = vdwg.mxu0
      %v2500 = vadd.f32 %v2427, %v2496
      %v2501 = vadd.f32 %v2428, %v2498
      %v2502 = vxor.u32 %v2500, 2147483648
      %v2503 = vxor.u32 %v2501, 2147483648
      %v2504 = vmul.f32 %v2502, 1.442695
      %v2505 = vpow.pop %v2504
      %v2506 = vmul.f32 %v2503, 1.442695
      %v2507 = vpow.pop %v2506
      %v2508 = vadd.f32 %v2505, 1.0
      %v2509 = vadd.f32 %v2507, 1.0
      %v2510 = vrcp.pop %v2508
      %v2511 = vmul.f32 1.0, %v2510
      %v2512 = vrcp.pop %v2509
      %v2513 = vmul.f32 1.0, %v2512
      %v2514 = vtanh.pop %v2501
      %v2515 = vmul.f32 %v2511, %v2228
      %2517 = vrot.lane.b32.xlu0 %v2514, 64
      %v2518 = vpop.permute.xlu0 %2517
      %v2520 = vmul.f32 %v2511, %v2518
      %2522 = vrot.lane.b32.xlu0 %v2520, 64
      %v2523 = vpop.permute.xlu0 %2522
      %v2525 = vadd.f32 %v2515, %v2523
      %v2526 = vtanh.pop %v2525
      %2528 = vrot.lane.b32.xlu0 %v2526, 64
      %v2529 = vpop.permute.xlu0 %2528
      %v2531 = vmul.f32 %v2513, %v2529
      %v2533 = vsel %vm312, %v2531, 0
      %2535 = vmatprep.subr.mxu0 %v424
      %2536 = vmatpush1.msra.mxu0 %v423
      %2537 = vmatprep.subr.mxu0 %v426
      %2538 = vmatpush1.msra.mxu0 %v425
      %2539 = vmatprep.subr.mxu0 %v428
      %2540 = vmatpush1.msra.mxu0 %v427
      %2541 = vmatprep.subr.mxu0 %v430
      %2542 = vmatpush1.msra.mxu0 %v429
      %2543 = vmatprep.subr.mxu0 %v432
      %2544 = vmatpush1.msra.mxu0 %v431
      %2545 = vmatprep.subr.mxu0 %v434
      %2546 = vmatpush1.msra.mxu0 %v433
      %2547 = vmatprep.subr.mxu0 %v436
      %2548 = vmatpush1.msra.mxu0 %v435
      %2549 = vmatprep.subr.mxu0 %v438
      %2550 = vmatpush1.msra.mxu0 %v437
      %2551 = vmatprep.subr.mxu0 0.0
      %2552 = vmatpush1.msra.mxu0 0.0
      %2553 = vmatprep.subr.mxu0 0.0
      %2554 = vmatpush1.msra.mxu0 0.0
      %2555 = vmatprep.subr.mxu0 0.0
      %2556 = vmatpush1.msra.mxu0 0.0
      %2557 = vmatprep.subr.mxu0 0.0
      %2558 = vmatpush1.msra.mxu0 0.0
      %2559 = vmatprep.subr.mxu0 0.0
      %2560 = vmatpush1.msra.mxu0 0.0
      %2561 = vmatprep.subr.mxu0 0.0
      %2562 = vmatpush1.msra.mxu0 0.0
      %2563 = vmatprep.subr.mxu0 0.0
      %2564 = vmatpush1.msra.mxu0 0.0
      %2565 = vmatprep.subr.mxu0 0.0
      %2566 = vmatpush1.msra.mxu0 0.0
      %2567 = vmatprep.subr.mxu0 0.0
      %2568 = vmatpush1.msra.mxu0 0.0
      %2569 = vmatprep.subr.mxu0 0.0
      %2570 = vmatpush1.msra.mxu0 0.0
      %2571 = vmatprep.subr.mxu0 0.0
      %2572 = vmatpush1.msra.mxu0 0.0
      %2573 = vmatprep.subr.mxu0 0.0
      %2574 = vmatpush1.msra.mxu0 0.0
      %2575 = vmatprep.subr.mxu0 0.0
      %2576 = vmatpush1.msra.mxu0 0.0
      %2577 = vmatprep.subr.mxu0 0.0
      %2578 = vmatpush1.msra.mxu0 0.0
      %2579 = vmatprep.subr.mxu0 0.0
      %2580 = vmatpush1.msra.mxu0 0.0
      %2581 = vmatprep.subr.mxu0 0.0
      %2582 = vmatpush1.msra.mxu0 0.0
      %2583 = vmatprep.subr.mxu0 0.0
      %2584 = vmatpush1.msra.mxu0 0.0
      %2585 = vmatprep.subr.mxu0 0.0
      %2586 = vmatpush1.msra.mxu0 0.0
      %2587 = vmatprep.subr.mxu0 0.0
      %2588 = vmatpush1.msra.mxu0 0.0
      %2589 = vmatprep.subr.mxu0 0.0
      %2590 = vmatpush1.msra.mxu0 0.0
      %2591 = vmatprep.subr.mxu0 0.0
      %2592 = vmatpush1.msra.mxu0 0.0
      %2593 = vmatprep.subr.mxu0 0.0
      %2594 = vmatpush1.msra.mxu0 0.0
      %2595 = vmatprep.subr.mxu0 0.0
      %2596 = vmatpush1.msra.mxu0 0.0
      %2597 = vmatprep.subr.mxu0 0.0
      %2598 = vmatpush1.msra.mxu0 0.0
      %2599 = vmatprep.mubr.f32.mxu0 0.0
      %2600 = vmatmul.mubr.f32.gmra.mrb[0].mxu0 %v2533
      %v2601 = vpop.f32.mrb[0].mxu0
      %v2602 = vadd.f32 0.0, %v2601
      %v2603 = vpop.f32.mrb[0].mxu0
      %v2604 = vadd.f32 0.0, %v2603
      %2605 = vdwg.mxu0
      %v2607 = vsel %vm312, %v2414, 0
      %2609 = vmatprep.subr.mxu0 %v276
      %2610 = vmatpush1.msra.mxu0 %v275
      %2611 = vmatprep.subr.mxu0 %v278
      %2612 = vmatpush1.msra.mxu0 %v277
      %2613 = vmatprep.subr.mxu0 %v280
      %2614 = vmatpush1.msra.mxu0 %v279
      %2615 = vmatprep.subr.mxu0 %v282
      %2616 = vmatpush1.msra.mxu0 %v281
      %2617 = vmatprep.subr.mxu0 %v284
      %2618 = vmatpush1.msra.mxu0 %v283
      %2619 = vmatprep.subr.mxu0 %v286
      %2620 = vmatpush1.msra.mxu0 %v285
      %2621 = vmatprep.subr.mxu0 %v288
      %2622 = vmatpush1.msra.mxu0 %v287
      %2623 = vmatprep.subr.mxu0 %v290
      %2624 = vmatpush1.msra.mxu0 %v289
      %2625 = vmatprep.subr.mxu0 0.0
      %2626 = vmatpush1.msra.mxu0 0.0
      %2627 = vmatprep.subr.mxu0 0.0
      %2628 = vmatpush1.msra.mxu0 0.0
      %2629 = vmatprep.subr.mxu0 0.0
      %2630 = vmatpush1.msra.mxu0 0.0
      %2631 = vmatprep.subr.mxu0 0.0
      %2632 = vmatpush1.msra.mxu0 0.0
      %2633 = vmatprep.subr.mxu0 0.0
      %2634 = vmatpush1.msra.mxu0 0.0
      %2635 = vmatprep.subr.mxu0 0.0
      %2636 = vmatpush1.msra.mxu0 0.0
      %2637 = vmatprep.subr.mxu0 0.0
      %2638 = vmatpush1.msra.mxu0 0.0
      %2639 = vmatprep.subr.mxu0 0.0
      %2640 = vmatpush1.msra.mxu0 0.0
      %2641 = vmatprep.subr.mxu0 0.0
      %2642 = vmatpush1.msra.mxu0 0.0
      %2643 = vmatprep.subr.mxu0 0.0
      %2644 = vmatpush1.msra.mxu0 0.0
      %2645 = vmatprep.subr.mxu0 0.0
      %2646 = vmatpush1.msra.mxu0 0.0
      %2647 = vmatprep.subr.mxu0 0.0
      %2648 = vmatpush1.msra.mxu0 0.0
      %2649 = vmatprep.subr.mxu0 0.0
      %2650 = vmatpush1.msra.mxu0 0.0
      %2651 = vmatprep.subr.mxu0 0.0
      %2652 = vmatpush1.msra.mxu0 0.0
      %2653 = vmatprep.subr.mxu0 0.0
      %2654 = vmatpush1.msra.mxu0 0.0
      %2655 = vmatprep.subr.mxu0 0.0
      %2656 = vmatpush1.msra.mxu0 0.0
      %2657 = vmatprep.subr.mxu0 0.0
      %2658 = vmatpush1.msra.mxu0 0.0
      %2659 = vmatprep.subr.mxu0 0.0
      %2660 = vmatpush1.msra.mxu0 0.0
      %2661 = vmatprep.subr.mxu0 0.0
      %2662 = vmatpush1.msra.mxu0 0.0
      %2663 = vmatprep.subr.mxu0 0.0
      %2664 = vmatpush1.msra.mxu0 0.0
      %2665 = vmatprep.subr.mxu0 0.0
      %2666 = vmatpush1.msra.mxu0 0.0
      %2667 = vmatprep.subr.mxu0 0.0
      %2668 = vmatpush1.msra.mxu0 0.0
      %2669 = vmatprep.subr.mxu0 0.0
      %2670 = vmatpush1.msra.mxu0 0.0
      %2671 = vmatprep.subr.mxu0 0.0
      %2672 = vmatpush1.msra.mxu0 0.0
      %2673 = vmatprep.mubr.f32.mxu0 0.0
      %2674 = vmatmul.mubr.f32.gmra.mrb[0].mxu0 %v2607
      %v2675 = vpop.f32.mrb[0].mxu0
      %v2676 = vadd.f32 %v2602, %v2675
      %v2677 = vpop.f32.mrb[0].mxu0
      %v2678 = vadd.f32 %v2604, %v2677
      %2679 = vdwg.mxu0
      %v2680 = vadd.f32 %v2676, %v591
      %v2681 = vadd.f32 %v2678, %v595
      %v2682 = vxor.u32 %v2680, 2147483648
      %v2683 = vxor.u32 %v2681, 2147483648
      %v2684 = vmul.f32 %v2682, 1.442695
      %v2685 = vpow.pop %v2684
      %v2686 = vmul.f32 %v2683, 1.442695
      %v2687 = vpow.pop %v2686
      %v2688 = vadd.f32 %v2685, 1.0
      %v2689 = vadd.f32 %v2687, 1.0
      %v2690 = vrcp.pop %v2688
      %v2691 = vmul.f32 1.0, %v2690
      %v2692 = vrcp.pop %v2689
      %v2693 = vmul.f32 1.0, %v2692
      %v2694 = vtanh.pop %v2681
      %v2695 = vmul.f32 %v2691, %v2408
      %2697 = vrot.lane.b32.xlu0 %v2694, 64
      %v2698 = vpop.permute.xlu0 %2697
      %v2700 = vmul.f32 %v2691, %v2698
      %2702 = vrot.lane.b32.xlu0 %v2700, 64
      %v2703 = vpop.permute.xlu0 %2702
      %v2705 = vadd.f32 %v2695, %v2703
      %v2706 = vtanh.pop %v2705
      %2708 = vrot.lane.b32.xlu0 %v2706, 64
      %v2709 = vpop.permute.xlu0 %2708
      %v2711 = vmul.f32 %v2693, %v2709
      %s2712 = sadd.s32 %s83, 7
      %v2713 = vstv %s2712
      %vm2714 = vcmp.eq.s32.totalorder %v268, %v2713
      %v2715 = vsel %vm2714, 1, 0
      %2716 = vset.pattern.permute.xlu0 0
      %2717 = vperm.xlu0 %2716, %v2715
      %v2718 = vpop.permute.xlu0 %2717
      %vm2719 = vcmp.eq.s32.totalorder %v2718, 1
      %v2720 = vsel %vm2719, %v2711, %v2423
      %2721 = vst.msk [vmem:[#allocation2] sm:$0xff] %vm312, %v2531
      %2723 = vrot.lane.b32.xlu0 %v2525, 64
      %v2724 = vpop.permute.xlu0 %2723
      %2726 = vst.msk [vmem:[#allocation3] sm:$0xff] %vm312, %v2724
      %2727 = vst.msk [vmem:[#allocation4] sm:$0xff] %vm312, %v2711
      %2729 = vrot.lane.b32.xlu0 %v2705, 64
      %v2730 = vpop.permute.xlu0 %2729
      %2732 = vst.msk [vmem:[#allocation5] sm:$0xff] %vm312, %v2730
      %2733 = vst.msk [vmem:[#allocation15] sm:$0xff] %vm312, %v2720
    $region53: #{tpu_custom_call.1} parent=1 // pred_fallthru
      _
    // Predicated region
    $region54: #{tpu_custom_call.1} parent=1 // pred_check
      _
    $region55: #{tpu_custom_call.1} parent=1 // pred_check_branch
      %2735 = sbr.rel (0) target = $region57
    $region56: #{tpu_custom_call.1} parent=1 // pred_region
      %s2737 = ssub.s32 128, 128
      %2738 = vsyncadd [#allocation11], %s2737
      %s2740 = sshll.u32 [#allocation15], 4
      %s2741 = int_to_ptr.vmem [resolvable:$true] %s2740
      %2743 = dma.vmem_to_hbm [thread:$0]  %s2741, 128, %s9, [#allocation11]
    $region57: #{tpu_custom_call.1} parent=1 // pred_fallthru
      _
    // Predicated region
    $region58: #{tpu_custom_call.1} parent=1 // pred_check
      _
    $region59: #{tpu_custom_call.1} parent=1 // pred_check_branch
      %2745 = sbr.rel (0) target = $region61
    $region60: #{tpu_custom_call.1} parent=1 // pred_region
      %2746 = dma.done [#allocation11], 128
    $region61: #{tpu_custom_call.1} parent=1 // pred_fallthru
      _
    %2747 = vsyncpa [#allocation10], 1
    %2748 = vsyncpa [#allocation13], 1
    %2749 = vsyncpa [#allocation11], 1

</llo_original>
